<compile_context>
chip_gen: v5e
topology: v5e:2x2
jax: 0.10.0
libtpu: 0.0.40
codegen_flags: <defaults>
</compile_context>

<pallas_src>
import jax
import jax.numpy as jnp
from jax.experimental import pallas as pl
from jax.experimental.pallas import tpu as pltpu


def _se_gate_kernel(gate_ref, x_ref, o_ref):
    # gate_ref: (tc, 1) f32    x_ref, o_ref: (tc, HW) f32
    g = jax.nn.sigmoid(gate_ref[...])          # EUP; computed once per block
    o_ref[...] = (g * x_ref[...]).astype(o_ref.dtype)


def _round_up(v, m):
    return (v + m - 1) // m * m


def _pick_channel_tile(NC, HW, itemsize, vmem_budget_bytes=12 << 20):
    """Largest channel tile whose *padded* VMEM footprint fits the budget.

    Accounts for (8,128) sublane/lane padding, the double-buffered x input and
    output blocks, and the (tc, 1) gate block (lane-padded to 128).
    For the module's shape this returns tc == NC (single block, grid=(1,)).
    """
    hw_pad = _round_up(HW, 128)

    def footprint(tc):
        rows = _round_up(tc, 8)
        x_blk = rows * hw_pad * itemsize        # one x (or out) buffer
        g_blk = rows * 128 * itemsize           # one gate buffer (lane-padded)
        return 2 * (2 * x_blk + g_blk)          # double-buffered in/in/out

    tc = NC
    # Halve only while the result keeps valid (8-divisible) blocks that still
    # evenly divide NC; for very large reuse cases this lands at 128-512 rows.
    while (footprint(tc) > vmem_budget_bytes
           and tc % 2 == 0 and (tc // 2) % 8 == 0):
        tc //= 2
    return tc


def sigmoid_mul(gate_nchw, x_nchw):
    """Computes sigmoid(gate) * x with NCHW broadcasting, like the PyTorch module."""
    N, C, H, W = x_nchw.shape
    assert gate_nchw.shape == (N, C, 1, 1)
    NC, HW = N * C, H * W

    gate2d = gate_nchw.reshape(NC, 1)   # free view, no copy
    x2d = x_nchw.reshape(NC, HW)        # free view, no copy

    tc = _pick_channel_tile(NC, HW, x2d.dtype.itemsize)
    grid = (NC // tc,)                  # (1,) for the module's shape

    out2d = pl.pallas_call(
        _se_gate_kernel,
        out_shape=jax.ShapeDtypeStruct((NC, HW), x2d.dtype),
        grid=grid,
        in_specs=[
            pl.BlockSpec((tc, 1), lambda i: (i, 0)),
            pl.BlockSpec((tc, HW), lambda i: (i, 0)),
        ],
        out_specs=pl.BlockSpec((tc, HW), lambda i: (i, 0)),
        compiler_params=pltpu.CompilerParams(
            dimension_semantics=("parallel",),   # channel blocks are independent
            vmem_limit_bytes=32 << 20,           # headroom above the 12 MiB guard
        ),
    )(gate2d, x2d)

    return out2d.reshape(N, C, H, W)


if __name__ == "__main__":
    key = jax.random.PRNGKey(0)
    k1, k2, k3, k4 = jax.random.split(key, 4)

    # shapes from the module: x485 = (1, 1536, 1, 1), x481 = (1, 1536, 7, 7)
    x485 = jax.random.normal(k1, (1, 1536, 1, 1), dtype=jnp.float32)
    x481 = jax.random.normal(k2, (1, 1536, 7, 7), dtype=jnp.float32)

    out = sigmoid_mul(x485, x481)
    out = jax.block_until_ready(out)

    ref = jax.nn.sigmoid(x485) * x481
    assert out.shape == (1, 1536, 7, 7)
    assert jnp.allclose(out, ref, atol=1e-6, rtol=1e-6)

    # small odd-shaped case to exercise the full-array-block fallback
    g_s = jax.random.normal(k3, (2, 12, 1, 1), dtype=jnp.float32)
    x_s = jax.random.normal(k4, (2, 12, 3, 5), dtype=jnp.float32)
    out_s = jax.block_until_ready(sigmoid_mul(g_s, x_s))
    ref_s = jax.nn.sigmoid(g_s) * x_s
    assert jnp.allclose(out_s, ref_s, atol=1e-6, rtol=1e-6)

    print("KERNEL_OK")
</pallas_src>

<mosaic_0001>
module attributes {stable_mosaic.version = 11 : i64} {
  func.func @_se_gate_kernel(%arg0: i32, %arg1: memref<1536x1xf32, #tpu.memory_space<vmem>>, %arg2: memref<1536x49xf32, #tpu.memory_space<vmem>>, %arg3: memref<1536x49xf32, #tpu.memory_space<vmem>>) attributes {dimension_semantics = [#tpu.dimension_semantics<parallel>], iteration_bounds = array<i64: 1>, scalar_prefetch = 0 : i64, scratch_operands = 0 : i64, tpu.core_type = #tpu.core_type<tc>, window_params = [{transform_indices = @transform_0, window_bounds = array<i64: 1536, 1>}, {transform_indices = @transform_1, window_bounds = array<i64: 1536, 49>}, {transform_indices = @transform_2, window_bounds = array<i64: 1536, 49>}]} {
    %c0 = arith.constant 0 : index
    %c0_0 = arith.constant 0 : index
    %0 = vector.load %arg1[%c0, %c0_0] : memref<1536x1xf32, #tpu.memory_space<vmem>>, vector<1536x1xf32>
    %1 = arith.negf %0 : vector<1536x1xf32>
    %2 = math.exp %1 : vector<1536x1xf32>
    %cst = arith.constant 1.000000e+00 : f32
    %3 = vector.broadcast %cst : f32 to vector<1536x1xf32>
    %4 = arith.addf %3, %2 : vector<1536x1xf32>
    %5 = arith.divf %3, %4 : vector<1536x1xf32>
    %c0_1 = arith.constant 0 : index
    %c0_2 = arith.constant 0 : index
    %6 = vector.load %arg2[%c0_1, %c0_2] : memref<1536x49xf32, #tpu.memory_space<vmem>>, vector<1536x49xf32>
    %7 = vector.broadcast %5 : vector<1536x1xf32> to vector<1536x49xf32>
    %8 = arith.mulf %7, %6 : vector<1536x49xf32>
    %c0_3 = arith.constant 0 : index
    %c0_4 = arith.constant 0 : index
    %9 = vector.load %arg3[%c0_3, %c0_4] : memref<1536x49xf32, #tpu.memory_space<vmem>>, vector<1536x49xf32>
    tpu.vector_store %arg3[%c0_3, %c0_4], %8 {strides = array<i32>} : memref<1536x49xf32, #tpu.memory_space<vmem>>, vector<1536x49xf32>,
    return
  }
  func.func @transform_0(%arg0: i32) -> (i32, i32) {
    %c0_i32 = arith.constant 0 : i32
    %c0_i32_0 = arith.constant 0 : i32
    return %arg0, %c0_i32 : i32, i32
  }
  func.func @transform_1(%arg0: i32) -> (i32, i32) {
    %c0_i32 = arith.constant 0 : i32
    %c0_i32_0 = arith.constant 0 : i32
    return %arg0, %c0_i32 : i32, i32
  }
  func.func @transform_2(%arg0: i32) -> (i32, i32) {
    %c0_i32 = arith.constant 0 : i32
    %c0_i32_0 = arith.constant 0 : i32
    return %arg0, %c0_i32 : i32, i32
  }
}

</mosaic_0001>

<llo_original>
// kernel: tpu_custom_call.1
$region0: #{tpu_custom_call.1}
  #allocation0 [shape = 'u32[]', space=smem, size = 0x4, offset = 0x4, fixed_abs, tag = 'smem constant byte address 0x4 - core index']
  #allocation1 [shape = 'u32[72,128]{1,0:T(1,128)}', space=vmem, size = 0x9000, scoped, tag = 'internal scratch']
  %s0 = inlined_call_operand.vmem [shape: f32[1536,1], index: 0, kind: input, shape index: {}]
  %s1 = inlined_call_operand.vmem [shape: f32[1536,49], index: 1, kind: input, shape index: {}]
  %s2 = inlined_call_operand.vmem [shape: f32[1536,49], index: 2, kind: output, shape index: {}]
  %s3 = sld [smem:[#allocation0]]
  $region18: #{tpu_custom_call.1} parent=0
    _
  %s5 = ssub.s32 1, %s3
  %s6 = scalar_select 0, %s5, %s3
  // Predicated region
  $region2: #{tpu_custom_call.1} parent=0 // pred_check
    _
  $region3: #{tpu_custom_call.1} parent=0 // pred_check_branch
    %8 = sbr.rel (0) target = $region5
  $region4: #{tpu_custom_call.1} parent=0 // pred_region
    _
  $region5: #{tpu_custom_call.1} parent=0 // pred_fallthru
    _
  // Predicated region
  $region6: #{tpu_custom_call.1} parent=0 // pred_check
    _
  $region7: #{tpu_custom_call.1} parent=0 // pred_check_branch
    %10 = sbr.rel (0) target = $region9
  $region8: #{tpu_custom_call.1} parent=0 // pred_region
    _
  $region9: #{tpu_custom_call.1} parent=0 // pred_fallthru
    _
  %v11 = vld [vmem:[%s0] sm:$0xff]
  %v12 = vld [vmem:[%s0 + $0x8] sm:$0xff]
  %v13 = vld [vmem:[%s0 + $0x10] sm:$0xff]
  %v14 = vld [vmem:[%s0 + $0x18] sm:$0xff]
  %v15 = vld [vmem:[%s0 + $0x20] sm:$0xff]
  %v16 = vld [vmem:[%s0 + $0x28] sm:$0xff]
  %v17 = vld [vmem:[%s0 + $0x30] sm:$0xff]
  %v18 = vld [vmem:[%s0 + $0x38] sm:$0xff]
  %v19 = vld [vmem:[%s0 + $0x40] sm:$0xff]
  %v20 = vld [vmem:[%s0 + $0x48] sm:$0xff]
  %v21 = vld [vmem:[%s0 + $0x50] sm:$0xff]
  %v22 = vld [vmem:[%s0 + $0x58] sm:$0xff]
  %v23 = vld [vmem:[%s0 + $0x60] sm:$0xff]
  %v24 = vld [vmem:[%s0 + $0x68] sm:$0xff]
  %v25 = vld [vmem:[%s0 + $0x70] sm:$0xff]
  %v26 = vld [vmem:[%s0 + $0x78] sm:$0xff]
  %v27 = vld [vmem:[%s0 + $0x80] sm:$0xff]
  %v28 = vld [vmem:[%s0 + $0x88] sm:$0xff]
  %v29 = vld [vmem:[%s0 + $0x90] sm:$0xff]
  %v30 = vld [vmem:[%s0 + $0x98] sm:$0xff]
  %v31 = vld [vmem:[%s0 + $0xa0] sm:$0xff]
  %v32 = vld [vmem:[%s0 + $0xa8] sm:$0xff]
  %v33 = vld [vmem:[%s0 + $0xb0] sm:$0xff]
  %v34 = vld [vmem:[%s0 + $0xb8] sm:$0xff]
  %v35 = vld [vmem:[%s0 + $0xc0] sm:$0xff]
  %v36 = vld [vmem:[%s0 + $0xc8] sm:$0xff]
  %v37 = vld [vmem:[%s0 + $0xd0] sm:$0xff]
  %v38 = vld [vmem:[%s0 + $0xd8] sm:$0xff]
  %v39 = vld [vmem:[%s0 + $0xe0] sm:$0xff]
  %v40 = vld [vmem:[%s0 + $0xe8] sm:$0xff]
  %v41 = vld [vmem:[%s0 + $0xf0] sm:$0xff]
  %v42 = vld [vmem:[%s0 + $0xf8] sm:$0xff]
  %v43 = vld [vmem:[%s0 + $0x100] sm:$0xff]
  %v44 = vld [vmem:[%s0 + $0x108] sm:$0xff]
  %v45 = vld [vmem:[%s0 + $0x110] sm:$0xff]
  %v46 = vld [vmem:[%s0 + $0x118] sm:$0xff]
  %v47 = vld [vmem:[%s0 + $0x120] sm:$0xff]
  %v48 = vld [vmem:[%s0 + $0x128] sm:$0xff]
  %v49 = vld [vmem:[%s0 + $0x130] sm:$0xff]
  %v50 = vld [vmem:[%s0 + $0x138] sm:$0xff]
  %v51 = vld [vmem:[%s0 + $0x140] sm:$0xff]
  %v52 = vld [vmem:[%s0 + $0x148] sm:$0xff]
  %v53 = vld [vmem:[%s0 + $0x150] sm:$0xff]
  %v54 = vld [vmem:[%s0 + $0x158] sm:$0xff]
  %v55 = vld [vmem:[%s0 + $0x160] sm:$0xff]
  %v56 = vld [vmem:[%s0 + $0x168] sm:$0xff]
  %v57 = vld [vmem:[%s0 + $0x170] sm:$0xff]
  %v58 = vld [vmem:[%s0 + $0x178] sm:$0xff]
  %v59 = vld [vmem:[%s0 + $0x180] sm:$0xff]
  %v60 = vld [vmem:[%s0 + $0x188] sm:$0xff]
  %v61 = vld [vmem:[%s0 + $0x190] sm:$0xff]
  %v62 = vld [vmem:[%s0 + $0x198] sm:$0xff]
  %v63 = vld [vmem:[%s0 + $0x1a0] sm:$0xff]
  %v64 = vld [vmem:[%s0 + $0x1a8] sm:$0xff]
  %v65 = vld [vmem:[%s0 + $0x1b0] sm:$0xff]
  %v66 = vld [vmem:[%s0 + $0x1b8] sm:$0xff]
  %v67 = vld [vmem:[%s0 + $0x1c0] sm:$0xff]
  %v68 = vld [vmem:[%s0 + $0x1c8] sm:$0xff]
  %v69 = vld [vmem:[%s0 + $0x1d0] sm:$0xff]
  %v70 = vld [vmem:[%s0 + $0x1d8] sm:$0xff]
  %v71 = vld [vmem:[%s0 + $0x1e0] sm:$0xff]
  %v72 = vld [vmem:[%s0 + $0x1e8] sm:$0xff]
  %v73 = vld [vmem:[%s0 + $0x1f0] sm:$0xff]
  %v74 = vld [vmem:[%s0 + $0x1f8] sm:$0xff]
  %v75 = vld [vmem:[%s0 + $0x200] sm:$0xff]
  %v76 = vld [vmem:[%s0 + $0x208] sm:$0xff]
  %v77 = vld [vmem:[%s0 + $0x210] sm:$0xff]
  %v78 = vld [vmem:[%s0 + $0x218] sm:$0xff]
  %v79 = vld [vmem:[%s0 + $0x220] sm:$0xff]
  %v80 = vld [vmem:[%s0 + $0x228] sm:$0xff]
  %v81 = vld [vmem:[%s0 + $0x230] sm:$0xff]
  %v82 = vld [vmem:[%s0 + $0x238] sm:$0xff]
  %v83 = vld [vmem:[%s0 + $0x240] sm:$0xff]
  %v84 = vld [vmem:[%s0 + $0x248] sm:$0xff]
  %v85 = vld [vmem:[%s0 + $0x250] sm:$0xff]
  %v86 = vld [vmem:[%s0 + $0x258] sm:$0xff]
  %v87 = vld [vmem:[%s0 + $0x260] sm:$0xff]
  %v88 = vld [vmem:[%s0 + $0x268] sm:$0xff]
  %v89 = vld [vmem:[%s0 + $0x270] sm:$0xff]
  %v90 = vld [vmem:[%s0 + $0x278] sm:$0xff]
  %v91 = vld [vmem:[%s0 + $0x280] sm:$0xff]
  %v92 = vld [vmem:[%s0 + $0x288] sm:$0xff]
  %v93 = vld [vmem:[%s0 + $0x290] sm:$0xff]
  %v94 = vld [vmem:[%s0 + $0x298] sm:$0xff]
  %v95 = vld [vmem:[%s0 + $0x2a0] sm:$0xff]
  %v96 = vld [vmem:[%s0 + $0x2a8] sm:$0xff]
  %v97 = vld [vmem:[%s0 + $0x2b0] sm:$0xff]
  %v98 = vld [vmem:[%s0 + $0x2b8] sm:$0xff]
  %v99 = vld [vmem:[%s0 + $0x2c0] sm:$0xff]
  %v100 = vld [vmem:[%s0 + $0x2c8] sm:$0xff]
  %v101 = vld [vmem:[%s0 + $0x2d0] sm:$0xff]
  %v102 = vld [vmem:[%s0 + $0x2d8] sm:$0xff]
  %v103 = vld [vmem:[%s0 + $0x2e0] sm:$0xff]
  %v104 = vld [vmem:[%s0 + $0x2e8] sm:$0xff]
  %v105 = vld [vmem:[%s0 + $0x2f0] sm:$0xff]
  %v106 = vld [vmem:[%s0 + $0x2f8] sm:$0xff]
  %v107 = vld [vmem:[%s0 + $0x300] sm:$0xff]
  %v108 = vld [vmem:[%s0 + $0x308] sm:$0xff]
  %v109 = vld [vmem:[%s0 + $0x310] sm:$0xff]
  %v110 = vld [vmem:[%s0 + $0x318] sm:$0xff]
  %v111 = vld [vmem:[%s0 + $0x320] sm:$0xff]
  %v112 = vld [vmem:[%s0 + $0x328] sm:$0xff]
  %v113 = vld [vmem:[%s0 + $0x330] sm:$0xff]
  %v114 = vld [vmem:[%s0 + $0x338] sm:$0xff]
  %v115 = vld [vmem:[%s0 + $0x340] sm:$0xff]
  %v116 = vld [vmem:[%s0 + $0x348] sm:$0xff]
  %v117 = vld [vmem:[%s0 + $0x350] sm:$0xff]
  %v118 = vld [vmem:[%s0 + $0x358] sm:$0xff]
  %v119 = vld [vmem:[%s0 + $0x360] sm:$0xff]
  %v120 = vld [vmem:[%s0 + $0x368] sm:$0xff]
  %v121 = vld [vmem:[%s0 + $0x370] sm:$0xff]
  %v122 = vld [vmem:[%s0 + $0x378] sm:$0xff]
  %v123 = vld [vmem:[%s0 + $0x380] sm:$0xff]
  %v124 = vld [vmem:[%s0 + $0x388] sm:$0xff]
  %v125 = vld [vmem:[%s0 + $0x390] sm:$0xff]
  %v126 = vld [vmem:[%s0 + $0x398] sm:$0xff]
  %v127 = vld [vmem:[%s0 + $0x3a0] sm:$0xff]
  %v128 = vld [vmem:[%s0 + $0x3a8] sm:$0xff]
  %v129 = vld [vmem:[%s0 + $0x3b0] sm:$0xff]
  %v130 = vld [vmem:[%s0 + $0x3b8] sm:$0xff]
  %v131 = vld [vmem:[%s0 + $0x3c0] sm:$0xff]
  %v132 = vld [vmem:[%s0 + $0x3c8] sm:$0xff]
  %v133 = vld [vmem:[%s0 + $0x3d0] sm:$0xff]
  %v134 = vld [vmem:[%s0 + $0x3d8] sm:$0xff]
  %v135 = vld [vmem:[%s0 + $0x3e0] sm:$0xff]
  %v136 = vld [vmem:[%s0 + $0x3e8] sm:$0xff]
  %v137 = vld [vmem:[%s0 + $0x3f0] sm:$0xff]
  %v138 = vld [vmem:[%s0 + $0x3f8] sm:$0xff]
  %v139 = vld [vmem:[%s0 + $0x400] sm:$0xff]
  %v140 = vld [vmem:[%s0 + $0x408] sm:$0xff]
  %v141 = vld [vmem:[%s0 + $0x410] sm:$0xff]
  %v142 = vld [vmem:[%s0 + $0x418] sm:$0xff]
  %v143 = vld [vmem:[%s0 + $0x420] sm:$0xff]
  %v144 = vld [vmem:[%s0 + $0x428] sm:$0xff]
  %v145 = vld [vmem:[%s0 + $0x430] sm:$0xff]
  %v146 = vld [vmem:[%s0 + $0x438] sm:$0xff]
  %v147 = vld [vmem:[%s0 + $0x440] sm:$0xff]
  %v148 = vld [vmem:[%s0 + $0x448] sm:$0xff]
  %v149 = vld [vmem:[%s0 + $0x450] sm:$0xff]
  %v150 = vld [vmem:[%s0 + $0x458] sm:$0xff]
  %v151 = vld [vmem:[%s0 + $0x460] sm:$0xff]
  %v152 = vld [vmem:[%s0 + $0x468] sm:$0xff]
  %v153 = vld [vmem:[%s0 + $0x470] sm:$0xff]
  %v154 = vld [vmem:[%s0 + $0x478] sm:$0xff]
  %v155 = vld [vmem:[%s0 + $0x480] sm:$0xff]
  %v156 = vld [vmem:[%s0 + $0x488] sm:$0xff]
  %v157 = vld [vmem:[%s0 + $0x490] sm:$0xff]
  %v158 = vld [vmem:[%s0 + $0x498] sm:$0xff]
  %v159 = vld [vmem:[%s0 + $0x4a0] sm:$0xff]
  %v160 = vld [vmem:[%s0 + $0x4a8] sm:$0xff]
  %v161 = vld [vmem:[%s0 + $0x4b0] sm:$0xff]
  %v162 = vld [vmem:[%s0 + $0x4b8] sm:$0xff]
  %v163 = vld [vmem:[%s0 + $0x4c0] sm:$0xff]
  %v164 = vld [vmem:[%s0 + $0x4c8] sm:$0xff]
  %v165 = vld [vmem:[%s0 + $0x4d0] sm:$0xff]
  %v166 = vld [vmem:[%s0 + $0x4d8] sm:$0xff]
  %v167 = vld [vmem:[%s0 + $0x4e0] sm:$0xff]
  %v168 = vld [vmem:[%s0 + $0x4e8] sm:$0xff]
  %v169 = vld [vmem:[%s0 + $0x4f0] sm:$0xff]
  %v170 = vld [vmem:[%s0 + $0x4f8] sm:$0xff]
  %v171 = vld [vmem:[%s0 + $0x500] sm:$0xff]
  %v172 = vld [vmem:[%s0 + $0x508] sm:$0xff]
  %v173 = vld [vmem:[%s0 + $0x510] sm:$0xff]
  %v174 = vld [vmem:[%s0 + $0x518] sm:$0xff]
  %v175 = vld [vmem:[%s0 + $0x520] sm:$0xff]
  %v176 = vld [vmem:[%s0 + $0x528] sm:$0xff]
  %v177 = vld [vmem:[%s0 + $0x530] sm:$0xff]
  %v178 = vld [vmem:[%s0 + $0x538] sm:$0xff]
  %v179 = vld [vmem:[%s0 + $0x540] sm:$0xff]
  %v180 = vld [vmem:[%s0 + $0x548] sm:$0xff]
  %v181 = vld [vmem:[%s0 + $0x550] sm:$0xff]
  %v182 = vld [vmem:[%s0 + $0x558] sm:$0xff]
  %v183 = vld [vmem:[%s0 + $0x560] sm:$0xff]
  %v184 = vld [vmem:[%s0 + $0x568] sm:$0xff]
  %v185 = vld [vmem:[%s0 + $0x570] sm:$0xff]
  %v186 = vld [vmem:[%s0 + $0x578] sm:$0xff]
  %v187 = vld [vmem:[%s0 + $0x580] sm:$0xff]
  %v188 = vld [vmem:[%s0 + $0x588] sm:$0xff]
  %v189 = vld [vmem:[%s0 + $0x590] sm:$0xff]
  %v190 = vld [vmem:[%s0 + $0x598] sm:$0xff]
  %v191 = vld [vmem:[%s0 + $0x5a0] sm:$0xff]
  %v192 = vld [vmem:[%s0 + $0x5a8] sm:$0xff]
  %v193 = vld [vmem:[%s0 + $0x5b0] sm:$0xff]
  %v194 = vld [vmem:[%s0 + $0x5b8] sm:$0xff]
  %v195 = vld [vmem:[%s0 + $0x5c0] sm:$0xff]
  %v196 = vld [vmem:[%s0 + $0x5c8] sm:$0xff]
  %v197 = vld [vmem:[%s0 + $0x5d0] sm:$0xff]
  %v198 = vld [vmem:[%s0 + $0x5d8] sm:$0xff]
  %v199 = vld [vmem:[%s0 + $0x5e0] sm:$0xff]
  %v200 = vld [vmem:[%s0 + $0x5e8] sm:$0xff]
  %v201 = vld [vmem:[%s0 + $0x5f0] sm:$0xff]
  %v202 = vld [vmem:[%s0 + $0x5f8] sm:$0xff]
  %v203 = vxor.u32 %v11, 2147483648
  %v204 = vxor.u32 %v12, 2147483648
  %v205 = vxor.u32 %v13, 2147483648
  %v206 = vxor.u32 %v14, 2147483648
  %v207 = vxor.u32 %v15, 2147483648
  %v208 = vxor.u32 %v16, 2147483648
  %v209 = vxor.u32 %v17, 2147483648
  %v210 = vxor.u32 %v18, 2147483648
  %v211 = vxor.u32 %v19, 2147483648
  %v212 = vxor.u32 %v20, 2147483648
  %v213 = vxor.u32 %v21, 2147483648
  %v214 = vxor.u32 %v22, 2147483648
  %v215 = vxor.u32 %v23, 2147483648
  %v216 = vxor.u32 %v24, 2147483648
  %v217 = vxor.u32 %v25, 2147483648
  %v218 = vxor.u32 %v26, 2147483648
  %v219 = vxor.u32 %v27, 2147483648
  %v220 = vxor.u32 %v28, 2147483648
  %v221 = vxor.u32 %v29, 2147483648
  %v222 = vxor.u32 %v30, 2147483648
  %v223 = vxor.u32 %v31, 2147483648
  %v224 = vxor.u32 %v32, 2147483648
  %v225 = vxor.u32 %v33, 2147483648
  %v226 = vxor.u32 %v34, 2147483648
  %v227 = vxor.u32 %v35, 2147483648
  %v228 = vxor.u32 %v36, 2147483648
  %v229 = vxor.u32 %v37, 2147483648
  %v230 = vxor.u32 %v38, 2147483648
  %v231 = vxor.u32 %v39, 2147483648
  %v232 = vxor.u32 %v40, 2147483648
  %v233 = vxor.u32 %v41, 2147483648
  %v234 = vxor.u32 %v42, 2147483648
  %v235 = vxor.u32 %v43, 2147483648
  %v236 = vxor.u32 %v44, 2147483648
  %v237 = vxor.u32 %v45, 2147483648
  %v238 = vxor.u32 %v46, 2147483648
  %v239 = vxor.u32 %v47, 2147483648
  %v240 = vxor.u32 %v48, 2147483648
  %v241 = vxor.u32 %v49, 2147483648
  %v242 = vxor.u32 %v50, 2147483648
  %v243 = vxor.u32 %v51, 2147483648
  %v244 = vxor.u32 %v52, 2147483648
  %v245 = vxor.u32 %v53, 2147483648
  %v246 = vxor.u32 %v54, 2147483648
  %v247 = vxor.u32 %v55, 2147483648
  %v248 = vxor.u32 %v56, 2147483648
  %v249 = vxor.u32 %v57, 2147483648
  %v250 = vxor.u32 %v58, 2147483648
  %v251 = vxor.u32 %v59, 2147483648
  %v252 = vxor.u32 %v60, 2147483648
  %v253 = vxor.u32 %v61, 2147483648
  %v254 = vxor.u32 %v62, 2147483648
  %v255 = vxor.u32 %v63, 2147483648
  %v256 = vxor.u32 %v64, 2147483648
  %v257 = vxor.u32 %v65, 2147483648
  %v258 = vxor.u32 %v66, 2147483648
  %v259 = vxor.u32 %v67, 2147483648
  %v260 = vxor.u32 %v68, 2147483648
  %v261 = vxor.u32 %v69, 2147483648
  %v262 = vxor.u32 %v70, 2147483648
  %v263 = vxor.u32 %v71, 2147483648
  %v264 = vxor.u32 %v72, 2147483648
  %v265 = vxor.u32 %v73, 2147483648
  %v266 = vxor.u32 %v74, 2147483648
  %v267 = vxor.u32 %v75, 2147483648
  %v268 = vxor.u32 %v76, 2147483648
  %v269 = vxor.u32 %v77, 2147483648
  %v270 = vxor.u32 %v78, 2147483648
  %v271 = vxor.u32 %v79, 2147483648
  %v272 = vxor.u32 %v80, 2147483648
  %v273 = vxor.u32 %v81, 2147483648
  %v274 = vxor.u32 %v82, 2147483648
  %v275 = vxor.u32 %v83, 2147483648
  %v276 = vxor.u32 %v84, 2147483648
  %v277 = vxor.u32 %v85, 2147483648
  %v278 = vxor.u32 %v86, 2147483648
  %v279 = vxor.u32 %v87, 2147483648
  %v280 = vxor.u32 %v88, 2147483648
  %v281 = vxor.u32 %v89, 2147483648
  %v282 = vxor.u32 %v90, 2147483648
  %v283 = vxor.u32 %v91, 2147483648
  %v284 = vxor.u32 %v92, 2147483648
  %v285 = vxor.u32 %v93, 2147483648
  %v286 = vxor.u32 %v94, 2147483648
  %v287 = vxor.u32 %v95, 2147483648
  %v288 = vxor.u32 %v96, 2147483648
  %v289 = vxor.u32 %v97, 2147483648
  %v290 = vxor.u32 %v98, 2147483648
  %v291 = vxor.u32 %v99, 2147483648
  %v292 = vxor.u32 %v100, 2147483648
  %v293 = vxor.u32 %v101, 2147483648
  %v294 = vxor.u32 %v102, 2147483648
  %v295 = vxor.u32 %v103, 2147483648
  %v296 = vxor.u32 %v104, 2147483648
  %v297 = vxor.u32 %v105, 2147483648
  %v298 = vxor.u32 %v106, 2147483648
  %v299 = vxor.u32 %v107, 2147483648
  %v300 = vxor.u32 %v108, 2147483648
  %v301 = vxor.u32 %v109, 2147483648
  %v302 = vxor.u32 %v110, 2147483648
  %v303 = vxor.u32 %v111, 2147483648
  %v304 = vxor.u32 %v112, 2147483648
  %v305 = vxor.u32 %v113, 2147483648
  %v306 = vxor.u32 %v114, 2147483648
  %v307 = vxor.u32 %v115, 2147483648
  %v308 = vxor.u32 %v116, 2147483648
  %v309 = vxor.u32 %v117, 2147483648
  %v310 = vxor.u32 %v118, 2147483648
  %v311 = vxor.u32 %v119, 2147483648
  %v312 = vxor.u32 %v120, 2147483648
  %v313 = vxor.u32 %v121, 2147483648
  %v314 = vxor.u32 %v122, 2147483648
  %v315 = vxor.u32 %v123, 2147483648
  %v316 = vxor.u32 %v124, 2147483648
  %v317 = vxor.u32 %v125, 2147483648
  %v318 = vxor.u32 %v126, 2147483648
  %v319 = vxor.u32 %v127, 2147483648
  %v320 = vxor.u32 %v128, 2147483648
  %v321 = vxor.u32 %v129, 2147483648
  %v322 = vxor.u32 %v130, 2147483648
  %v323 = vxor.u32 %v131, 2147483648
  %v324 = vxor.u32 %v132, 2147483648
  %v325 = vxor.u32 %v133, 2147483648
  %v326 = vxor.u32 %v134, 2147483648
  %v327 = vxor.u32 %v135, 2147483648
  %v328 = vxor.u32 %v136, 2147483648
  %v329 = vxor.u32 %v137, 2147483648
  %v330 = vxor.u32 %v138, 2147483648
  %v331 = vxor.u32 %v139, 2147483648
  %v332 = vxor.u32 %v140, 2147483648
  %v333 = vxor.u32 %v141, 2147483648
  %v334 = vxor.u32 %v142, 2147483648
  %v335 = vxor.u32 %v143, 2147483648
  %v336 = vxor.u32 %v144, 2147483648
  %v337 = vxor.u32 %v145, 2147483648
  %v338 = vxor.u32 %v146, 2147483648
  %v339 = vxor.u32 %v147, 2147483648
  %v340 = vxor.u32 %v148, 2147483648
  %v341 = vxor.u32 %v149, 2147483648
  %v342 = vxor.u32 %v150, 2147483648
  %v343 = vxor.u32 %v151, 2147483648
  %v344 = vxor.u32 %v152, 2147483648
  %v345 = vxor.u32 %v153, 2147483648
  %v346 = vxor.u32 %v154, 2147483648
  %v347 = vxor.u32 %v155, 2147483648
  %v348 = vxor.u32 %v156, 2147483648
  %v349 = vxor.u32 %v157, 2147483648
  %v350 = vxor.u32 %v158, 2147483648
  %v351 = vxor.u32 %v159, 2147483648
  %v352 = vxor.u32 %v160, 2147483648
  %v353 = vxor.u32 %v161, 2147483648
  %v354 = vxor.u32 %v162, 2147483648
  %v355 = vxor.u32 %v163, 2147483648
  %v356 = vxor.u32 %v164, 2147483648
  %v357 = vxor.u32 %v165, 2147483648
  %v358 = vxor.u32 %v166, 2147483648
  %v359 = vxor.u32 %v167, 2147483648
  %v360 = vxor.u32 %v168, 2147483648
  %v361 = vxor.u32 %v169, 2147483648
  %v362 = vxor.u32 %v170, 2147483648
  %v363 = vxor.u32 %v171, 2147483648
  %v364 = vxor.u32 %v172, 2147483648
  %v365 = vxor.u32 %v173, 2147483648
  %v366 = vxor.u32 %v174, 2147483648
  %v367 = vxor.u32 %v175, 2147483648
  %v368 = vxor.u32 %v176, 2147483648
  %v369 = vxor.u32 %v177, 2147483648
  %v370 = vxor.u32 %v178, 2147483648
  %v371 = vxor.u32 %v179, 2147483648
  %v372 = vxor.u32 %v180, 2147483648
  %v373 = vxor.u32 %v181, 2147483648
  %v374 = vxor.u32 %v182, 2147483648
  %v375 = vxor.u32 %v183, 2147483648
  %v376 = vxor.u32 %v184, 2147483648
  %v377 = vxor.u32 %v185, 2147483648
  %v378 = vxor.u32 %v186, 2147483648
  %v379 = vxor.u32 %v187, 2147483648
  %v380 = vxor.u32 %v188, 2147483648
  %v381 = vxor.u32 %v189, 2147483648
  %v382 = vxor.u32 %v190, 2147483648
  %v383 = vxor.u32 %v191, 2147483648
  %v384 = vxor.u32 %v192, 2147483648
  %v385 = vxor.u32 %v193, 2147483648
  %v386 = vxor.u32 %v194, 2147483648
  %v387 = vxor.u32 %v195, 2147483648
  %v388 = vxor.u32 %v196, 2147483648
  %v389 = vxor.u32 %v197, 2147483648
  %v390 = vxor.u32 %v198, 2147483648
  %v391 = vxor.u32 %v199, 2147483648
  %v392 = vxor.u32 %v200, 2147483648
  %v393 = vxor.u32 %v201, 2147483648
  %v394 = vxor.u32 %v202, 2147483648
  %v395 = vmul.f32 %v203, 1.442695
  %v396 = vpow.pop %v395
  %v397 = vmul.f32 %v204, 1.442695
  %v398 = vpow.pop %v397
  %v399 = vmul.f32 %v205, 1.442695
  %v400 = vpow.pop %v399
  %v401 = vmul.f32 %v206, 1.442695
  %v402 = vpow.pop %v401
  %v403 = vmul.f32 %v207, 1.442695
  %v404 = vpow.pop %v403
  %v405 = vmul.f32 %v208, 1.442695
  %v406 = vpow.pop %v405
  %v407 = vmul.f32 %v209, 1.442695
  %v408 = vpow.pop %v407
  %v409 = vmul.f32 %v210, 1.442695
  %v410 = vpow.pop %v409
  %v411 = vmul.f32 %v211, 1.442695
  %v412 = vpow.pop %v411
  %v413 = vmul.f32 %v212, 1.442695
  %v414 = vpow.pop %v413
  %v415 = vmul.f32 %v213, 1.442695
  %v416 = vpow.pop %v415
  %v417 = vmul.f32 %v214, 1.442695
  %v418 = vpow.pop %v417
  %v419 = vmul.f32 %v215, 1.442695
  %v420 = vpow.pop %v419
  %v421 = vmul.f32 %v216, 1.442695
  %v422 = vpow.pop %v421
  %v423 = vmul.f32 %v217, 1.442695
  %v424 = vpow.pop %v423
  %v425 = vmul.f32 %v218, 1.442695
  %v426 = vpow.pop %v425
  %v427 = vmul.f32 %v219, 1.442695
  %v428 = vpow.pop %v427
  %v429 = vmul.f32 %v220, 1.442695
  %v430 = vpow.pop %v429
  %v431 = vmul.f32 %v221, 1.442695
  %v432 = vpow.pop %v431
  %v433 = vmul.f32 %v222, 1.442695
  %v434 = vpow.pop %v433
  %v435 = vmul.f32 %v223, 1.442695
  %v436 = vpow.pop %v435
  %v437 = vmul.f32 %v224, 1.442695
  %v438 = vpow.pop %v437
  %v439 = vmul.f32 %v225, 1.442695
  %v440 = vpow.pop %v439
  %v441 = vmul.f32 %v226, 1.442695
  %v442 = vpow.pop %v441
  %v443 = vmul.f32 %v227, 1.442695
  %v444 = vpow.pop %v443
  %v445 = vmul.f32 %v228, 1.442695
  %v446 = vpow.pop %v445
  %v447 = vmul.f32 %v229, 1.442695
  %v448 = vpow.pop %v447
  %v449 = vmul.f32 %v230, 1.442695
  %v450 = vpow.pop %v449
  %v451 = vmul.f32 %v231, 1.442695
  %v452 = vpow.pop %v451
  %v453 = vmul.f32 %v232, 1.442695
  %v454 = vpow.pop %v453
  %v455 = vmul.f32 %v233, 1.442695
  %v456 = vpow.pop %v455
  %v457 = vmul.f32 %v234, 1.442695
  %v458 = vpow.pop %v457
  %v459 = vmul.f32 %v235, 1.442695
  %v460 = vpow.pop %v459
  %v461 = vmul.f32 %v236, 1.442695
  %v462 = vpow.pop %v461
  %v463 = vmul.f32 %v237, 1.442695
  %v464 = vpow.pop %v463
  %v465 = vmul.f32 %v238, 1.442695
  %v466 = vpow.pop %v465
  %v467 = vmul.f32 %v239, 1.442695
  %v468 = vpow.pop %v467
  %v469 = vmul.f32 %v240, 1.442695
  %v470 = vpow.pop %v469
  %v471 = vmul.f32 %v241, 1.442695
  %v472 = vpow.pop %v471
  %v473 = vmul.f32 %v242, 1.442695
  %v474 = vpow.pop %v473
  %v475 = vmul.f32 %v243, 1.442695
  %v476 = vpow.pop %v475
  %v477 = vmul.f32 %v244, 1.442695
  %v478 = vpow.pop %v477
  %v479 = vmul.f32 %v245, 1.442695
  %v480 = vpow.pop %v479
  %v481 = vmul.f32 %v246, 1.442695
  %v482 = vpow.pop %v481
  %v483 = vmul.f32 %v247, 1.442695
  %v484 = vpow.pop %v483
  %v485 = vmul.f32 %v248, 1.442695
  %v486 = vpow.pop %v485
  %v487 = vmul.f32 %v249, 1.442695
  %v488 = vpow.pop %v487
  %v489 = vmul.f32 %v250, 1.442695
  %v490 = vpow.pop %v489
  %v491 = vmul.f32 %v251, 1.442695
  %v492 = vpow.pop %v491
  %v493 = vmul.f32 %v252, 1.442695
  %v494 = vpow.pop %v493
  %v495 = vmul.f32 %v253, 1.442695
  %v496 = vpow.pop %v495
  %v497 = vmul.f32 %v254, 1.442695
  %v498 = vpow.pop %v497
  %v499 = vmul.f32 %v255, 1.442695
  %v500 = vpow.pop %v499
  %v501 = vmul.f32 %v256, 1.442695
  %v502 = vpow.pop %v501
  %v503 = vmul.f32 %v257, 1.442695
  %v504 = vpow.pop %v503
  %v505 = vmul.f32 %v258, 1.442695
  %v506 = vpow.pop %v505
  %v507 = vmul.f32 %v259, 1.442695
  %v508 = vpow.pop %v507
  %v509 = vmul.f32 %v260, 1.442695
  %v510 = vpow.pop %v509
  %v511 = vmul.f32 %v261, 1.442695
  %v512 = vpow.pop %v511
  %v513 = vmul.f32 %v262, 1.442695
  %v514 = vpow.pop %v513
  %v515 = vmul.f32 %v263, 1.442695
  %v516 = vpow.pop %v515
  %v517 = vmul.f32 %v264, 1.442695
  %v518 = vpow.pop %v517
  %v519 = vmul.f32 %v265, 1.442695
  %v520 = vpow.pop %v519
  %v521 = vmul.f32 %v266, 1.442695
  %v522 = vpow.pop %v521
  %v523 = vmul.f32 %v267, 1.442695
  %v524 = vpow.pop %v523
  %v525 = vmul.f32 %v268, 1.442695
  %v526 = vpow.pop %v525
  %v527 = vmul.f32 %v269, 1.442695
  %v528 = vpow.pop %v527
  %v529 = vmul.f32 %v270, 1.442695
  %v530 = vpow.pop %v529
  %v531 = vmul.f32 %v271, 1.442695
  %v532 = vpow.pop %v531
  %v533 = vmul.f32 %v272, 1.442695
  %v534 = vpow.pop %v533
  %v535 = vmul.f32 %v273, 1.442695
  %v536 = vpow.pop %v535
  %v537 = vmul.f32 %v274, 1.442695
  %v538 = vpow.pop %v537
  %v539 = vmul.f32 %v275, 1.442695
  %v540 = vpow.pop %v539
  %v541 = vmul.f32 %v276, 1.442695
  %v542 = vpow.pop %v541
  %v543 = vmul.f32 %v277, 1.442695
  %v544 = vpow.pop %v543
  %v545 = vmul.f32 %v278, 1.442695
  %v546 = vpow.pop %v545
  %v547 = vmul.f32 %v279, 1.442695
  %v548 = vpow.pop %v547
  %v549 = vmul.f32 %v280, 1.442695
  %v550 = vpow.pop %v549
  %v551 = vmul.f32 %v281, 1.442695
  %v552 = vpow.pop %v551
  %v553 = vmul.f32 %v282, 1.442695
  %v554 = vpow.pop %v553
  %v555 = vmul.f32 %v283, 1.442695
  %v556 = vpow.pop %v555
  %v557 = vmul.f32 %v284, 1.442695
  %v558 = vpow.pop %v557
  %v559 = vmul.f32 %v285, 1.442695
  %v560 = vpow.pop %v559
  %v561 = vmul.f32 %v286, 1.442695
  %v562 = vpow.pop %v561
  %v563 = vmul.f32 %v287, 1.442695
  %v564 = vpow.pop %v563
  %v565 = vmul.f32 %v288, 1.442695
  %v566 = vpow.pop %v565
  %v567 = vmul.f32 %v289, 1.442695
  %v568 = vpow.pop %v567
  %v569 = vmul.f32 %v290, 1.442695
  %v570 = vpow.pop %v569
  %v571 = vmul.f32 %v291, 1.442695
  %v572 = vpow.pop %v571
  %v573 = vmul.f32 %v292, 1.442695
  %v574 = vpow.pop %v573
  %v575 = vmul.f32 %v293, 1.442695
  %v576 = vpow.pop %v575
  %v577 = vmul.f32 %v294, 1.442695
  %v578 = vpow.pop %v577
  %v579 = vmul.f32 %v295, 1.442695
  %v580 = vpow.pop %v579
  %v581 = vmul.f32 %v296, 1.442695
  %v582 = vpow.pop %v581
  %v583 = vmul.f32 %v297, 1.442695
  %v584 = vpow.pop %v583
  %v585 = vmul.f32 %v298, 1.442695
  %v586 = vpow.pop %v585
  %v587 = vmul.f32 %v299, 1.442695
  %v588 = vpow.pop %v587
  %v589 = vmul.f32 %v300, 1.442695
  %v590 = vpow.pop %v589
  %v591 = vmul.f32 %v301, 1.442695
  %v592 = vpow.pop %v591
  %v593 = vmul.f32 %v302, 1.442695
  %v594 = vpow.pop %v593
  %v595 = vmul.f32 %v303, 1.442695
  %v596 = vpow.pop %v595
  %v597 = vmul.f32 %v304, 1.442695
  %v598 = vpow.pop %v597
  %v599 = vmul.f32 %v305, 1.442695
  %v600 = vpow.pop %v599
  %v601 = vmul.f32 %v306, 1.442695
  %v602 = vpow.pop %v601
  %v603 = vmul.f32 %v307, 1.442695
  %v604 = vpow.pop %v603
  %v605 = vmul.f32 %v308, 1.442695
  %v606 = vpow.pop %v605
  %v607 = vmul.f32 %v309, 1.442695
  %v608 = vpow.pop %v607
  %v609 = vmul.f32 %v310, 1.442695
  %v610 = vpow.pop %v609
  %v611 = vmul.f32 %v311, 1.442695
  %v612 = vpow.pop %v611
  %v613 = vmul.f32 %v312, 1.442695
  %v614 = vpow.pop %v613
  %v615 = vmul.f32 %v313, 1.442695
  %v616 = vpow.pop %v615
  %v617 = vmul.f32 %v314, 1.442695
  %v618 = vpow.pop %v617
  %v619 = vmul.f32 %v315, 1.442695
  %v620 = vpow.pop %v619
  %v621 = vmul.f32 %v316, 1.442695
  %v622 = vpow.pop %v621
  %v623 = vmul.f32 %v317, 1.442695
  %v624 = vpow.pop %v623
  %v625 = vmul.f32 %v318, 1.442695
  %v626 = vpow.pop %v625
  %v627 = vmul.f32 %v319, 1.442695
  %v628 = vpow.pop %v627
  %v629 = vmul.f32 %v320, 1.442695
  %v630 = vpow.pop %v629
  %v631 = vmul.f32 %v321, 1.442695
  %v632 = vpow.pop %v631
  %v633 = vmul.f32 %v322, 1.442695
  %v634 = vpow.pop %v633
  %v635 = vmul.f32 %v323, 1.442695
  %v636 = vpow.pop %v635
  %v637 = vmul.f32 %v324, 1.442695
  %v638 = vpow.pop %v637
  %v639 = vmul.f32 %v325, 1.442695
  %v640 = vpow.pop %v639
  %v641 = vmul.f32 %v326, 1.442695
  %v642 = vpow.pop %v641
  %v643 = vmul.f32 %v327, 1.442695
  %v644 = vpow.pop %v643
  %v645 = vmul.f32 %v328, 1.442695
  %v646 = vpow.pop %v645
  %v647 = vmul.f32 %v329, 1.442695
  %v648 = vpow.pop %v647
  %v649 = vmul.f32 %v330, 1.442695
  %v650 = vpow.pop %v649
  %v651 = vmul.f32 %v331, 1.442695
  %v652 = vpow.pop %v651
  %v653 = vmul.f32 %v332, 1.442695
  %v654 = vpow.pop %v653
  %v655 = vmul.f32 %v333, 1.442695
  %v656 = vpow.pop %v655
  %v657 = vmul.f32 %v334, 1.442695
  %v658 = vpow.pop %v657
  %v659 = vmul.f32 %v335, 1.442695
  %v660 = vpow.pop %v659
  %v661 = vmul.f32 %v336, 1.442695
  %v662 = vpow.pop %v661
  %v663 = vmul.f32 %v337, 1.442695
  %v664 = vpow.pop %v663
  %v665 = vmul.f32 %v338, 1.442695
  %v666 = vpow.pop %v665
  %v667 = vmul.f32 %v339, 1.442695
  %v668 = vpow.pop %v667
  %v669 = vmul.f32 %v340, 1.442695
  %v670 = vpow.pop %v669
  %v671 = vmul.f32 %v341, 1.442695
  %v672 = vpow.pop %v671
  %v673 = vmul.f32 %v342, 1.442695
  %v674 = vpow.pop %v673
  %v675 = vmul.f32 %v343, 1.442695
  %v676 = vpow.pop %v675
  %v677 = vmul.f32 %v344, 1.442695
  %v678 = vpow.pop %v677
  %v679 = vmul.f32 %v345, 1.442695
  %v680 = vpow.pop %v679
  %v681 = vmul.f32 %v346, 1.442695
  %v682 = vpow.pop %v681
  %v683 = vmul.f32 %v347, 1.442695
  %v684 = vpow.pop %v683
  %v685 = vmul.f32 %v348, 1.442695
  %v686 = vpow.pop %v685
  %v687 = vmul.f32 %v349, 1.442695
  %v688 = vpow.pop %v687
  %v689 = vmul.f32 %v350, 1.442695
  %v690 = vpow.pop %v689
  %v691 = vmul.f32 %v351, 1.442695
  %v692 = vpow.pop %v691
  %v693 = vmul.f32 %v352, 1.442695
  %v694 = vpow.pop %v693
  %v695 = vmul.f32 %v353, 1.442695
  %v696 = vpow.pop %v695
  %v697 = vmul.f32 %v354, 1.442695
  %v698 = vpow.pop %v697
  %v699 = vmul.f32 %v355, 1.442695
  %v700 = vpow.pop %v699
  %v701 = vmul.f32 %v356, 1.442695
  %v702 = vpow.pop %v701
  %v703 = vmul.f32 %v357, 1.442695
  %v704 = vpow.pop %v703
  %v705 = vmul.f32 %v358, 1.442695
  %v706 = vpow.pop %v705
  %v707 = vmul.f32 %v359, 1.442695
  %v708 = vpow.pop %v707
  %v709 = vmul.f32 %v360, 1.442695
  %v710 = vpow.pop %v709
  %v711 = vmul.f32 %v361, 1.442695
  %v712 = vpow.pop %v711
  %v713 = vmul.f32 %v362, 1.442695
  %v714 = vpow.pop %v713
  %v715 = vmul.f32 %v363, 1.442695
  %v716 = vpow.pop %v715
  %v717 = vmul.f32 %v364, 1.442695
  %v718 = vpow.pop %v717
  %v719 = vmul.f32 %v365, 1.442695
  %v720 = vpow.pop %v719
  %v721 = vmul.f32 %v366, 1.442695
  %v722 = vpow.pop %v721
  %v723 = vmul.f32 %v367, 1.442695
  %v724 = vpow.pop %v723
  %v725 = vmul.f32 %v368, 1.442695
  %v726 = vpow.pop %v725
  %v727 = vmul.f32 %v369, 1.442695
  %v728 = vpow.pop %v727
  %v729 = vmul.f32 %v370, 1.442695
  %v730 = vpow.pop %v729
  %v731 = vmul.f32 %v371, 1.442695
  %v732 = vpow.pop %v731
  %v733 = vmul.f32 %v372, 1.442695
  %v734 = vpow.pop %v733
  %v735 = vmul.f32 %v373, 1.442695
  %v736 = vpow.pop %v735
  %v737 = vmul.f32 %v374, 1.442695
  %v738 = vpow.pop %v737
  %v739 = vmul.f32 %v375, 1.442695
  %v740 = vpow.pop %v739
  %v741 = vmul.f32 %v376, 1.442695
  %v742 = vpow.pop %v741
  %v743 = vmul.f32 %v377, 1.442695
  %v744 = vpow.pop %v743
  %v745 = vmul.f32 %v378, 1.442695
  %v746 = vpow.pop %v745
  %v747 = vmul.f32 %v379, 1.442695
  %v748 = vpow.pop %v747
  %v749 = vmul.f32 %v380, 1.442695
  %v750 = vpow.pop %v749
  %v751 = vmul.f32 %v381, 1.442695
  %v752 = vpow.pop %v751
  %v753 = vmul.f32 %v382, 1.442695
  %v754 = vpow.pop %v753
  %v755 = vmul.f32 %v383, 1.442695
  %v756 = vpow.pop %v755
  %v757 = vmul.f32 %v384, 1.442695
  %v758 = vpow.pop %v757
  %v759 = vmul.f32 %v385, 1.442695
  %v760 = vpow.pop %v759
  %v761 = vmul.f32 %v386, 1.442695
  %v762 = vpow.pop %v761
  %v763 = vmul.f32 %v387, 1.442695
  %v764 = vpow.pop %v763
  %v765 = vmul.f32 %v388, 1.442695
  %v766 = vpow.pop %v765
  %v767 = vmul.f32 %v389, 1.442695
  %v768 = vpow.pop %v767
  %v769 = vmul.f32 %v390, 1.442695
  %v770 = vpow.pop %v769
  %v771 = vmul.f32 %v391, 1.442695
  %v772 = vpow.pop %v771
  %v773 = vmul.f32 %v392, 1.442695
  %v774 = vpow.pop %v773
  %v775 = vmul.f32 %v393, 1.442695
  %v776 = vpow.pop %v775
  %v777 = vmul.f32 %v394, 1.442695
  %v778 = vpow.pop %v777
  %v779 = vadd.f32 %v396, 1.0
  %v780 = vadd.f32 %v398, 1.0
  %v781 = vadd.f32 %v400, 1.0
  %v782 = vadd.f32 %v402, 1.0
  %v783 = vadd.f32 %v404, 1.0
  %v784 = vadd.f32 %v406, 1.0
  %v785 = vadd.f32 %v408, 1.0
  %v786 = vadd.f32 %v410, 1.0
  %v787 = vadd.f32 %v412, 1.0
  %v788 = vadd.f32 %v414, 1.0
  %v789 = vadd.f32 %v416, 1.0
  %v790 = vadd.f32 %v418, 1.0
  %v791 = vadd.f32 %v420, 1.0
  %v792 = vadd.f32 %v422, 1.0
  %v793 = vadd.f32 %v424, 1.0
  %v794 = vadd.f32 %v426, 1.0
  %v795 = vadd.f32 %v428, 1.0
  %v796 = vadd.f32 %v430, 1.0
  %v797 = vadd.f32 %v432, 1.0
  %v798 = vadd.f32 %v434, 1.0
  %v799 = vadd.f32 %v436, 1.0
  %v800 = vadd.f32 %v438, 1.0
  %v801 = vadd.f32 %v440, 1.0
  %v802 = vadd.f32 %v442, 1.0
  %v803 = vadd.f32 %v444, 1.0
  %v804 = vadd.f32 %v446, 1.0
  %v805 = vadd.f32 %v448, 1.0
  %v806 = vadd.f32 %v450, 1.0
  %v807 = vadd.f32 %v452, 1.0
  %v808 = vadd.f32 %v454, 1.0
  %v809 = vadd.f32 %v456, 1.0
  %v810 = vadd.f32 %v458, 1.0
  %v811 = vadd.f32 %v460, 1.0
  %v812 = vadd.f32 %v462, 1.0
  %v813 = vadd.f32 %v464, 1.0
  %v814 = vadd.f32 %v466, 1.0
  %v815 = vadd.f32 %v468, 1.0
  %v816 = vadd.f32 %v470, 1.0
  %v817 = vadd.f32 %v472, 1.0
  %v818 = vadd.f32 %v474, 1.0
  %v819 = vadd.f32 %v476, 1.0
  %v820 = vadd.f32 %v478, 1.0
  %v821 = vadd.f32 %v480, 1.0
  %v822 = vadd.f32 %v482, 1.0
  %v823 = vadd.f32 %v484, 1.0
  %v824 = vadd.f32 %v486, 1.0
  %v825 = vadd.f32 %v488, 1.0
  %v826 = vadd.f32 %v490, 1.0
  %v827 = vadd.f32 %v492, 1.0
  %v828 = vadd.f32 %v494, 1.0
  %v829 = vadd.f32 %v496, 1.0
  %v830 = vadd.f32 %v498, 1.0
  %v831 = vadd.f32 %v500, 1.0
  %v832 = vadd.f32 %v502, 1.0
  %v833 = vadd.f32 %v504, 1.0
  %v834 = vadd.f32 %v506, 1.0
  %v835 = vadd.f32 %v508, 1.0
  %v836 = vadd.f32 %v510, 1.0
  %v837 = vadd.f32 %v512, 1.0
  %v838 = vadd.f32 %v514, 1.0
  %v839 = vadd.f32 %v516, 1.0
  %v840 = vadd.f32 %v518, 1.0
  %v841 = vadd.f32 %v520, 1.0
  %v842 = vadd.f32 %v522, 1.0
  %v843 = vadd.f32 %v524, 1.0
  %v844 = vadd.f32 %v526, 1.0
  %v845 = vadd.f32 %v528, 1.0
  %v846 = vadd.f32 %v530, 1.0
  %v847 = vadd.f32 %v532, 1.0
  %v848 = vadd.f32 %v534, 1.0
  %v849 = vadd.f32 %v536, 1.0
  %v850 = vadd.f32 %v538, 1.0
  %v851 = vadd.f32 %v540, 1.0
  %v852 = vadd.f32 %v542, 1.0
  %v853 = vadd.f32 %v544, 1.0
  %v854 = vadd.f32 %v546, 1.0
  %v855 = vadd.f32 %v548, 1.0
  %v856 = vadd.f32 %v550, 1.0
  %v857 = vadd.f32 %v552, 1.0
  %v858 = vadd.f32 %v554, 1.0
  %v859 = vadd.f32 %v556, 1.0
  %v860 = vadd.f32 %v558, 1.0
  %v861 = vadd.f32 %v560, 1.0
  %v862 = vadd.f32 %v562, 1.0
  %v863 = vadd.f32 %v564, 1.0
  %v864 = vadd.f32 %v566, 1.0
  %v865 = vadd.f32 %v568, 1.0
  %v866 = vadd.f32 %v570, 1.0
  %v867 = vadd.f32 %v572, 1.0
  %v868 = vadd.f32 %v574, 1.0
  %v869 = vadd.f32 %v576, 1.0
  %v870 = vadd.f32 %v578, 1.0
  %v871 = vadd.f32 %v580, 1.0
  %v872 = vadd.f32 %v582, 1.0
  %v873 = vadd.f32 %v584, 1.0
  %v874 = vadd.f32 %v586, 1.0
  %v875 = vadd.f32 %v588, 1.0
  %v876 = vadd.f32 %v590, 1.0
  %v877 = vadd.f32 %v592, 1.0
  %v878 = vadd.f32 %v594, 1.0
  %v879 = vadd.f32 %v596, 1.0
  %v880 = vadd.f32 %v598, 1.0
  %v881 = vadd.f32 %v600, 1.0
  %v882 = vadd.f32 %v602, 1.0
  %v883 = vadd.f32 %v604, 1.0
  %v884 = vadd.f32 %v606, 1.0
  %v885 = vadd.f32 %v608, 1.0
  %v886 = vadd.f32 %v610, 1.0
  %v887 = vadd.f32 %v612, 1.0
  %v888 = vadd.f32 %v614, 1.0
  %v889 = vadd.f32 %v616, 1.0
  %v890 = vadd.f32 %v618, 1.0
  %v891 = vadd.f32 %v620, 1.0
  %v892 = vadd.f32 %v622, 1.0
  %v893 = vadd.f32 %v624, 1.0
  %v894 = vadd.f32 %v626, 1.0
  %v895 = vadd.f32 %v628, 1.0
  %v896 = vadd.f32 %v630, 1.0
  %v897 = vadd.f32 %v632, 1.0
  %v898 = vadd.f32 %v634, 1.0
  %v899 = vadd.f32 %v636, 1.0
  %v900 = vadd.f32 %v638, 1.0
  %v901 = vadd.f32 %v640, 1.0
  %v902 = vadd.f32 %v642, 1.0
  %v903 = vadd.f32 %v644, 1.0
  %v904 = vadd.f32 %v646, 1.0
  %v905 = vadd.f32 %v648, 1.0
  %v906 = vadd.f32 %v650, 1.0
  %v907 = vadd.f32 %v652, 1.0
  %v908 = vadd.f32 %v654, 1.0
  %v909 = vadd.f32 %v656, 1.0
  %v910 = vadd.f32 %v658, 1.0
  %v911 = vadd.f32 %v660, 1.0
  %v912 = vadd.f32 %v662, 1.0
  %v913 = vadd.f32 %v664, 1.0
  %v914 = vadd.f32 %v666, 1.0
  %v915 = vadd.f32 %v668, 1.0
  %v916 = vadd.f32 %v670, 1.0
  %v917 = vadd.f32 %v672, 1.0
  %v918 = vadd.f32 %v674, 1.0
  %v919 = vadd.f32 %v676, 1.0
  %v920 = vadd.f32 %v678, 1.0
  %v921 = vadd.f32 %v680, 1.0
  %v922 = vadd.f32 %v682, 1.0
  %v923 = vadd.f32 %v684, 1.0
  %v924 = vadd.f32 %v686, 1.0
  %v925 = vadd.f32 %v688, 1.0
  %v926 = vadd.f32 %v690, 1.0
  %v927 = vadd.f32 %v692, 1.0
  %v928 = vadd.f32 %v694, 1.0
  %v929 = vadd.f32 %v696, 1.0
  %v930 = vadd.f32 %v698, 1.0
  %v931 = vadd.f32 %v700, 1.0
  %v932 = vadd.f32 %v702, 1.0
  %v933 = vadd.f32 %v704, 1.0
  %v934 = vadd.f32 %v706, 1.0
  %v935 = vadd.f32 %v708, 1.0
  %v936 = vadd.f32 %v710, 1.0
  %v937 = vadd.f32 %v712, 1.0
  %v938 = vadd.f32 %v714, 1.0
  %v939 = vadd.f32 %v716, 1.0
  %v940 = vadd.f32 %v718, 1.0
  %v941 = vadd.f32 %v720, 1.0
  %v942 = vadd.f32 %v722, 1.0
  %v943 = vadd.f32 %v724, 1.0
  %v944 = vadd.f32 %v726, 1.0
  %v945 = vadd.f32 %v728, 1.0
  %v946 = vadd.f32 %v730, 1.0
  %v947 = vadd.f32 %v732, 1.0
  %v948 = vadd.f32 %v734, 1.0
  %v949 = vadd.f32 %v736, 1.0
  %v950 = vadd.f32 %v738, 1.0
  %v951 = vadd.f32 %v740, 1.0
  %v952 = vadd.f32 %v742, 1.0
  %v953 = vadd.f32 %v744, 1.0
  %v954 = vadd.f32 %v746, 1.0
  %v955 = vadd.f32 %v748, 1.0
  %v956 = vadd.f32 %v750, 1.0
  %v957 = vadd.f32 %v752, 1.0
  %v958 = vadd.f32 %v754, 1.0
  %v959 = vadd.f32 %v756, 1.0
  %v960 = vadd.f32 %v758, 1.0
  %v961 = vadd.f32 %v760, 1.0
  %v962 = vadd.f32 %v762, 1.0
  %v963 = vadd.f32 %v764, 1.0
  %v964 = vadd.f32 %v766, 1.0
  %v965 = vadd.f32 %v768, 1.0
  %v966 = vadd.f32 %v770, 1.0
  %v967 = vadd.f32 %v772, 1.0
  %v968 = vadd.f32 %v774, 1.0
  %v969 = vadd.f32 %v776, 1.0
  %v970 = vadd.f32 %v778, 1.0
  %v971 = vrcp.pop %v779
  %v972 = vmul.f32 %v779, %v971
  %v973 = vsub.f32 1.0, %v972
  %v974 = vmul.f32 %v971, %v973
  %v975 = vadd.f32 %v971, %v974
  %vm976 = vweird.f32 %v779
  %vm977 = vweird.f32 %v971
  %vm978 = vmor %vm976, %vm977
  %v979 = vsel %vm978, %v971, %v975
  %v980 = vand.u32 2147483647, %v779
  %vm981 = vcmp.eq.f32.partialorder %v980, 8.507059e+37
  %v982 = vand.u32 %v779, 2147483648
  %v983 = vor.u32 1.1754944e-38, %v982
  %v984 = vsel %vm981, %v983, %v979
  %v985 = vmul.f32 1.0, %v984
  %v986 = vrcp.pop %v780
  %v987 = vmul.f32 %v780, %v986
  %v988 = vsub.f32 1.0, %v987
  %v989 = vmul.f32 %v986, %v988
  %v990 = vadd.f32 %v986, %v989
  %vm991 = vweird.f32 %v780
  %vm992 = vweird.f32 %v986
  %vm993 = vmor %vm991, %vm992
  %v994 = vsel %vm993, %v986, %v990
  %v995 = vand.u32 2147483647, %v780
  %vm996 = vcmp.eq.f32.partialorder %v995, 8.507059e+37
  %v997 = vand.u32 %v780, 2147483648
  %v998 = vor.u32 1.1754944e-38, %v997
  %v999 = vsel %vm996, %v998, %v994
  %v1000 = vmul.f32 1.0, %v999
  %v1001 = vrcp.pop %v781
  %v1002 = vmul.f32 %v781, %v1001
  %v1003 = vsub.f32 1.0, %v1002
  %v1004 = vmul.f32 %v1001, %v1003
  %v1005 = vadd.f32 %v1001, %v1004
  %vm1006 = vweird.f32 %v781
  %vm1007 = vweird.f32 %v1001
  %vm1008 = vmor %vm1006, %vm1007
  %v1009 = vsel %vm1008, %v1001, %v1005
  %v1010 = vand.u32 2147483647, %v781
  %vm1011 = vcmp.eq.f32.partialorder %v1010, 8.507059e+37
  %v1012 = vand.u32 %v781, 2147483648
  %v1013 = vor.u32 1.1754944e-38, %v1012
  %v1014 = vsel %vm1011, %v1013, %v1009
  %v1015 = vmul.f32 1.0, %v1014
  %v1016 = vrcp.pop %v782
  %v1017 = vmul.f32 %v782, %v1016
  %v1018 = vsub.f32 1.0, %v1017
  %v1019 = vmul.f32 %v1016, %v1018
  %v1020 = vadd.f32 %v1016, %v1019
  %vm1021 = vweird.f32 %v782
  %vm1022 = vweird.f32 %v1016
  %vm1023 = vmor %vm1021, %vm1022
  %v1024 = vsel %vm1023, %v1016, %v1020
  %v1025 = vand.u32 2147483647, %v782
  %vm1026 = vcmp.eq.f32.partialorder %v1025, 8.507059e+37
  %v1027 = vand.u32 %v782, 2147483648
  %v1028 = vor.u32 1.1754944e-38, %v1027
  %v1029 = vsel %vm1026, %v1028, %v1024
  %v1030 = vmul.f32 1.0, %v1029
  %v1031 = vrcp.pop %v783
  %v1032 = vmul.f32 %v783, %v1031
  %v1033 = vsub.f32 1.0, %v1032
  %v1034 = vmul.f32 %v1031, %v1033
  %v1035 = vadd.f32 %v1031, %v1034
  %vm1036 = vweird.f32 %v783
  %vm1037 = vweird.f32 %v1031
  %vm1038 = vmor %vm1036, %vm1037
  %v1039 = vsel %vm1038, %v1031, %v1035
  %v1040 = vand.u32 2147483647, %v783
  %vm1041 = vcmp.eq.f32.partialorder %v1040, 8.507059e+37
  %v1042 = vand.u32 %v783, 2147483648
  %v1043 = vor.u32 1.1754944e-38, %v1042
  %v1044 = vsel %vm1041, %v1043, %v1039
  %v1045 = vmul.f32 1.0, %v1044
  %v1046 = vrcp.pop %v784
  %v1047 = vmul.f32 %v784, %v1046
  %v1048 = vsub.f32 1.0, %v1047
  %v1049 = vmul.f32 %v1046, %v1048
  %v1050 = vadd.f32 %v1046, %v1049
  %vm1051 = vweird.f32 %v784
  %vm1052 = vweird.f32 %v1046
  %vm1053 = vmor %vm1051, %vm1052
  %v1054 = vsel %vm1053, %v1046, %v1050
  %v1055 = vand.u32 2147483647, %v784
  %vm1056 = vcmp.eq.f32.partialorder %v1055, 8.507059e+37
  %v1057 = vand.u32 %v784, 2147483648
  %v1058 = vor.u32 1.1754944e-38, %v1057
  %v1059 = vsel %vm1056, %v1058, %v1054
  %v1060 = vmul.f32 1.0, %v1059
  %v1061 = vrcp.pop %v785
  %v1062 = vmul.f32 %v785, %v1061
  %v1063 = vsub.f32 1.0, %v1062
  %v1064 = vmul.f32 %v1061, %v1063
  %v1065 = vadd.f32 %v1061, %v1064
  %vm1066 = vweird.f32 %v785
  %vm1067 = vweird.f32 %v1061
  %vm1068 = vmor %vm1066, %vm1067
  %v1069 = vsel %vm1068, %v1061, %v1065
  %v1070 = vand.u32 2147483647, %v785
  %vm1071 = vcmp.eq.f32.partialorder %v1070, 8.507059e+37
  %v1072 = vand.u32 %v785, 2147483648
  %v1073 = vor.u32 1.1754944e-38, %v1072
  %v1074 = vsel %vm1071, %v1073, %v1069
  %v1075 = vmul.f32 1.0, %v1074
  %v1076 = vrcp.pop %v786
  %v1077 = vmul.f32 %v786, %v1076
  %v1078 = vsub.f32 1.0, %v1077
  %v1079 = vmul.f32 %v1076, %v1078
  %v1080 = vadd.f32 %v1076, %v1079
  %vm1081 = vweird.f32 %v786
  %vm1082 = vweird.f32 %v1076
  %vm1083 = vmor %vm1081, %vm1082
  %v1084 = vsel %vm1083, %v1076, %v1080
  %v1085 = vand.u32 2147483647, %v786
  %vm1086 = vcmp.eq.f32.partialorder %v1085, 8.507059e+37
  %v1087 = vand.u32 %v786, 2147483648
  %v1088 = vor.u32 1.1754944e-38, %v1087
  %v1089 = vsel %vm1086, %v1088, %v1084
  %v1090 = vmul.f32 1.0, %v1089
  %v1091 = vrcp.pop %v787
  %v1092 = vmul.f32 %v787, %v1091
  %v1093 = vsub.f32 1.0, %v1092
  %v1094 = vmul.f32 %v1091, %v1093
  %v1095 = vadd.f32 %v1091, %v1094
  %vm1096 = vweird.f32 %v787
  %vm1097 = vweird.f32 %v1091
  %vm1098 = vmor %vm1096, %vm1097
  %v1099 = vsel %vm1098, %v1091, %v1095
  %v1100 = vand.u32 2147483647, %v787
  %vm1101 = vcmp.eq.f32.partialorder %v1100, 8.507059e+37
  %v1102 = vand.u32 %v787, 2147483648
  %v1103 = vor.u32 1.1754944e-38, %v1102
  %v1104 = vsel %vm1101, %v1103, %v1099
  %v1105 = vmul.f32 1.0, %v1104
  %v1106 = vrcp.pop %v788
  %v1107 = vmul.f32 %v788, %v1106
  %v1108 = vsub.f32 1.0, %v1107
  %v1109 = vmul.f32 %v1106, %v1108
  %v1110 = vadd.f32 %v1106, %v1109
  %vm1111 = vweird.f32 %v788
  %vm1112 = vweird.f32 %v1106
  %vm1113 = vmor %vm1111, %vm1112
  %v1114 = vsel %vm1113, %v1106, %v1110
  %v1115 = vand.u32 2147483647, %v788
  %vm1116 = vcmp.eq.f32.partialorder %v1115, 8.507059e+37
  %v1117 = vand.u32 %v788, 2147483648
  %v1118 = vor.u32 1.1754944e-38, %v1117
  %v1119 = vsel %vm1116, %v1118, %v1114
  %v1120 = vmul.f32 1.0, %v1119
  %v1121 = vrcp.pop %v789
  %v1122 = vmul.f32 %v789, %v1121
  %v1123 = vsub.f32 1.0, %v1122
  %v1124 = vmul.f32 %v1121, %v1123
  %v1125 = vadd.f32 %v1121, %v1124
  %vm1126 = vweird.f32 %v789
  %vm1127 = vweird.f32 %v1121
  %vm1128 = vmor %vm1126, %vm1127
  %v1129 = vsel %vm1128, %v1121, %v1125
  %v1130 = vand.u32 2147483647, %v789
  %vm1131 = vcmp.eq.f32.partialorder %v1130, 8.507059e+37
  %v1132 = vand.u32 %v789, 2147483648
  %v1133 = vor.u32 1.1754944e-38, %v1132
  %v1134 = vsel %vm1131, %v1133, %v1129
  %v1135 = vmul.f32 1.0, %v1134
  %v1136 = vrcp.pop %v790
  %v1137 = vmul.f32 %v790, %v1136
  %v1138 = vsub.f32 1.0, %v1137
  %v1139 = vmul.f32 %v1136, %v1138
  %v1140 = vadd.f32 %v1136, %v1139
  %vm1141 = vweird.f32 %v790
  %vm1142 = vweird.f32 %v1136
  %vm1143 = vmor %vm1141, %vm1142
  %v1144 = vsel %vm1143, %v1136, %v1140
  %v1145 = vand.u32 2147483647, %v790
  %vm1146 = vcmp.eq.f32.partialorder %v1145, 8.507059e+37
  %v1147 = vand.u32 %v790, 2147483648
  %v1148 = vor.u32 1.1754944e-38, %v1147
  %v1149 = vsel %vm1146, %v1148, %v1144
  %v1150 = vmul.f32 1.0, %v1149
  %v1151 = vrcp.pop %v791
  %v1152 = vmul.f32 %v791, %v1151
  %v1153 = vsub.f32 1.0, %v1152
  %v1154 = vmul.f32 %v1151, %v1153
  %v1155 = vadd.f32 %v1151, %v1154
  %vm1156 = vweird.f32 %v791
  %vm1157 = vweird.f32 %v1151
  %vm1158 = vmor %vm1156, %vm1157
  %v1159 = vsel %vm1158, %v1151, %v1155
  %v1160 = vand.u32 2147483647, %v791
  %vm1161 = vcmp.eq.f32.partialorder %v1160, 8.507059e+37
  %v1162 = vand.u32 %v791, 2147483648
  %v1163 = vor.u32 1.1754944e-38, %v1162
  %v1164 = vsel %vm1161, %v1163, %v1159
  %v1165 = vmul.f32 1.0, %v1164
  %v1166 = vrcp.pop %v792
  %v1167 = vmul.f32 %v792, %v1166
  %v1168 = vsub.f32 1.0, %v1167
  %v1169 = vmul.f32 %v1166, %v1168
  %v1170 = vadd.f32 %v1166, %v1169
  %vm1171 = vweird.f32 %v792
  %vm1172 = vweird.f32 %v1166
  %vm1173 = vmor %vm1171, %vm1172
  %v1174 = vsel %vm1173, %v1166, %v1170
  %v1175 = vand.u32 2147483647, %v792
  %vm1176 = vcmp.eq.f32.partialorder %v1175, 8.507059e+37
  %v1177 = vand.u32 %v792, 2147483648
  %v1178 = vor.u32 1.1754944e-38, %v1177
  %v1179 = vsel %vm1176, %v1178, %v1174
  %v1180 = vmul.f32 1.0, %v1179
  %v1181 = vrcp.pop %v793
  %v1182 = vmul.f32 %v793, %v1181
  %v1183 = vsub.f32 1.0, %v1182
  %v1184 = vmul.f32 %v1181, %v1183
  %v1185 = vadd.f32 %v1181, %v1184
  %vm1186 = vweird.f32 %v793
  %vm1187 = vweird.f32 %v1181
  %vm1188 = vmor %vm1186, %vm1187
  %v1189 = vsel %vm1188, %v1181, %v1185
  %v1190 = vand.u32 2147483647, %v793
  %vm1191 = vcmp.eq.f32.partialorder %v1190, 8.507059e+37
  %v1192 = vand.u32 %v793, 2147483648
  %v1193 = vor.u32 1.1754944e-38, %v1192
  %v1194 = vsel %vm1191, %v1193, %v1189
  %v1195 = vmul.f32 1.0, %v1194
  %v1196 = vrcp.pop %v794
  %v1197 = vmul.f32 %v794, %v1196
  %v1198 = vsub.f32 1.0, %v1197
  %v1199 = vmul.f32 %v1196, %v1198
  %v1200 = vadd.f32 %v1196, %v1199
  %vm1201 = vweird.f32 %v794
  %vm1202 = vweird.f32 %v1196
  %vm1203 = vmor %vm1201, %vm1202
  %v1204 = vsel %vm1203, %v1196, %v1200
  %v1205 = vand.u32 2147483647, %v794
  %vm1206 = vcmp.eq.f32.partialorder %v1205, 8.507059e+37
  %v1207 = vand.u32 %v794, 2147483648
  %v1208 = vor.u32 1.1754944e-38, %v1207
  %v1209 = vsel %vm1206, %v1208, %v1204
  %v1210 = vmul.f32 1.0, %v1209
  %v1211 = vrcp.pop %v795
  %v1212 = vmul.f32 %v795, %v1211
  %v1213 = vsub.f32 1.0, %v1212
  %v1214 = vmul.f32 %v1211, %v1213
  %v1215 = vadd.f32 %v1211, %v1214
  %vm1216 = vweird.f32 %v795
  %vm1217 = vweird.f32 %v1211
  %vm1218 = vmor %vm1216, %vm1217
  %v1219 = vsel %vm1218, %v1211, %v1215
  %v1220 = vand.u32 2147483647, %v795
  %vm1221 = vcmp.eq.f32.partialorder %v1220, 8.507059e+37
  %v1222 = vand.u32 %v795, 2147483648
  %v1223 = vor.u32 1.1754944e-38, %v1222
  %v1224 = vsel %vm1221, %v1223, %v1219
  %v1225 = vmul.f32 1.0, %v1224
  %v1226 = vrcp.pop %v796
  %v1227 = vmul.f32 %v796, %v1226
  %v1228 = vsub.f32 1.0, %v1227
  %v1229 = vmul.f32 %v1226, %v1228
  %v1230 = vadd.f32 %v1226, %v1229
  %vm1231 = vweird.f32 %v796
  %vm1232 = vweird.f32 %v1226
  %vm1233 = vmor %vm1231, %vm1232
  %v1234 = vsel %vm1233, %v1226, %v1230
  %v1235 = vand.u32 2147483647, %v796
  %vm1236 = vcmp.eq.f32.partialorder %v1235, 8.507059e+37
  %v1237 = vand.u32 %v796, 2147483648
  %v1238 = vor.u32 1.1754944e-38, %v1237
  %v1239 = vsel %vm1236, %v1238, %v1234
  %v1240 = vmul.f32 1.0, %v1239
  %v1241 = vrcp.pop %v797
  %v1242 = vmul.f32 %v797, %v1241
  %v1243 = vsub.f32 1.0, %v1242
  %v1244 = vmul.f32 %v1241, %v1243
  %v1245 = vadd.f32 %v1241, %v1244
  %vm1246 = vweird.f32 %v797
  %vm1247 = vweird.f32 %v1241
  %vm1248 = vmor %vm1246, %vm1247
  %v1249 = vsel %vm1248, %v1241, %v1245
  %v1250 = vand.u32 2147483647, %v797
  %vm1251 = vcmp.eq.f32.partialorder %v1250, 8.507059e+37
  %v1252 = vand.u32 %v797, 2147483648
  %v1253 = vor.u32 1.1754944e-38, %v1252
  %v1254 = vsel %vm1251, %v1253, %v1249
  %v1255 = vmul.f32 1.0, %v1254
  %v1256 = vrcp.pop %v798
  %v1257 = vmul.f32 %v798, %v1256
  %v1258 = vsub.f32 1.0, %v1257
  %v1259 = vmul.f32 %v1256, %v1258
  %v1260 = vadd.f32 %v1256, %v1259
  %vm1261 = vweird.f32 %v798
  %vm1262 = vweird.f32 %v1256
  %vm1263 = vmor %vm1261, %vm1262
  %v1264 = vsel %vm1263, %v1256, %v1260
  %v1265 = vand.u32 2147483647, %v798
  %vm1266 = vcmp.eq.f32.partialorder %v1265, 8.507059e+37
  %v1267 = vand.u32 %v798, 2147483648
  %v1268 = vor.u32 1.1754944e-38, %v1267
  %v1269 = vsel %vm1266, %v1268, %v1264
  %v1270 = vmul.f32 1.0, %v1269
  %v1271 = vrcp.pop %v799
  %v1272 = vmul.f32 %v799, %v1271
  %v1273 = vsub.f32 1.0, %v1272
  %v1274 = vmul.f32 %v1271, %v1273
  %v1275 = vadd.f32 %v1271, %v1274
  %vm1276 = vweird.f32 %v799
  %vm1277 = vweird.f32 %v1271
  %vm1278 = vmor %vm1276, %vm1277
  %v1279 = vsel %vm1278, %v1271, %v1275
  %v1280 = vand.u32 2147483647, %v799
  %vm1281 = vcmp.eq.f32.partialorder %v1280, 8.507059e+37
  %v1282 = vand.u32 %v799, 2147483648
  %v1283 = vor.u32 1.1754944e-38, %v1282
  %v1284 = vsel %vm1281, %v1283, %v1279
  %v1285 = vmul.f32 1.0, %v1284
  %v1286 = vrcp.pop %v800
  %v1287 = vmul.f32 %v800, %v1286
  %v1288 = vsub.f32 1.0, %v1287
  %v1289 = vmul.f32 %v1286, %v1288
  %v1290 = vadd.f32 %v1286, %v1289
  %vm1291 = vweird.f32 %v800
  %vm1292 = vweird.f32 %v1286
  %vm1293 = vmor %vm1291, %vm1292
  %v1294 = vsel %vm1293, %v1286, %v1290
  %v1295 = vand.u32 2147483647, %v800
  %vm1296 = vcmp.eq.f32.partialorder %v1295, 8.507059e+37
  %v1297 = vand.u32 %v800, 2147483648
  %v1298 = vor.u32 1.1754944e-38, %v1297
  %v1299 = vsel %vm1296, %v1298, %v1294
  %v1300 = vmul.f32 1.0, %v1299
  %v1301 = vrcp.pop %v801
  %v1302 = vmul.f32 %v801, %v1301
  %v1303 = vsub.f32 1.0, %v1302
  %v1304 = vmul.f32 %v1301, %v1303
  %v1305 = vadd.f32 %v1301, %v1304
  %vm1306 = vweird.f32 %v801
  %vm1307 = vweird.f32 %v1301
  %vm1308 = vmor %vm1306, %vm1307
  %v1309 = vsel %vm1308, %v1301, %v1305
  %v1310 = vand.u32 2147483647, %v801
  %vm1311 = vcmp.eq.f32.partialorder %v1310, 8.507059e+37
  %v1312 = vand.u32 %v801, 2147483648
  %v1313 = vor.u32 1.1754944e-38, %v1312
  %v1314 = vsel %vm1311, %v1313, %v1309
  %v1315 = vmul.f32 1.0, %v1314
  %v1316 = vrcp.pop %v802
  %v1317 = vmul.f32 %v802, %v1316
  %v1318 = vsub.f32 1.0, %v1317
  %v1319 = vmul.f32 %v1316, %v1318
  %v1320 = vadd.f32 %v1316, %v1319
  %vm1321 = vweird.f32 %v802
  %vm1322 = vweird.f32 %v1316
  %vm1323 = vmor %vm1321, %vm1322
  %v1324 = vsel %vm1323, %v1316, %v1320
  %v1325 = vand.u32 2147483647, %v802
  %vm1326 = vcmp.eq.f32.partialorder %v1325, 8.507059e+37
  %v1327 = vand.u32 %v802, 2147483648
  %v1328 = vor.u32 1.1754944e-38, %v1327
  %v1329 = vsel %vm1326, %v1328, %v1324
  %v1330 = vmul.f32 1.0, %v1329
  %v1331 = vrcp.pop %v803
  %v1332 = vmul.f32 %v803, %v1331
  %v1333 = vsub.f32 1.0, %v1332
  %v1334 = vmul.f32 %v1331, %v1333
  %v1335 = vadd.f32 %v1331, %v1334
  %vm1336 = vweird.f32 %v803
  %vm1337 = vweird.f32 %v1331
  %vm1338 = vmor %vm1336, %vm1337
  %v1339 = vsel %vm1338, %v1331, %v1335
  %v1340 = vand.u32 2147483647, %v803
  %vm1341 = vcmp.eq.f32.partialorder %v1340, 8.507059e+37
  %v1342 = vand.u32 %v803, 2147483648
  %v1343 = vor.u32 1.1754944e-38, %v1342
  %v1344 = vsel %vm1341, %v1343, %v1339
  %v1345 = vmul.f32 1.0, %v1344
  %v1346 = vrcp.pop %v804
  %v1347 = vmul.f32 %v804, %v1346
  %v1348 = vsub.f32 1.0, %v1347
  %v1349 = vmul.f32 %v1346, %v1348
  %v1350 = vadd.f32 %v1346, %v1349
  %vm1351 = vweird.f32 %v804
  %vm1352 = vweird.f32 %v1346
  %vm1353 = vmor %vm1351, %vm1352
  %v1354 = vsel %vm1353, %v1346, %v1350
  %v1355 = vand.u32 2147483647, %v804
  %vm1356 = vcmp.eq.f32.partialorder %v1355, 8.507059e+37
  %v1357 = vand.u32 %v804, 2147483648
  %v1358 = vor.u32 1.1754944e-38, %v1357
  %v1359 = vsel %vm1356, %v1358, %v1354
  %v1360 = vmul.f32 1.0, %v1359
  %v1361 = vrcp.pop %v805
  %v1362 = vmul.f32 %v805, %v1361
  %v1363 = vsub.f32 1.0, %v1362
  %v1364 = vmul.f32 %v1361, %v1363
  %v1365 = vadd.f32 %v1361, %v1364
  %vm1366 = vweird.f32 %v805
  %vm1367 = vweird.f32 %v1361
  %vm1368 = vmor %vm1366, %vm1367
  %v1369 = vsel %vm1368, %v1361, %v1365
  %v1370 = vand.u32 2147483647, %v805
  %vm1371 = vcmp.eq.f32.partialorder %v1370, 8.507059e+37
  %v1372 = vand.u32 %v805, 2147483648
  %v1373 = vor.u32 1.1754944e-38, %v1372
  %v1374 = vsel %vm1371, %v1373, %v1369
  %v1375 = vmul.f32 1.0, %v1374
  %v1376 = vrcp.pop %v806
  %v1377 = vmul.f32 %v806, %v1376
  %v1378 = vsub.f32 1.0, %v1377
  %v1379 = vmul.f32 %v1376, %v1378
  %v1380 = vadd.f32 %v1376, %v1379
  %vm1381 = vweird.f32 %v806
  %vm1382 = vweird.f32 %v1376
  %vm1383 = vmor %vm1381, %vm1382
  %v1384 = vsel %vm1383, %v1376, %v1380
  %v1385 = vand.u32 2147483647, %v806
  %vm1386 = vcmp.eq.f32.partialorder %v1385, 8.507059e+37
  %v1387 = vand.u32 %v806, 2147483648
  %v1388 = vor.u32 1.1754944e-38, %v1387
  %v1389 = vsel %vm1386, %v1388, %v1384
  %v1390 = vmul.f32 1.0, %v1389
  %v1391 = vrcp.pop %v807
  %v1392 = vmul.f32 %v807, %v1391
  %v1393 = vsub.f32 1.0, %v1392
  %v1394 = vmul.f32 %v1391, %v1393
  %v1395 = vadd.f32 %v1391, %v1394
  %vm1396 = vweird.f32 %v807
  %vm1397 = vweird.f32 %v1391
  %vm1398 = vmor %vm1396, %vm1397
  %v1399 = vsel %vm1398, %v1391, %v1395
  %v1400 = vand.u32 2147483647, %v807
  %vm1401 = vcmp.eq.f32.partialorder %v1400, 8.507059e+37
  %v1402 = vand.u32 %v807, 2147483648
  %v1403 = vor.u32 1.1754944e-38, %v1402
  %v1404 = vsel %vm1401, %v1403, %v1399
  %v1405 = vmul.f32 1.0, %v1404
  %v1406 = vrcp.pop %v808
  %v1407 = vmul.f32 %v808, %v1406
  %v1408 = vsub.f32 1.0, %v1407
  %v1409 = vmul.f32 %v1406, %v1408
  %v1410 = vadd.f32 %v1406, %v1409
  %vm1411 = vweird.f32 %v808
  %vm1412 = vweird.f32 %v1406
  %vm1413 = vmor %vm1411, %vm1412
  %v1414 = vsel %vm1413, %v1406, %v1410
  %v1415 = vand.u32 2147483647, %v808
  %vm1416 = vcmp.eq.f32.partialorder %v1415, 8.507059e+37
  %v1417 = vand.u32 %v808, 2147483648
  %v1418 = vor.u32 1.1754944e-38, %v1417
  %v1419 = vsel %vm1416, %v1418, %v1414
  %v1420 = vmul.f32 1.0, %v1419
  %v1421 = vrcp.pop %v809
  %v1422 = vmul.f32 %v809, %v1421
  %v1423 = vsub.f32 1.0, %v1422
  %v1424 = vmul.f32 %v1421, %v1423
  %v1425 = vadd.f32 %v1421, %v1424
  %vm1426 = vweird.f32 %v809
  %vm1427 = vweird.f32 %v1421
  %vm1428 = vmor %vm1426, %vm1427
  %v1429 = vsel %vm1428, %v1421, %v1425
  %v1430 = vand.u32 2147483647, %v809
  %vm1431 = vcmp.eq.f32.partialorder %v1430, 8.507059e+37
  %v1432 = vand.u32 %v809, 2147483648
  %v1433 = vor.u32 1.1754944e-38, %v1432
  %v1434 = vsel %vm1431, %v1433, %v1429
  %v1435 = vmul.f32 1.0, %v1434
  %v1436 = vrcp.pop %v810
  %v1437 = vmul.f32 %v810, %v1436
  %v1438 = vsub.f32 1.0, %v1437
  %v1439 = vmul.f32 %v1436, %v1438
  %v1440 = vadd.f32 %v1436, %v1439
  %vm1441 = vweird.f32 %v810
  %vm1442 = vweird.f32 %v1436
  %vm1443 = vmor %vm1441, %vm1442
  %v1444 = vsel %vm1443, %v1436, %v1440
  %v1445 = vand.u32 2147483647, %v810
  %vm1446 = vcmp.eq.f32.partialorder %v1445, 8.507059e+37
  %v1447 = vand.u32 %v810, 2147483648
  %v1448 = vor.u32 1.1754944e-38, %v1447
  %v1449 = vsel %vm1446, %v1448, %v1444
  %v1450 = vmul.f32 1.0, %v1449
  %v1451 = vrcp.pop %v811
  %v1452 = vmul.f32 %v811, %v1451
  %v1453 = vsub.f32 1.0, %v1452
  %v1454 = vmul.f32 %v1451, %v1453
  %v1455 = vadd.f32 %v1451, %v1454
  %vm1456 = vweird.f32 %v811
  %vm1457 = vweird.f32 %v1451
  %vm1458 = vmor %vm1456, %vm1457
  %v1459 = vsel %vm1458, %v1451, %v1455
  %v1460 = vand.u32 2147483647, %v811
  %vm1461 = vcmp.eq.f32.partialorder %v1460, 8.507059e+37
  %v1462 = vand.u32 %v811, 2147483648
  %v1463 = vor.u32 1.1754944e-38, %v1462
  %v1464 = vsel %vm1461, %v1463, %v1459
  %v1465 = vmul.f32 1.0, %v1464
  %v1466 = vrcp.pop %v812
  %v1467 = vmul.f32 %v812, %v1466
  %v1468 = vsub.f32 1.0, %v1467
  %v1469 = vmul.f32 %v1466, %v1468
  %v1470 = vadd.f32 %v1466, %v1469
  %vm1471 = vweird.f32 %v812
  %vm1472 = vweird.f32 %v1466
  %vm1473 = vmor %vm1471, %vm1472
  %v1474 = vsel %vm1473, %v1466, %v1470
  %v1475 = vand.u32 2147483647, %v812
  %vm1476 = vcmp.eq.f32.partialorder %v1475, 8.507059e+37
  %v1477 = vand.u32 %v812, 2147483648
  %v1478 = vor.u32 1.1754944e-38, %v1477
  %v1479 = vsel %vm1476, %v1478, %v1474
  %v1480 = vmul.f32 1.0, %v1479
  %v1481 = vrcp.pop %v813
  %v1482 = vmul.f32 %v813, %v1481
  %v1483 = vsub.f32 1.0, %v1482
  %v1484 = vmul.f32 %v1481, %v1483
  %v1485 = vadd.f32 %v1481, %v1484
  %vm1486 = vweird.f32 %v813
  %vm1487 = vweird.f32 %v1481
  %vm1488 = vmor %vm1486, %vm1487
  %v1489 = vsel %vm1488, %v1481, %v1485
  %v1490 = vand.u32 2147483647, %v813
  %vm1491 = vcmp.eq.f32.partialorder %v1490, 8.507059e+37
  %v1492 = vand.u32 %v813, 2147483648
  %v1493 = vor.u32 1.1754944e-38, %v1492
  %v1494 = vsel %vm1491, %v1493, %v1489
  %v1495 = vmul.f32 1.0, %v1494
  %v1496 = vrcp.pop %v814
  %v1497 = vmul.f32 %v814, %v1496
  %v1498 = vsub.f32 1.0, %v1497
  %v1499 = vmul.f32 %v1496, %v1498
  %v1500 = vadd.f32 %v1496, %v1499
  %vm1501 = vweird.f32 %v814
  %vm1502 = vweird.f32 %v1496
  %vm1503 = vmor %vm1501, %vm1502
  %v1504 = vsel %vm1503, %v1496, %v1500
  %v1505 = vand.u32 2147483647, %v814
  %vm1506 = vcmp.eq.f32.partialorder %v1505, 8.507059e+37
  %v1507 = vand.u32 %v814, 2147483648
  %v1508 = vor.u32 1.1754944e-38, %v1507
  %v1509 = vsel %vm1506, %v1508, %v1504
  %v1510 = vmul.f32 1.0, %v1509
  %v1511 = vrcp.pop %v815
  %v1512 = vmul.f32 %v815, %v1511
  %v1513 = vsub.f32 1.0, %v1512
  %v1514 = vmul.f32 %v1511, %v1513
  %v1515 = vadd.f32 %v1511, %v1514
  %vm1516 = vweird.f32 %v815
  %vm1517 = vweird.f32 %v1511
  %vm1518 = vmor %vm1516, %vm1517
  %v1519 = vsel %vm1518, %v1511, %v1515
  %v1520 = vand.u32 2147483647, %v815
  %vm1521 = vcmp.eq.f32.partialorder %v1520, 8.507059e+37
  %v1522 = vand.u32 %v815, 2147483648
  %v1523 = vor.u32 1.1754944e-38, %v1522
  %v1524 = vsel %vm1521, %v1523, %v1519
  %v1525 = vmul.f32 1.0, %v1524
  %v1526 = vrcp.pop %v816
  %v1527 = vmul.f32 %v816, %v1526
  %v1528 = vsub.f32 1.0, %v1527
  %v1529 = vmul.f32 %v1526, %v1528
  %v1530 = vadd.f32 %v1526, %v1529
  %vm1531 = vweird.f32 %v816
  %vm1532 = vweird.f32 %v1526
  %vm1533 = vmor %vm1531, %vm1532
  %v1534 = vsel %vm1533, %v1526, %v1530
  %v1535 = vand.u32 2147483647, %v816
  %vm1536 = vcmp.eq.f32.partialorder %v1535, 8.507059e+37
  %v1537 = vand.u32 %v816, 2147483648
  %v1538 = vor.u32 1.1754944e-38, %v1537
  %v1539 = vsel %vm1536, %v1538, %v1534
  %v1540 = vmul.f32 1.0, %v1539
  %v1541 = vrcp.pop %v817
  %v1542 = vmul.f32 %v817, %v1541
  %v1543 = vsub.f32 1.0, %v1542
  %v1544 = vmul.f32 %v1541, %v1543
  %v1545 = vadd.f32 %v1541, %v1544
  %vm1546 = vweird.f32 %v817
  %vm1547 = vweird.f32 %v1541
  %vm1548 = vmor %vm1546, %vm1547
  %v1549 = vsel %vm1548, %v1541, %v1545
  %v1550 = vand.u32 2147483647, %v817
  %vm1551 = vcmp.eq.f32.partialorder %v1550, 8.507059e+37
  %v1552 = vand.u32 %v817, 2147483648
  %v1553 = vor.u32 1.1754944e-38, %v1552
  %v1554 = vsel %vm1551, %v1553, %v1549
  %v1555 = vmul.f32 1.0, %v1554
  %v1556 = vrcp.pop %v818
  %v1557 = vmul.f32 %v818, %v1556
  %v1558 = vsub.f32 1.0, %v1557
  %v1559 = vmul.f32 %v1556, %v1558
  %v1560 = vadd.f32 %v1556, %v1559
  %vm1561 = vweird.f32 %v818
  %vm1562 = vweird.f32 %v1556
  %vm1563 = vmor %vm1561, %vm1562
  %v1564 = vsel %vm1563, %v1556, %v1560
  %v1565 = vand.u32 2147483647, %v818
  %vm1566 = vcmp.eq.f32.partialorder %v1565, 8.507059e+37
  %v1567 = vand.u32 %v818, 2147483648
  %v1568 = vor.u32 1.1754944e-38, %v1567
  %v1569 = vsel %vm1566, %v1568, %v1564
  %v1570 = vmul.f32 1.0, %v1569
  %v1571 = vrcp.pop %v819
  %v1572 = vmul.f32 %v819, %v1571
  %v1573 = vsub.f32 1.0, %v1572
  %v1574 = vmul.f32 %v1571, %v1573
  %v1575 = vadd.f32 %v1571, %v1574
  %vm1576 = vweird.f32 %v819
  %vm1577 = vweird.f32 %v1571
  %vm1578 = vmor %vm1576, %vm1577
  %v1579 = vsel %vm1578, %v1571, %v1575
  %v1580 = vand.u32 2147483647, %v819
  %vm1581 = vcmp.eq.f32.partialorder %v1580, 8.507059e+37
  %v1582 = vand.u32 %v819, 2147483648
  %v1583 = vor.u32 1.1754944e-38, %v1582
  %v1584 = vsel %vm1581, %v1583, %v1579
  %v1585 = vmul.f32 1.0, %v1584
  %v1586 = vrcp.pop %v820
  %v1587 = vmul.f32 %v820, %v1586
  %v1588 = vsub.f32 1.0, %v1587
  %v1589 = vmul.f32 %v1586, %v1588
  %v1590 = vadd.f32 %v1586, %v1589
  %vm1591 = vweird.f32 %v820
  %vm1592 = vweird.f32 %v1586
  %vm1593 = vmor %vm1591, %vm1592
  %v1594 = vsel %vm1593, %v1586, %v1590
  %v1595 = vand.u32 2147483647, %v820
  %vm1596 = vcmp.eq.f32.partialorder %v1595, 8.507059e+37
  %v1597 = vand.u32 %v820, 2147483648
  %v1598 = vor.u32 1.1754944e-38, %v1597
  %v1599 = vsel %vm1596, %v1598, %v1594
  %v1600 = vmul.f32 1.0, %v1599
  %v1601 = vrcp.pop %v821
  %v1602 = vmul.f32 %v821, %v1601
  %v1603 = vsub.f32 1.0, %v1602
  %v1604 = vmul.f32 %v1601, %v1603
  %v1605 = vadd.f32 %v1601, %v1604
  %vm1606 = vweird.f32 %v821
  %vm1607 = vweird.f32 %v1601
  %vm1608 = vmor %vm1606, %vm1607
  %v1609 = vsel %vm1608, %v1601, %v1605
  %v1610 = vand.u32 2147483647, %v821
  %vm1611 = vcmp.eq.f32.partialorder %v1610, 8.507059e+37
  %v1612 = vand.u32 %v821, 2147483648
  %v1613 = vor.u32 1.1754944e-38, %v1612
  %v1614 = vsel %vm1611, %v1613, %v1609
  %v1615 = vmul.f32 1.0, %v1614
  %v1616 = vrcp.pop %v822
  %v1617 = vmul.f32 %v822, %v1616
  %v1618 = vsub.f32 1.0, %v1617
  %v1619 = vmul.f32 %v1616, %v1618
  %v1620 = vadd.f32 %v1616, %v1619
  %vm1621 = vweird.f32 %v822
  %vm1622 = vweird.f32 %v1616
  %vm1623 = vmor %vm1621, %vm1622
  %v1624 = vsel %vm1623, %v1616, %v1620
  %v1625 = vand.u32 2147483647, %v822
  %vm1626 = vcmp.eq.f32.partialorder %v1625, 8.507059e+37
  %v1627 = vand.u32 %v822, 2147483648
  %v1628 = vor.u32 1.1754944e-38, %v1627
  %v1629 = vsel %vm1626, %v1628, %v1624
  %v1630 = vmul.f32 1.0, %v1629
  %v1631 = vrcp.pop %v823
  %v1632 = vmul.f32 %v823, %v1631
  %v1633 = vsub.f32 1.0, %v1632
  %v1634 = vmul.f32 %v1631, %v1633
  %v1635 = vadd.f32 %v1631, %v1634
  %vm1636 = vweird.f32 %v823
  %vm1637 = vweird.f32 %v1631
  %vm1638 = vmor %vm1636, %vm1637
  %v1639 = vsel %vm1638, %v1631, %v1635
  %v1640 = vand.u32 2147483647, %v823
  %vm1641 = vcmp.eq.f32.partialorder %v1640, 8.507059e+37
  %v1642 = vand.u32 %v823, 2147483648
  %v1643 = vor.u32 1.1754944e-38, %v1642
  %v1644 = vsel %vm1641, %v1643, %v1639
  %v1645 = vmul.f32 1.0, %v1644
  %v1646 = vrcp.pop %v824
  %v1647 = vmul.f32 %v824, %v1646
  %v1648 = vsub.f32 1.0, %v1647
  %v1649 = vmul.f32 %v1646, %v1648
  %v1650 = vadd.f32 %v1646, %v1649
  %vm1651 = vweird.f32 %v824
  %vm1652 = vweird.f32 %v1646
  %vm1653 = vmor %vm1651, %vm1652
  %v1654 = vsel %vm1653, %v1646, %v1650
  %v1655 = vand.u32 2147483647, %v824
  %vm1656 = vcmp.eq.f32.partialorder %v1655, 8.507059e+37
  %v1657 = vand.u32 %v824, 2147483648
  %v1658 = vor.u32 1.1754944e-38, %v1657
  %v1659 = vsel %vm1656, %v1658, %v1654
  %v1660 = vmul.f32 1.0, %v1659
  %v1661 = vrcp.pop %v825
  %v1662 = vmul.f32 %v825, %v1661
  %v1663 = vsub.f32 1.0, %v1662
  %v1664 = vmul.f32 %v1661, %v1663
  %v1665 = vadd.f32 %v1661, %v1664
  %vm1666 = vweird.f32 %v825
  %vm1667 = vweird.f32 %v1661
  %vm1668 = vmor %vm1666, %vm1667
  %v1669 = vsel %vm1668, %v1661, %v1665
  %v1670 = vand.u32 2147483647, %v825
  %vm1671 = vcmp.eq.f32.partialorder %v1670, 8.507059e+37
  %v1672 = vand.u32 %v825, 2147483648
  %v1673 = vor.u32 1.1754944e-38, %v1672
  %v1674 = vsel %vm1671, %v1673, %v1669
  %v1675 = vmul.f32 1.0, %v1674
  %v1676 = vrcp.pop %v826
  %v1677 = vmul.f32 %v826, %v1676
  %v1678 = vsub.f32 1.0, %v1677
  %v1679 = vmul.f32 %v1676, %v1678
  %v1680 = vadd.f32 %v1676, %v1679
  %vm1681 = vweird.f32 %v826
  %vm1682 = vweird.f32 %v1676
  %vm1683 = vmor %vm1681, %vm1682
  %v1684 = vsel %vm1683, %v1676, %v1680
  %v1685 = vand.u32 2147483647, %v826
  %vm1686 = vcmp.eq.f32.partialorder %v1685, 8.507059e+37
  %v1687 = vand.u32 %v826, 2147483648
  %v1688 = vor.u32 1.1754944e-38, %v1687
  %v1689 = vsel %vm1686, %v1688, %v1684
  %v1690 = vmul.f32 1.0, %v1689
  %v1691 = vrcp.pop %v827
  %v1692 = vmul.f32 %v827, %v1691
  %v1693 = vsub.f32 1.0, %v1692
  %v1694 = vmul.f32 %v1691, %v1693
  %v1695 = vadd.f32 %v1691, %v1694
  %vm1696 = vweird.f32 %v827
  %vm1697 = vweird.f32 %v1691
  %vm1698 = vmor %vm1696, %vm1697
  %v1699 = vsel %vm1698, %v1691, %v1695
  %v1700 = vand.u32 2147483647, %v827
  %vm1701 = vcmp.eq.f32.partialorder %v1700, 8.507059e+37
  %v1702 = vand.u32 %v827, 2147483648
  %v1703 = vor.u32 1.1754944e-38, %v1702
  %v1704 = vsel %vm1701, %v1703, %v1699
  %v1705 = vmul.f32 1.0, %v1704
  %v1706 = vrcp.pop %v828
  %v1707 = vmul.f32 %v828, %v1706
  %v1708 = vsub.f32 1.0, %v1707
  %v1709 = vmul.f32 %v1706, %v1708
  %v1710 = vadd.f32 %v1706, %v1709
  %vm1711 = vweird.f32 %v828
  %vm1712 = vweird.f32 %v1706
  %vm1713 = vmor %vm1711, %vm1712
  %v1714 = vsel %vm1713, %v1706, %v1710
  %v1715 = vand.u32 2147483647, %v828
  %vm1716 = vcmp.eq.f32.partialorder %v1715, 8.507059e+37
  %v1717 = vand.u32 %v828, 2147483648
  %v1718 = vor.u32 1.1754944e-38, %v1717
  %v1719 = vsel %vm1716, %v1718, %v1714
  %v1720 = vmul.f32 1.0, %v1719
  %v1721 = vrcp.pop %v829
  %v1722 = vmul.f32 %v829, %v1721
  %v1723 = vsub.f32 1.0, %v1722
  %v1724 = vmul.f32 %v1721, %v1723
  %v1725 = vadd.f32 %v1721, %v1724
  %vm1726 = vweird.f32 %v829
  %vm1727 = vweird.f32 %v1721
  %vm1728 = vmor %vm1726, %vm1727
  %v1729 = vsel %vm1728, %v1721, %v1725
  %v1730 = vand.u32 2147483647, %v829
  %vm1731 = vcmp.eq.f32.partialorder %v1730, 8.507059e+37
  %v1732 = vand.u32 %v829, 2147483648
  %v1733 = vor.u32 1.1754944e-38, %v1732
  %v1734 = vsel %vm1731, %v1733, %v1729
  %v1735 = vmul.f32 1.0, %v1734
  %v1736 = vrcp.pop %v830
  %v1737 = vmul.f32 %v830, %v1736
  %v1738 = vsub.f32 1.0, %v1737
  %v1739 = vmul.f32 %v1736, %v1738
  %v1740 = vadd.f32 %v1736, %v1739
  %vm1741 = vweird.f32 %v830
  %vm1742 = vweird.f32 %v1736
  %vm1743 = vmor %vm1741, %vm1742
  %v1744 = vsel %vm1743, %v1736, %v1740
  %v1745 = vand.u32 2147483647, %v830
  %vm1746 = vcmp.eq.f32.partialorder %v1745, 8.507059e+37
  %v1747 = vand.u32 %v830, 2147483648
  %v1748 = vor.u32 1.1754944e-38, %v1747
  %v1749 = vsel %vm1746, %v1748, %v1744
  %v1750 = vmul.f32 1.0, %v1749
  %v1751 = vrcp.pop %v831
  %v1752 = vmul.f32 %v831, %v1751
  %v1753 = vsub.f32 1.0, %v1752
  %v1754 = vmul.f32 %v1751, %v1753
  %v1755 = vadd.f32 %v1751, %v1754
  %vm1756 = vweird.f32 %v831
  %vm1757 = vweird.f32 %v1751
  %vm1758 = vmor %vm1756, %vm1757
  %v1759 = vsel %vm1758, %v1751, %v1755
  %v1760 = vand.u32 2147483647, %v831
  %vm1761 = vcmp.eq.f32.partialorder %v1760, 8.507059e+37
  %v1762 = vand.u32 %v831, 2147483648
  %v1763 = vor.u32 1.1754944e-38, %v1762
  %v1764 = vsel %vm1761, %v1763, %v1759
  %v1765 = vmul.f32 1.0, %v1764
  %v1766 = vrcp.pop %v832
  %v1767 = vmul.f32 %v832, %v1766
  %v1768 = vsub.f32 1.0, %v1767
  %v1769 = vmul.f32 %v1766, %v1768
  %v1770 = vadd.f32 %v1766, %v1769
  %vm1771 = vweird.f32 %v832
  %vm1772 = vweird.f32 %v1766
  %vm1773 = vmor %vm1771, %vm1772
  %v1774 = vsel %vm1773, %v1766, %v1770
  %v1775 = vand.u32 2147483647, %v832
  %vm1776 = vcmp.eq.f32.partialorder %v1775, 8.507059e+37
  %v1777 = vand.u32 %v832, 2147483648
  %v1778 = vor.u32 1.1754944e-38, %v1777
  %v1779 = vsel %vm1776, %v1778, %v1774
  %v1780 = vmul.f32 1.0, %v1779
  %v1781 = vrcp.pop %v833
  %v1782 = vmul.f32 %v833, %v1781
  %v1783 = vsub.f32 1.0, %v1782
  %v1784 = vmul.f32 %v1781, %v1783
  %v1785 = vadd.f32 %v1781, %v1784
  %vm1786 = vweird.f32 %v833
  %vm1787 = vweird.f32 %v1781
  %vm1788 = vmor %vm1786, %vm1787
  %v1789 = vsel %vm1788, %v1781, %v1785
  %v1790 = vand.u32 2147483647, %v833
  %vm1791 = vcmp.eq.f32.partialorder %v1790, 8.507059e+37
  %v1792 = vand.u32 %v833, 2147483648
  %v1793 = vor.u32 1.1754944e-38, %v1792
  %v1794 = vsel %vm1791, %v1793, %v1789
  %v1795 = vmul.f32 1.0, %v1794
  %v1796 = vrcp.pop %v834
  %v1797 = vmul.f32 %v834, %v1796
  %v1798 = vsub.f32 1.0, %v1797
  %v1799 = vmul.f32 %v1796, %v1798
  %v1800 = vadd.f32 %v1796, %v1799
  %vm1801 = vweird.f32 %v834
  %vm1802 = vweird.f32 %v1796
  %vm1803 = vmor %vm1801, %vm1802
  %v1804 = vsel %vm1803, %v1796, %v1800
  %v1805 = vand.u32 2147483647, %v834
  %vm1806 = vcmp.eq.f32.partialorder %v1805, 8.507059e+37
  %v1807 = vand.u32 %v834, 2147483648
  %v1808 = vor.u32 1.1754944e-38, %v1807
  %v1809 = vsel %vm1806, %v1808, %v1804
  %v1810 = vmul.f32 1.0, %v1809
  %v1811 = vrcp.pop %v835
  %v1812 = vmul.f32 %v835, %v1811
  %v1813 = vsub.f32 1.0, %v1812
  %v1814 = vmul.f32 %v1811, %v1813
  %v1815 = vadd.f32 %v1811, %v1814
  %vm1816 = vweird.f32 %v835
  %vm1817 = vweird.f32 %v1811
  %vm1818 = vmor %vm1816, %vm1817
  %v1819 = vsel %vm1818, %v1811, %v1815
  %v1820 = vand.u32 2147483647, %v835
  %vm1821 = vcmp.eq.f32.partialorder %v1820, 8.507059e+37
  %v1822 = vand.u32 %v835, 2147483648
  %v1823 = vor.u32 1.1754944e-38, %v1822
  %v1824 = vsel %vm1821, %v1823, %v1819
  %v1825 = vmul.f32 1.0, %v1824
  %v1826 = vrcp.pop %v836
  %v1827 = vmul.f32 %v836, %v1826
  %v1828 = vsub.f32 1.0, %v1827
  %v1829 = vmul.f32 %v1826, %v1828
  %v1830 = vadd.f32 %v1826, %v1829
  %vm1831 = vweird.f32 %v836
  %vm1832 = vweird.f32 %v1826
  %vm1833 = vmor %vm1831, %vm1832
  %v1834 = vsel %vm1833, %v1826, %v1830
  %v1835 = vand.u32 2147483647, %v836
  %vm1836 = vcmp.eq.f32.partialorder %v1835, 8.507059e+37
  %v1837 = vand.u32 %v836, 2147483648
  %v1838 = vor.u32 1.1754944e-38, %v1837
  %v1839 = vsel %vm1836, %v1838, %v1834
  %v1840 = vmul.f32 1.0, %v1839
  %v1841 = vrcp.pop %v837
  %v1842 = vmul.f32 %v837, %v1841
  %v1843 = vsub.f32 1.0, %v1842
  %v1844 = vmul.f32 %v1841, %v1843
  %v1845 = vadd.f32 %v1841, %v1844
  %vm1846 = vweird.f32 %v837
  %vm1847 = vweird.f32 %v1841
  %vm1848 = vmor %vm1846, %vm1847
  %v1849 = vsel %vm1848, %v1841, %v1845
  %v1850 = vand.u32 2147483647, %v837
  %vm1851 = vcmp.eq.f32.partialorder %v1850, 8.507059e+37
  %v1852 = vand.u32 %v837, 2147483648
  %v1853 = vor.u32 1.1754944e-38, %v1852
  %v1854 = vsel %vm1851, %v1853, %v1849
  %v1855 = vmul.f32 1.0, %v1854
  %v1856 = vrcp.pop %v838
  %v1857 = vmul.f32 %v838, %v1856
  %v1858 = vsub.f32 1.0, %v1857
  %v1859 = vmul.f32 %v1856, %v1858
  %v1860 = vadd.f32 %v1856, %v1859
  %vm1861 = vweird.f32 %v838
  %vm1862 = vweird.f32 %v1856
  %vm1863 = vmor %vm1861, %vm1862
  %v1864 = vsel %vm1863, %v1856, %v1860
  %v1865 = vand.u32 2147483647, %v838
  %vm1866 = vcmp.eq.f32.partialorder %v1865, 8.507059e+37
  %v1867 = vand.u32 %v838, 2147483648
  %v1868 = vor.u32 1.1754944e-38, %v1867
  %v1869 = vsel %vm1866, %v1868, %v1864
  %v1870 = vmul.f32 1.0, %v1869
  %v1871 = vrcp.pop %v839
  %v1872 = vmul.f32 %v839, %v1871
  %v1873 = vsub.f32 1.0, %v1872
  %v1874 = vmul.f32 %v1871, %v1873
  %v1875 = vadd.f32 %v1871, %v1874
  %vm1876 = vweird.f32 %v839
  %vm1877 = vweird.f32 %v1871
  %vm1878 = vmor %vm1876, %vm1877
  %v1879 = vsel %vm1878, %v1871, %v1875
  %v1880 = vand.u32 2147483647, %v839
  %vm1881 = vcmp.eq.f32.partialorder %v1880, 8.507059e+37
  %v1882 = vand.u32 %v839, 2147483648
  %v1883 = vor.u32 1.1754944e-38, %v1882
  %v1884 = vsel %vm1881, %v1883, %v1879
  %v1885 = vmul.f32 1.0, %v1884
  %v1886 = vrcp.pop %v840
  %v1887 = vmul.f32 %v840, %v1886
  %v1888 = vsub.f32 1.0, %v1887
  %v1889 = vmul.f32 %v1886, %v1888
  %v1890 = vadd.f32 %v1886, %v1889
  %vm1891 = vweird.f32 %v840
  %vm1892 = vweird.f32 %v1886
  %vm1893 = vmor %vm1891, %vm1892
  %v1894 = vsel %vm1893, %v1886, %v1890
  %v1895 = vand.u32 2147483647, %v840
  %vm1896 = vcmp.eq.f32.partialorder %v1895, 8.507059e+37
  %v1897 = vand.u32 %v840, 2147483648
  %v1898 = vor.u32 1.1754944e-38, %v1897
  %v1899 = vsel %vm1896, %v1898, %v1894
  %v1900 = vmul.f32 1.0, %v1899
  %v1901 = vrcp.pop %v841
  %v1902 = vmul.f32 %v841, %v1901
  %v1903 = vsub.f32 1.0, %v1902
  %v1904 = vmul.f32 %v1901, %v1903
  %v1905 = vadd.f32 %v1901, %v1904
  %vm1906 = vweird.f32 %v841
  %vm1907 = vweird.f32 %v1901
  %vm1908 = vmor %vm1906, %vm1907
  %v1909 = vsel %vm1908, %v1901, %v1905
  %v1910 = vand.u32 2147483647, %v841
  %vm1911 = vcmp.eq.f32.partialorder %v1910, 8.507059e+37
  %v1912 = vand.u32 %v841, 2147483648
  %v1913 = vor.u32 1.1754944e-38, %v1912
  %v1914 = vsel %vm1911, %v1913, %v1909
  %v1915 = vmul.f32 1.0, %v1914
  %v1916 = vrcp.pop %v842
  %v1917 = vmul.f32 %v842, %v1916
  %v1918 = vsub.f32 1.0, %v1917
  %v1919 = vmul.f32 %v1916, %v1918
  %v1920 = vadd.f32 %v1916, %v1919
  %vm1921 = vweird.f32 %v842
  %vm1922 = vweird.f32 %v1916
  %vm1923 = vmor %vm1921, %vm1922
  %v1924 = vsel %vm1923, %v1916, %v1920
  %v1925 = vand.u32 2147483647, %v842
  %vm1926 = vcmp.eq.f32.partialorder %v1925, 8.507059e+37
  %v1927 = vand.u32 %v842, 2147483648
  %v1928 = vor.u32 1.1754944e-38, %v1927
  %v1929 = vsel %vm1926, %v1928, %v1924
  %v1930 = vmul.f32 1.0, %v1929
  %v1931 = vrcp.pop %v843
  %v1932 = vmul.f32 %v843, %v1931
  %v1933 = vsub.f32 1.0, %v1932
  %v1934 = vmul.f32 %v1931, %v1933
  %v1935 = vadd.f32 %v1931, %v1934
  %vm1936 = vweird.f32 %v843
  %vm1937 = vweird.f32 %v1931
  %vm1938 = vmor %vm1936, %vm1937
  %v1939 = vsel %vm1938, %v1931, %v1935
  %v1940 = vand.u32 2147483647, %v843
  %vm1941 = vcmp.eq.f32.partialorder %v1940, 8.507059e+37
  %v1942 = vand.u32 %v843, 2147483648
  %v1943 = vor.u32 1.1754944e-38, %v1942
  %v1944 = vsel %vm1941, %v1943, %v1939
  %v1945 = vmul.f32 1.0, %v1944
  %v1946 = vrcp.pop %v844
  %v1947 = vmul.f32 %v844, %v1946
  %v1948 = vsub.f32 1.0, %v1947
  %v1949 = vmul.f32 %v1946, %v1948
  %v1950 = vadd.f32 %v1946, %v1949
  %vm1951 = vweird.f32 %v844
  %vm1952 = vweird.f32 %v1946
  %vm1953 = vmor %vm1951, %vm1952
  %v1954 = vsel %vm1953, %v1946, %v1950
  %v1955 = vand.u32 2147483647, %v844
  %vm1956 = vcmp.eq.f32.partialorder %v1955, 8.507059e+37
  %v1957 = vand.u32 %v844, 2147483648
  %v1958 = vor.u32 1.1754944e-38, %v1957
  %v1959 = vsel %vm1956, %v1958, %v1954
  %v1960 = vmul.f32 1.0, %v1959
  %v1961 = vrcp.pop %v845
  %v1962 = vmul.f32 %v845, %v1961
  %v1963 = vsub.f32 1.0, %v1962
  %v1964 = vmul.f32 %v1961, %v1963
  %v1965 = vadd.f32 %v1961, %v1964
  %vm1966 = vweird.f32 %v845
  %vm1967 = vweird.f32 %v1961
  %vm1968 = vmor %vm1966, %vm1967
  %v1969 = vsel %vm1968, %v1961, %v1965
  %v1970 = vand.u32 2147483647, %v845
  %vm1971 = vcmp.eq.f32.partialorder %v1970, 8.507059e+37
  %v1972 = vand.u32 %v845, 2147483648
  %v1973 = vor.u32 1.1754944e-38, %v1972
  %v1974 = vsel %vm1971, %v1973, %v1969
  %v1975 = vmul.f32 1.0, %v1974
  %v1976 = vrcp.pop %v846
  %v1977 = vmul.f32 %v846, %v1976
  %v1978 = vsub.f32 1.0, %v1977
  %v1979 = vmul.f32 %v1976, %v1978
  %v1980 = vadd.f32 %v1976, %v1979
  %vm1981 = vweird.f32 %v846
  %vm1982 = vweird.f32 %v1976
  %vm1983 = vmor %vm1981, %vm1982
  %v1984 = vsel %vm1983, %v1976, %v1980
  %v1985 = vand.u32 2147483647, %v846
  %vm1986 = vcmp.eq.f32.partialorder %v1985, 8.507059e+37
  %v1987 = vand.u32 %v846, 2147483648
  %v1988 = vor.u32 1.1754944e-38, %v1987
  %v1989 = vsel %vm1986, %v1988, %v1984
  %v1990 = vmul.f32 1.0, %v1989
  %v1991 = vrcp.pop %v847
  %v1992 = vmul.f32 %v847, %v1991
  %v1993 = vsub.f32 1.0, %v1992
  %v1994 = vmul.f32 %v1991, %v1993
  %v1995 = vadd.f32 %v1991, %v1994
  %vm1996 = vweird.f32 %v847
  %vm1997 = vweird.f32 %v1991
  %vm1998 = vmor %vm1996, %vm1997
  %v1999 = vsel %vm1998, %v1991, %v1995
  %v2000 = vand.u32 2147483647, %v847
  %vm2001 = vcmp.eq.f32.partialorder %v2000, 8.507059e+37
  %v2002 = vand.u32 %v847, 2147483648
  %v2003 = vor.u32 1.1754944e-38, %v2002
  %v2004 = vsel %vm2001, %v2003, %v1999
  %v2005 = vmul.f32 1.0, %v2004
  %v2006 = vrcp.pop %v848
  %v2007 = vmul.f32 %v848, %v2006
  %v2008 = vsub.f32 1.0, %v2007
  %v2009 = vmul.f32 %v2006, %v2008
  %v2010 = vadd.f32 %v2006, %v2009
  %vm2011 = vweird.f32 %v848
  %vm2012 = vweird.f32 %v2006
  %vm2013 = vmor %vm2011, %vm2012
  %v2014 = vsel %vm2013, %v2006, %v2010
  %v2015 = vand.u32 2147483647, %v848
  %vm2016 = vcmp.eq.f32.partialorder %v2015, 8.507059e+37
  %v2017 = vand.u32 %v848, 2147483648
  %v2018 = vor.u32 1.1754944e-38, %v2017
  %v2019 = vsel %vm2016, %v2018, %v2014
  %v2020 = vmul.f32 1.0, %v2019
  %v2021 = vrcp.pop %v849
  %v2022 = vmul.f32 %v849, %v2021
  %v2023 = vsub.f32 1.0, %v2022
  %v2024 = vmul.f32 %v2021, %v2023
  %v2025 = vadd.f32 %v2021, %v2024
  %vm2026 = vweird.f32 %v849
  %vm2027 = vweird.f32 %v2021
  %vm2028 = vmor %vm2026, %vm2027
  %v2029 = vsel %vm2028, %v2021, %v2025
  %v2030 = vand.u32 2147483647, %v849
  %vm2031 = vcmp.eq.f32.partialorder %v2030, 8.507059e+37
  %v2032 = vand.u32 %v849, 2147483648
  %v2033 = vor.u32 1.1754944e-38, %v2032
  %v2034 = vsel %vm2031, %v2033, %v2029
  %v2035 = vmul.f32 1.0, %v2034
  %v2036 = vrcp.pop %v850
  %v2037 = vmul.f32 %v850, %v2036
  %v2038 = vsub.f32 1.0, %v2037
  %v2039 = vmul.f32 %v2036, %v2038
  %v2040 = vadd.f32 %v2036, %v2039
  %vm2041 = vweird.f32 %v850
  %vm2042 = vweird.f32 %v2036
  %vm2043 = vmor %vm2041, %vm2042
  %v2044 = vsel %vm2043, %v2036, %v2040
  %v2045 = vand.u32 2147483647, %v850
  %vm2046 = vcmp.eq.f32.partialorder %v2045, 8.507059e+37
  %v2047 = vand.u32 %v850, 2147483648
  %v2048 = vor.u32 1.1754944e-38, %v2047
  %v2049 = vsel %vm2046, %v2048, %v2044
  %v2050 = vmul.f32 1.0, %v2049
  %v2051 = vrcp.pop %v851
  %v2052 = vmul.f32 %v851, %v2051
  %v2053 = vsub.f32 1.0, %v2052
  %v2054 = vmul.f32 %v2051, %v2053
  %v2055 = vadd.f32 %v2051, %v2054
  %vm2056 = vweird.f32 %v851
  %vm2057 = vweird.f32 %v2051
  %vm2058 = vmor %vm2056, %vm2057
  %v2059 = vsel %vm2058, %v2051, %v2055
  %v2060 = vand.u32 2147483647, %v851
  %vm2061 = vcmp.eq.f32.partialorder %v2060, 8.507059e+37
  %v2062 = vand.u32 %v851, 2147483648
  %v2063 = vor.u32 1.1754944e-38, %v2062
  %v2064 = vsel %vm2061, %v2063, %v2059
  %v2065 = vmul.f32 1.0, %v2064
  %v2066 = vrcp.pop %v852
  %v2067 = vmul.f32 %v852, %v2066
  %v2068 = vsub.f32 1.0, %v2067
  %v2069 = vmul.f32 %v2066, %v2068
  %v2070 = vadd.f32 %v2066, %v2069
  %vm2071 = vweird.f32 %v852
  %vm2072 = vweird.f32 %v2066
  %vm2073 = vmor %vm2071, %vm2072
  %v2074 = vsel %vm2073, %v2066, %v2070
  %v2075 = vand.u32 2147483647, %v852
  %vm2076 = vcmp.eq.f32.partialorder %v2075, 8.507059e+37
  %v2077 = vand.u32 %v852, 2147483648
  %v2078 = vor.u32 1.1754944e-38, %v2077
  %v2079 = vsel %vm2076, %v2078, %v2074
  %v2080 = vmul.f32 1.0, %v2079
  %v2081 = vrcp.pop %v853
  %v2082 = vmul.f32 %v853, %v2081
  %v2083 = vsub.f32 1.0, %v2082
  %v2084 = vmul.f32 %v2081, %v2083
  %v2085 = vadd.f32 %v2081, %v2084
  %vm2086 = vweird.f32 %v853
  %vm2087 = vweird.f32 %v2081
  %vm2088 = vmor %vm2086, %vm2087
  %v2089 = vsel %vm2088, %v2081, %v2085
  %v2090 = vand.u32 2147483647, %v853
  %vm2091 = vcmp.eq.f32.partialorder %v2090, 8.507059e+37
  %v2092 = vand.u32 %v853, 2147483648
  %v2093 = vor.u32 1.1754944e-38, %v2092
  %v2094 = vsel %vm2091, %v2093, %v2089
  %v2095 = vmul.f32 1.0, %v2094
  %v2096 = vrcp.pop %v854
  %v2097 = vmul.f32 %v854, %v2096
  %v2098 = vsub.f32 1.0, %v2097
  %v2099 = vmul.f32 %v2096, %v2098
  %v2100 = vadd.f32 %v2096, %v2099
  %vm2101 = vweird.f32 %v854
  %vm2102 = vweird.f32 %v2096
  %vm2103 = vmor %vm2101, %vm2102
  %v2104 = vsel %vm2103, %v2096, %v2100
  %v2105 = vand.u32 2147483647, %v854
  %vm2106 = vcmp.eq.f32.partialorder %v2105, 8.507059e+37
  %v2107 = vand.u32 %v854, 2147483648
  %v2108 = vor.u32 1.1754944e-38, %v2107
  %v2109 = vsel %vm2106, %v2108, %v2104
  %v2110 = vmul.f32 1.0, %v2109
  %v2111 = vrcp.pop %v855
  %v2112 = vmul.f32 %v855, %v2111
  %v2113 = vsub.f32 1.0, %v2112
  %v2114 = vmul.f32 %v2111, %v2113
  %v2115 = vadd.f32 %v2111, %v2114
  %vm2116 = vweird.f32 %v855
  %vm2117 = vweird.f32 %v2111
  %vm2118 = vmor %vm2116, %vm2117
  %v2119 = vsel %vm2118, %v2111, %v2115
  %v2120 = vand.u32 2147483647, %v855
  %vm2121 = vcmp.eq.f32.partialorder %v2120, 8.507059e+37
  %v2122 = vand.u32 %v855, 2147483648
  %v2123 = vor.u32 1.1754944e-38, %v2122
  %v2124 = vsel %vm2121, %v2123, %v2119
  %v2125 = vmul.f32 1.0, %v2124
  %v2126 = vrcp.pop %v856
  %v2127 = vmul.f32 %v856, %v2126
  %v2128 = vsub.f32 1.0, %v2127
  %v2129 = vmul.f32 %v2126, %v2128
  %v2130 = vadd.f32 %v2126, %v2129
  %vm2131 = vweird.f32 %v856
  %vm2132 = vweird.f32 %v2126
  %vm2133 = vmor %vm2131, %vm2132
  %v2134 = vsel %vm2133, %v2126, %v2130
  %v2135 = vand.u32 2147483647, %v856
  %vm2136 = vcmp.eq.f32.partialorder %v2135, 8.507059e+37
  %v2137 = vand.u32 %v856, 2147483648
  %v2138 = vor.u32 1.1754944e-38, %v2137
  %v2139 = vsel %vm2136, %v2138, %v2134
  %v2140 = vmul.f32 1.0, %v2139
  %v2141 = vrcp.pop %v857
  %v2142 = vmul.f32 %v857, %v2141
  %v2143 = vsub.f32 1.0, %v2142
  %v2144 = vmul.f32 %v2141, %v2143
  %v2145 = vadd.f32 %v2141, %v2144
  %vm2146 = vweird.f32 %v857
  %vm2147 = vweird.f32 %v2141
  %vm2148 = vmor %vm2146, %vm2147
  %v2149 = vsel %vm2148, %v2141, %v2145
  %v2150 = vand.u32 2147483647, %v857
  %vm2151 = vcmp.eq.f32.partialorder %v2150, 8.507059e+37
  %v2152 = vand.u32 %v857, 2147483648
  %v2153 = vor.u32 1.1754944e-38, %v2152
  %v2154 = vsel %vm2151, %v2153, %v2149
  %v2155 = vmul.f32 1.0, %v2154
  %v2156 = vrcp.pop %v858
  %v2157 = vmul.f32 %v858, %v2156
  %v2158 = vsub.f32 1.0, %v2157
  %v2159 = vmul.f32 %v2156, %v2158
  %v2160 = vadd.f32 %v2156, %v2159
  %vm2161 = vweird.f32 %v858
  %vm2162 = vweird.f32 %v2156
  %vm2163 = vmor %vm2161, %vm2162
  %v2164 = vsel %vm2163, %v2156, %v2160
  %v2165 = vand.u32 2147483647, %v858
  %vm2166 = vcmp.eq.f32.partialorder %v2165, 8.507059e+37
  %v2167 = vand.u32 %v858, 2147483648
  %v2168 = vor.u32 1.1754944e-38, %v2167
  %v2169 = vsel %vm2166, %v2168, %v2164
  %v2170 = vmul.f32 1.0, %v2169
  %v2171 = vrcp.pop %v859
  %v2172 = vmul.f32 %v859, %v2171
  %v2173 = vsub.f32 1.0, %v2172
  %v2174 = vmul.f32 %v2171, %v2173
  %v2175 = vadd.f32 %v2171, %v2174
  %vm2176 = vweird.f32 %v859
  %vm2177 = vweird.f32 %v2171
  %vm2178 = vmor %vm2176, %vm2177
  %v2179 = vsel %vm2178, %v2171, %v2175
  %v2180 = vand.u32 2147483647, %v859
  %vm2181 = vcmp.eq.f32.partialorder %v2180, 8.507059e+37
  %v2182 = vand.u32 %v859, 2147483648
  %v2183 = vor.u32 1.1754944e-38, %v2182
  %v2184 = vsel %vm2181, %v2183, %v2179
  %v2185 = vmul.f32 1.0, %v2184
  %v2186 = vrcp.pop %v860
  %v2187 = vmul.f32 %v860, %v2186
  %v2188 = vsub.f32 1.0, %v2187
  %v2189 = vmul.f32 %v2186, %v2188
  %v2190 = vadd.f32 %v2186, %v2189
  %vm2191 = vweird.f32 %v860
  %vm2192 = vweird.f32 %v2186
  %vm2193 = vmor %vm2191, %vm2192
  %v2194 = vsel %vm2193, %v2186, %v2190
  %v2195 = vand.u32 2147483647, %v860
  %vm2196 = vcmp.eq.f32.partialorder %v2195, 8.507059e+37
  %v2197 = vand.u32 %v860, 2147483648
  %v2198 = vor.u32 1.1754944e-38, %v2197
  %v2199 = vsel %vm2196, %v2198, %v2194
  %v2200 = vmul.f32 1.0, %v2199
  %v2201 = vrcp.pop %v861
  %v2202 = vmul.f32 %v861, %v2201
  %v2203 = vsub.f32 1.0, %v2202
  %v2204 = vmul.f32 %v2201, %v2203
  %v2205 = vadd.f32 %v2201, %v2204
  %vm2206 = vweird.f32 %v861
  %vm2207 = vweird.f32 %v2201
  %vm2208 = vmor %vm2206, %vm2207
  %v2209 = vsel %vm2208, %v2201, %v2205
  %v2210 = vand.u32 2147483647, %v861
  %vm2211 = vcmp.eq.f32.partialorder %v2210, 8.507059e+37
  %v2212 = vand.u32 %v861, 2147483648
  %v2213 = vor.u32 1.1754944e-38, %v2212
  %v2214 = vsel %vm2211, %v2213, %v2209
  %v2215 = vmul.f32 1.0, %v2214
  %v2216 = vrcp.pop %v862
  %v2217 = vmul.f32 %v862, %v2216
  %v2218 = vsub.f32 1.0, %v2217
  %v2219 = vmul.f32 %v2216, %v2218
  %v2220 = vadd.f32 %v2216, %v2219
  %vm2221 = vweird.f32 %v862
  %vm2222 = vweird.f32 %v2216
  %vm2223 = vmor %vm2221, %vm2222
  %v2224 = vsel %vm2223, %v2216, %v2220
  %v2225 = vand.u32 2147483647, %v862
  %vm2226 = vcmp.eq.f32.partialorder %v2225, 8.507059e+37
  %v2227 = vand.u32 %v862, 2147483648
  %v2228 = vor.u32 1.1754944e-38, %v2227
  %v2229 = vsel %vm2226, %v2228, %v2224
  %v2230 = vmul.f32 1.0, %v2229
  %v2231 = vrcp.pop %v863
  %v2232 = vmul.f32 %v863, %v2231
  %v2233 = vsub.f32 1.0, %v2232
  %v2234 = vmul.f32 %v2231, %v2233
  %v2235 = vadd.f32 %v2231, %v2234
  %vm2236 = vweird.f32 %v863
  %vm2237 = vweird.f32 %v2231
  %vm2238 = vmor %vm2236, %vm2237
  %v2239 = vsel %vm2238, %v2231, %v2235
  %v2240 = vand.u32 2147483647, %v863
  %vm2241 = vcmp.eq.f32.partialorder %v2240, 8.507059e+37
  %v2242 = vand.u32 %v863, 2147483648
  %v2243 = vor.u32 1.1754944e-38, %v2242
  %v2244 = vsel %vm2241, %v2243, %v2239
  %v2245 = vmul.f32 1.0, %v2244
  %v2246 = vrcp.pop %v864
  %v2247 = vmul.f32 %v864, %v2246
  %v2248 = vsub.f32 1.0, %v2247
  %v2249 = vmul.f32 %v2246, %v2248
  %v2250 = vadd.f32 %v2246, %v2249
  %vm2251 = vweird.f32 %v864
  %vm2252 = vweird.f32 %v2246
  %vm2253 = vmor %vm2251, %vm2252
  %v2254 = vsel %vm2253, %v2246, %v2250
  %v2255 = vand.u32 2147483647, %v864
  %vm2256 = vcmp.eq.f32.partialorder %v2255, 8.507059e+37
  %v2257 = vand.u32 %v864, 2147483648
  %v2258 = vor.u32 1.1754944e-38, %v2257
  %v2259 = vsel %vm2256, %v2258, %v2254
  %v2260 = vmul.f32 1.0, %v2259
  %v2261 = vrcp.pop %v865
  %v2262 = vmul.f32 %v865, %v2261
  %v2263 = vsub.f32 1.0, %v2262
  %v2264 = vmul.f32 %v2261, %v2263
  %v2265 = vadd.f32 %v2261, %v2264
  %vm2266 = vweird.f32 %v865
  %vm2267 = vweird.f32 %v2261
  %vm2268 = vmor %vm2266, %vm2267
  %v2269 = vsel %vm2268, %v2261, %v2265
  %v2270 = vand.u32 2147483647, %v865
  %vm2271 = vcmp.eq.f32.partialorder %v2270, 8.507059e+37
  %v2272 = vand.u32 %v865, 2147483648
  %v2273 = vor.u32 1.1754944e-38, %v2272
  %v2274 = vsel %vm2271, %v2273, %v2269
  %v2275 = vmul.f32 1.0, %v2274
  %v2276 = vrcp.pop %v866
  %v2277 = vmul.f32 %v866, %v2276
  %v2278 = vsub.f32 1.0, %v2277
  %v2279 = vmul.f32 %v2276, %v2278
  %v2280 = vadd.f32 %v2276, %v2279
  %vm2281 = vweird.f32 %v866
  %vm2282 = vweird.f32 %v2276
  %vm2283 = vmor %vm2281, %vm2282
  %v2284 = vsel %vm2283, %v2276, %v2280
  %v2285 = vand.u32 2147483647, %v866
  %vm2286 = vcmp.eq.f32.partialorder %v2285, 8.507059e+37
  %v2287 = vand.u32 %v866, 2147483648
  %v2288 = vor.u32 1.1754944e-38, %v2287
  %v2289 = vsel %vm2286, %v2288, %v2284
  %v2290 = vmul.f32 1.0, %v2289
  %v2291 = vrcp.pop %v867
  %v2292 = vmul.f32 %v867, %v2291
  %v2293 = vsub.f32 1.0, %v2292
  %v2294 = vmul.f32 %v2291, %v2293
  %v2295 = vadd.f32 %v2291, %v2294
  %vm2296 = vweird.f32 %v867
  %vm2297 = vweird.f32 %v2291
  %vm2298 = vmor %vm2296, %vm2297
  %v2299 = vsel %vm2298, %v2291, %v2295
  %v2300 = vand.u32 2147483647, %v867
  %vm2301 = vcmp.eq.f32.partialorder %v2300, 8.507059e+37
  %v2302 = vand.u32 %v867, 2147483648
  %v2303 = vor.u32 1.1754944e-38, %v2302
  %v2304 = vsel %vm2301, %v2303, %v2299
  %v2305 = vmul.f32 1.0, %v2304
  %v2306 = vrcp.pop %v868
  %v2307 = vmul.f32 %v868, %v2306
  %v2308 = vsub.f32 1.0, %v2307
  %v2309 = vmul.f32 %v2306, %v2308
  %v2310 = vadd.f32 %v2306, %v2309
  %vm2311 = vweird.f32 %v868
  %vm2312 = vweird.f32 %v2306
  %vm2313 = vmor %vm2311, %vm2312
  %v2314 = vsel %vm2313, %v2306, %v2310
  %v2315 = vand.u32 2147483647, %v868
  %vm2316 = vcmp.eq.f32.partialorder %v2315, 8.507059e+37
  %v2317 = vand.u32 %v868, 2147483648
  %v2318 = vor.u32 1.1754944e-38, %v2317
  %v2319 = vsel %vm2316, %v2318, %v2314
  %v2320 = vmul.f32 1.0, %v2319
  %v2321 = vrcp.pop %v869
  %v2322 = vmul.f32 %v869, %v2321
  %v2323 = vsub.f32 1.0, %v2322
  %v2324 = vmul.f32 %v2321, %v2323
  %v2325 = vadd.f32 %v2321, %v2324
  %vm2326 = vweird.f32 %v869
  %vm2327 = vweird.f32 %v2321
  %vm2328 = vmor %vm2326, %vm2327
  %v2329 = vsel %vm2328, %v2321, %v2325
  %v2330 = vand.u32 2147483647, %v869
  %vm2331 = vcmp.eq.f32.partialorder %v2330, 8.507059e+37
  %v2332 = vand.u32 %v869, 2147483648
  %v2333 = vor.u32 1.1754944e-38, %v2332
  %v2334 = vsel %vm2331, %v2333, %v2329
  %v2335 = vmul.f32 1.0, %v2334
  %v2336 = vrcp.pop %v870
  %v2337 = vmul.f32 %v870, %v2336
  %v2338 = vsub.f32 1.0, %v2337
  %v2339 = vmul.f32 %v2336, %v2338
  %v2340 = vadd.f32 %v2336, %v2339
  %vm2341 = vweird.f32 %v870
  %vm2342 = vweird.f32 %v2336
  %vm2343 = vmor %vm2341, %vm2342
  %v2344 = vsel %vm2343, %v2336, %v2340
  %v2345 = vand.u32 2147483647, %v870
  %vm2346 = vcmp.eq.f32.partialorder %v2345, 8.507059e+37
  %v2347 = vand.u32 %v870, 2147483648
  %v2348 = vor.u32 1.1754944e-38, %v2347
  %v2349 = vsel %vm2346, %v2348, %v2344
  %v2350 = vmul.f32 1.0, %v2349
  %v2351 = vrcp.pop %v871
  %v2352 = vmul.f32 %v871, %v2351
  %v2353 = vsub.f32 1.0, %v2352
  %v2354 = vmul.f32 %v2351, %v2353
  %v2355 = vadd.f32 %v2351, %v2354
  %vm2356 = vweird.f32 %v871
  %vm2357 = vweird.f32 %v2351
  %vm2358 = vmor %vm2356, %vm2357
  %v2359 = vsel %vm2358, %v2351, %v2355
  %v2360 = vand.u32 2147483647, %v871
  %vm2361 = vcmp.eq.f32.partialorder %v2360, 8.507059e+37
  %v2362 = vand.u32 %v871, 2147483648
  %v2363 = vor.u32 1.1754944e-38, %v2362
  %v2364 = vsel %vm2361, %v2363, %v2359
  %v2365 = vmul.f32 1.0, %v2364
  %v2366 = vrcp.pop %v872
  %v2367 = vmul.f32 %v872, %v2366
  %v2368 = vsub.f32 1.0, %v2367
  %v2369 = vmul.f32 %v2366, %v2368
  %v2370 = vadd.f32 %v2366, %v2369
  %vm2371 = vweird.f32 %v872
  %vm2372 = vweird.f32 %v2366
  %vm2373 = vmor %vm2371, %vm2372
  %v2374 = vsel %vm2373, %v2366, %v2370
  %v2375 = vand.u32 2147483647, %v872
  %vm2376 = vcmp.eq.f32.partialorder %v2375, 8.507059e+37
  %v2377 = vand.u32 %v872, 2147483648
  %v2378 = vor.u32 1.1754944e-38, %v2377
  %v2379 = vsel %vm2376, %v2378, %v2374
  %v2380 = vmul.f32 1.0, %v2379
  %v2381 = vrcp.pop %v873
  %v2382 = vmul.f32 %v873, %v2381
  %v2383 = vsub.f32 1.0, %v2382
  %v2384 = vmul.f32 %v2381, %v2383
  %v2385 = vadd.f32 %v2381, %v2384
  %vm2386 = vweird.f32 %v873
  %vm2387 = vweird.f32 %v2381
  %vm2388 = vmor %vm2386, %vm2387
  %v2389 = vsel %vm2388, %v2381, %v2385
  %v2390 = vand.u32 2147483647, %v873
  %vm2391 = vcmp.eq.f32.partialorder %v2390, 8.507059e+37
  %v2392 = vand.u32 %v873, 2147483648
  %v2393 = vor.u32 1.1754944e-38, %v2392
  %v2394 = vsel %vm2391, %v2393, %v2389
  %v2395 = vmul.f32 1.0, %v2394
  %v2396 = vrcp.pop %v874
  %v2397 = vmul.f32 %v874, %v2396
  %v2398 = vsub.f32 1.0, %v2397
  %v2399 = vmul.f32 %v2396, %v2398
  %v2400 = vadd.f32 %v2396, %v2399
  %vm2401 = vweird.f32 %v874
  %vm2402 = vweird.f32 %v2396
  %vm2403 = vmor %vm2401, %vm2402
  %v2404 = vsel %vm2403, %v2396, %v2400
  %v2405 = vand.u32 2147483647, %v874
  %vm2406 = vcmp.eq.f32.partialorder %v2405, 8.507059e+37
  %v2407 = vand.u32 %v874, 2147483648
  %v2408 = vor.u32 1.1754944e-38, %v2407
  %v2409 = vsel %vm2406, %v2408, %v2404
  %v2410 = vmul.f32 1.0, %v2409
  %v2411 = vrcp.pop %v875
  %v2412 = vmul.f32 %v875, %v2411
  %v2413 = vsub.f32 1.0, %v2412
  %v2414 = vmul.f32 %v2411, %v2413
  %v2415 = vadd.f32 %v2411, %v2414
  %vm2416 = vweird.f32 %v875
  %vm2417 = vweird.f32 %v2411
  %vm2418 = vmor %vm2416, %vm2417
  %v2419 = vsel %vm2418, %v2411, %v2415
  %v2420 = vand.u32 2147483647, %v875
  %vm2421 = vcmp.eq.f32.partialorder %v2420, 8.507059e+37
  %v2422 = vand.u32 %v875, 2147483648
  %v2423 = vor.u32 1.1754944e-38, %v2422
  %v2424 = vsel %vm2421, %v2423, %v2419
  %v2425 = vmul.f32 1.0, %v2424
  %v2426 = vrcp.pop %v876
  %v2427 = vmul.f32 %v876, %v2426
  %v2428 = vsub.f32 1.0, %v2427
  %v2429 = vmul.f32 %v2426, %v2428
  %v2430 = vadd.f32 %v2426, %v2429
  %vm2431 = vweird.f32 %v876
  %vm2432 = vweird.f32 %v2426
  %vm2433 = vmor %vm2431, %vm2432
  %v2434 = vsel %vm2433, %v2426, %v2430
  %v2435 = vand.u32 2147483647, %v876
  %vm2436 = vcmp.eq.f32.partialorder %v2435, 8.507059e+37
  %v2437 = vand.u32 %v876, 2147483648
  %v2438 = vor.u32 1.1754944e-38, %v2437
  %v2439 = vsel %vm2436, %v2438, %v2434
  %v2440 = vmul.f32 1.0, %v2439
  %v2441 = vrcp.pop %v877
  %v2442 = vmul.f32 %v877, %v2441
  %v2443 = vsub.f32 1.0, %v2442
  %v2444 = vmul.f32 %v2441, %v2443
  %v2445 = vadd.f32 %v2441, %v2444
  %vm2446 = vweird.f32 %v877
  %vm2447 = vweird.f32 %v2441
  %vm2448 = vmor %vm2446, %vm2447
  %v2449 = vsel %vm2448, %v2441, %v2445
  %v2450 = vand.u32 2147483647, %v877
  %vm2451 = vcmp.eq.f32.partialorder %v2450, 8.507059e+37
  %v2452 = vand.u32 %v877, 2147483648
  %v2453 = vor.u32 1.1754944e-38, %v2452
  %v2454 = vsel %vm2451, %v2453, %v2449
  %v2455 = vmul.f32 1.0, %v2454
  %v2456 = vrcp.pop %v878
  %v2457 = vmul.f32 %v878, %v2456
  %v2458 = vsub.f32 1.0, %v2457
  %v2459 = vmul.f32 %v2456, %v2458
  %v2460 = vadd.f32 %v2456, %v2459
  %vm2461 = vweird.f32 %v878
  %vm2462 = vweird.f32 %v2456
  %vm2463 = vmor %vm2461, %vm2462
  %v2464 = vsel %vm2463, %v2456, %v2460
  %v2465 = vand.u32 2147483647, %v878
  %vm2466 = vcmp.eq.f32.partialorder %v2465, 8.507059e+37
  %v2467 = vand.u32 %v878, 2147483648
  %v2468 = vor.u32 1.1754944e-38, %v2467
  %v2469 = vsel %vm2466, %v2468, %v2464
  %v2470 = vmul.f32 1.0, %v2469
  %v2471 = vrcp.pop %v879
  %v2472 = vmul.f32 %v879, %v2471
  %v2473 = vsub.f32 1.0, %v2472
  %v2474 = vmul.f32 %v2471, %v2473
  %v2475 = vadd.f32 %v2471, %v2474
  %vm2476 = vweird.f32 %v879
  %vm2477 = vweird.f32 %v2471
  %vm2478 = vmor %vm2476, %vm2477
  %v2479 = vsel %vm2478, %v2471, %v2475
  %v2480 = vand.u32 2147483647, %v879
  %vm2481 = vcmp.eq.f32.partialorder %v2480, 8.507059e+37
  %v2482 = vand.u32 %v879, 2147483648
  %v2483 = vor.u32 1.1754944e-38, %v2482
  %v2484 = vsel %vm2481, %v2483, %v2479
  %v2485 = vmul.f32 1.0, %v2484
  %v2486 = vrcp.pop %v880
  %v2487 = vmul.f32 %v880, %v2486
  %v2488 = vsub.f32 1.0, %v2487
  %v2489 = vmul.f32 %v2486, %v2488
  %v2490 = vadd.f32 %v2486, %v2489
  %vm2491 = vweird.f32 %v880
  %vm2492 = vweird.f32 %v2486
  %vm2493 = vmor %vm2491, %vm2492
  %v2494 = vsel %vm2493, %v2486, %v2490
  %v2495 = vand.u32 2147483647, %v880
  %vm2496 = vcmp.eq.f32.partialorder %v2495, 8.507059e+37
  %v2497 = vand.u32 %v880, 2147483648
  %v2498 = vor.u32 1.1754944e-38, %v2497
  %v2499 = vsel %vm2496, %v2498, %v2494
  %v2500 = vmul.f32 1.0, %v2499
  %v2501 = vrcp.pop %v881
  %v2502 = vmul.f32 %v881, %v2501
  %v2503 = vsub.f32 1.0, %v2502
  %v2504 = vmul.f32 %v2501, %v2503
  %v2505 = vadd.f32 %v2501, %v2504
  %vm2506 = vweird.f32 %v881
  %vm2507 = vweird.f32 %v2501
  %vm2508 = vmor %vm2506, %vm2507
  %v2509 = vsel %vm2508, %v2501, %v2505
  %v2510 = vand.u32 2147483647, %v881
  %vm2511 = vcmp.eq.f32.partialorder %v2510, 8.507059e+37
  %v2512 = vand.u32 %v881, 2147483648
  %v2513 = vor.u32 1.1754944e-38, %v2512
  %v2514 = vsel %vm2511, %v2513, %v2509
  %v2515 = vmul.f32 1.0, %v2514
  %v2516 = vrcp.pop %v882
  %v2517 = vmul.f32 %v882, %v2516
  %v2518 = vsub.f32 1.0, %v2517
  %v2519 = vmul.f32 %v2516, %v2518
  %v2520 = vadd.f32 %v2516, %v2519
  %vm2521 = vweird.f32 %v882
  %vm2522 = vweird.f32 %v2516
  %vm2523 = vmor %vm2521, %vm2522
  %v2524 = vsel %vm2523, %v2516, %v2520
  %v2525 = vand.u32 2147483647, %v882
  %vm2526 = vcmp.eq.f32.partialorder %v2525, 8.507059e+37
  %v2527 = vand.u32 %v882, 2147483648
  %v2528 = vor.u32 1.1754944e-38, %v2527
  %v2529 = vsel %vm2526, %v2528, %v2524
  %v2530 = vmul.f32 1.0, %v2529
  %v2531 = vrcp.pop %v883
  %v2532 = vmul.f32 %v883, %v2531
  %v2533 = vsub.f32 1.0, %v2532
  %v2534 = vmul.f32 %v2531, %v2533
  %v2535 = vadd.f32 %v2531, %v2534
  %vm2536 = vweird.f32 %v883
  %vm2537 = vweird.f32 %v2531
  %vm2538 = vmor %vm2536, %vm2537
  %v2539 = vsel %vm2538, %v2531, %v2535
  %v2540 = vand.u32 2147483647, %v883
  %vm2541 = vcmp.eq.f32.partialorder %v2540, 8.507059e+37
  %v2542 = vand.u32 %v883, 2147483648
  %v2543 = vor.u32 1.1754944e-38, %v2542
  %v2544 = vsel %vm2541, %v2543, %v2539
  %v2545 = vmul.f32 1.0, %v2544
  %v2546 = vrcp.pop %v884
  %v2547 = vmul.f32 %v884, %v2546
  %v2548 = vsub.f32 1.0, %v2547
  %v2549 = vmul.f32 %v2546, %v2548
  %v2550 = vadd.f32 %v2546, %v2549
  %vm2551 = vweird.f32 %v884
  %vm2552 = vweird.f32 %v2546
  %vm2553 = vmor %vm2551, %vm2552
  %v2554 = vsel %vm2553, %v2546, %v2550
  %v2555 = vand.u32 2147483647, %v884
  %vm2556 = vcmp.eq.f32.partialorder %v2555, 8.507059e+37
  %v2557 = vand.u32 %v884, 2147483648
  %v2558 = vor.u32 1.1754944e-38, %v2557
  %v2559 = vsel %vm2556, %v2558, %v2554
  %v2560 = vmul.f32 1.0, %v2559
  %v2561 = vrcp.pop %v885
  %v2562 = vmul.f32 %v885, %v2561
  %v2563 = vsub.f32 1.0, %v2562
  %v2564 = vmul.f32 %v2561, %v2563
  %v2565 = vadd.f32 %v2561, %v2564
  %vm2566 = vweird.f32 %v885
  %vm2567 = vweird.f32 %v2561
  %vm2568 = vmor %vm2566, %vm2567
  %v2569 = vsel %vm2568, %v2561, %v2565
  %v2570 = vand.u32 2147483647, %v885
  %vm2571 = vcmp.eq.f32.partialorder %v2570, 8.507059e+37
  %v2572 = vand.u32 %v885, 2147483648
  %v2573 = vor.u32 1.1754944e-38, %v2572
  %v2574 = vsel %vm2571, %v2573, %v2569
  %v2575 = vmul.f32 1.0, %v2574
  %v2576 = vrcp.pop %v886
  %v2577 = vmul.f32 %v886, %v2576
  %v2578 = vsub.f32 1.0, %v2577
  %v2579 = vmul.f32 %v2576, %v2578
  %v2580 = vadd.f32 %v2576, %v2579
  %vm2581 = vweird.f32 %v886
  %vm2582 = vweird.f32 %v2576
  %vm2583 = vmor %vm2581, %vm2582
  %v2584 = vsel %vm2583, %v2576, %v2580
  %v2585 = vand.u32 2147483647, %v886
  %vm2586 = vcmp.eq.f32.partialorder %v2585, 8.507059e+37
  %v2587 = vand.u32 %v886, 2147483648
  %v2588 = vor.u32 1.1754944e-38, %v2587
  %v2589 = vsel %vm2586, %v2588, %v2584
  %v2590 = vmul.f32 1.0, %v2589
  %v2591 = vrcp.pop %v887
  %v2592 = vmul.f32 %v887, %v2591
  %v2593 = vsub.f32 1.0, %v2592
  %v2594 = vmul.f32 %v2591, %v2593
  %v2595 = vadd.f32 %v2591, %v2594
  %vm2596 = vweird.f32 %v887
  %vm2597 = vweird.f32 %v2591
  %vm2598 = vmor %vm2596, %vm2597
  %v2599 = vsel %vm2598, %v2591, %v2595
  %v2600 = vand.u32 2147483647, %v887
  %vm2601 = vcmp.eq.f32.partialorder %v2600, 8.507059e+37
  %v2602 = vand.u32 %v887, 2147483648
  %v2603 = vor.u32 1.1754944e-38, %v2602
  %v2604 = vsel %vm2601, %v2603, %v2599
  %v2605 = vmul.f32 1.0, %v2604
  %v2606 = vrcp.pop %v888
  %v2607 = vmul.f32 %v888, %v2606
  %v2608 = vsub.f32 1.0, %v2607
  %v2609 = vmul.f32 %v2606, %v2608
  %v2610 = vadd.f32 %v2606, %v2609
  %vm2611 = vweird.f32 %v888
  %vm2612 = vweird.f32 %v2606
  %vm2613 = vmor %vm2611, %vm2612
  %v2614 = vsel %vm2613, %v2606, %v2610
  %v2615 = vand.u32 2147483647, %v888
  %vm2616 = vcmp.eq.f32.partialorder %v2615, 8.507059e+37
  %v2617 = vand.u32 %v888, 2147483648
  %v2618 = vor.u32 1.1754944e-38, %v2617
  %v2619 = vsel %vm2616, %v2618, %v2614
  %v2620 = vmul.f32 1.0, %v2619
  %v2621 = vrcp.pop %v889
  %v2622 = vmul.f32 %v889, %v2621
  %v2623 = vsub.f32 1.0, %v2622
  %v2624 = vmul.f32 %v2621, %v2623
  %v2625 = vadd.f32 %v2621, %v2624
  %vm2626 = vweird.f32 %v889
  %vm2627 = vweird.f32 %v2621
  %vm2628 = vmor %vm2626, %vm2627
  %v2629 = vsel %vm2628, %v2621, %v2625
  %v2630 = vand.u32 2147483647, %v889
  %vm2631 = vcmp.eq.f32.partialorder %v2630, 8.507059e+37
  %v2632 = vand.u32 %v889, 2147483648
  %v2633 = vor.u32 1.1754944e-38, %v2632
  %v2634 = vsel %vm2631, %v2633, %v2629
  %v2635 = vmul.f32 1.0, %v2634
  %v2636 = vrcp.pop %v890
  %v2637 = vmul.f32 %v890, %v2636
  %v2638 = vsub.f32 1.0, %v2637
  %v2639 = vmul.f32 %v2636, %v2638
  %v2640 = vadd.f32 %v2636, %v2639
  %vm2641 = vweird.f32 %v890
  %vm2642 = vweird.f32 %v2636
  %vm2643 = vmor %vm2641, %vm2642
  %v2644 = vsel %vm2643, %v2636, %v2640
  %v2645 = vand.u32 2147483647, %v890
  %vm2646 = vcmp.eq.f32.partialorder %v2645, 8.507059e+37
  %v2647 = vand.u32 %v890, 2147483648
  %v2648 = vor.u32 1.1754944e-38, %v2647
  %v2649 = vsel %vm2646, %v2648, %v2644
  %v2650 = vmul.f32 1.0, %v2649
  %v2651 = vrcp.pop %v891
  %v2652 = vmul.f32 %v891, %v2651
  %v2653 = vsub.f32 1.0, %v2652
  %v2654 = vmul.f32 %v2651, %v2653
  %v2655 = vadd.f32 %v2651, %v2654
  %vm2656 = vweird.f32 %v891
  %vm2657 = vweird.f32 %v2651
  %vm2658 = vmor %vm2656, %vm2657
  %v2659 = vsel %vm2658, %v2651, %v2655
  %v2660 = vand.u32 2147483647, %v891
  %vm2661 = vcmp.eq.f32.partialorder %v2660, 8.507059e+37
  %v2662 = vand.u32 %v891, 2147483648
  %v2663 = vor.u32 1.1754944e-38, %v2662
  %v2664 = vsel %vm2661, %v2663, %v2659
  %v2665 = vmul.f32 1.0, %v2664
  %v2666 = vrcp.pop %v892
  %v2667 = vmul.f32 %v892, %v2666
  %v2668 = vsub.f32 1.0, %v2667
  %v2669 = vmul.f32 %v2666, %v2668
  %v2670 = vadd.f32 %v2666, %v2669
  %vm2671 = vweird.f32 %v892
  %vm2672 = vweird.f32 %v2666
  %vm2673 = vmor %vm2671, %vm2672
  %v2674 = vsel %vm2673, %v2666, %v2670
  %v2675 = vand.u32 2147483647, %v892
  %vm2676 = vcmp.eq.f32.partialorder %v2675, 8.507059e+37
  %v2677 = vand.u32 %v892, 2147483648
  %v2678 = vor.u32 1.1754944e-38, %v2677
  %v2679 = vsel %vm2676, %v2678, %v2674
  %v2680 = vmul.f32 1.0, %v2679
  %v2681 = vrcp.pop %v893
  %v2682 = vmul.f32 %v893, %v2681
  %v2683 = vsub.f32 1.0, %v2682
  %v2684 = vmul.f32 %v2681, %v2683
  %v2685 = vadd.f32 %v2681, %v2684
  %vm2686 = vweird.f32 %v893
  %vm2687 = vweird.f32 %v2681
  %vm2688 = vmor %vm2686, %vm2687
  %v2689 = vsel %vm2688, %v2681, %v2685
  %v2690 = vand.u32 2147483647, %v893
  %vm2691 = vcmp.eq.f32.partialorder %v2690, 8.507059e+37
  %v2692 = vand.u32 %v893, 2147483648
  %v2693 = vor.u32 1.1754944e-38, %v2692
  %v2694 = vsel %vm2691, %v2693, %v2689
  %v2695 = vmul.f32 1.0, %v2694
  %v2696 = vrcp.pop %v894
  %v2697 = vmul.f32 %v894, %v2696
  %v2698 = vsub.f32 1.0, %v2697
  %v2699 = vmul.f32 %v2696, %v2698
  %v2700 = vadd.f32 %v2696, %v2699
  %vm2701 = vweird.f32 %v894
  %vm2702 = vweird.f32 %v2696
  %vm2703 = vmor %vm2701, %vm2702
  %v2704 = vsel %vm2703, %v2696, %v2700
  %v2705 = vand.u32 2147483647, %v894
  %vm2706 = vcmp.eq.f32.partialorder %v2705, 8.507059e+37
  %v2707 = vand.u32 %v894, 2147483648
  %v2708 = vor.u32 1.1754944e-38, %v2707
  %v2709 = vsel %vm2706, %v2708, %v2704
  %v2710 = vmul.f32 1.0, %v2709
  %v2711 = vrcp.pop %v895
  %v2712 = vmul.f32 %v895, %v2711
  %v2713 = vsub.f32 1.0, %v2712
  %v2714 = vmul.f32 %v2711, %v2713
  %v2715 = vadd.f32 %v2711, %v2714
  %vm2716 = vweird.f32 %v895
  %vm2717 = vweird.f32 %v2711
  %vm2718 = vmor %vm2716, %vm2717
  %v2719 = vsel %vm2718, %v2711, %v2715
  %v2720 = vand.u32 2147483647, %v895
  %vm2721 = vcmp.eq.f32.partialorder %v2720, 8.507059e+37
  %v2722 = vand.u32 %v895, 2147483648
  %v2723 = vor.u32 1.1754944e-38, %v2722
  %v2724 = vsel %vm2721, %v2723, %v2719
  %v2725 = vmul.f32 1.0, %v2724
  %v2726 = vrcp.pop %v896
  %v2727 = vmul.f32 %v896, %v2726
  %v2728 = vsub.f32 1.0, %v2727
  %v2729 = vmul.f32 %v2726, %v2728
  %v2730 = vadd.f32 %v2726, %v2729
  %vm2731 = vweird.f32 %v896
  %vm2732 = vweird.f32 %v2726
  %vm2733 = vmor %vm2731, %vm2732
  %v2734 = vsel %vm2733, %v2726, %v2730
  %v2735 = vand.u32 2147483647, %v896
  %vm2736 = vcmp.eq.f32.partialorder %v2735, 8.507059e+37
  %v2737 = vand.u32 %v896, 2147483648
  %v2738 = vor.u32 1.1754944e-38, %v2737
  %v2739 = vsel %vm2736, %v2738, %v2734
  %v2740 = vmul.f32 1.0, %v2739
  %v2741 = vrcp.pop %v897
  %v2742 = vmul.f32 %v897, %v2741
  %v2743 = vsub.f32 1.0, %v2742
  %v2744 = vmul.f32 %v2741, %v2743
  %v2745 = vadd.f32 %v2741, %v2744
  %vm2746 = vweird.f32 %v897
  %vm2747 = vweird.f32 %v2741
  %vm2748 = vmor %vm2746, %vm2747
  %v2749 = vsel %vm2748, %v2741, %v2745
  %v2750 = vand.u32 2147483647, %v897
  %vm2751 = vcmp.eq.f32.partialorder %v2750, 8.507059e+37
  %v2752 = vand.u32 %v897, 2147483648
  %v2753 = vor.u32 1.1754944e-38, %v2752
  %v2754 = vsel %vm2751, %v2753, %v2749
  %v2755 = vmul.f32 1.0, %v2754
  %v2756 = vrcp.pop %v898
  %v2757 = vmul.f32 %v898, %v2756
  %v2758 = vsub.f32 1.0, %v2757
  %v2759 = vmul.f32 %v2756, %v2758
  %v2760 = vadd.f32 %v2756, %v2759
  %vm2761 = vweird.f32 %v898
  %vm2762 = vweird.f32 %v2756
  %vm2763 = vmor %vm2761, %vm2762
  %v2764 = vsel %vm2763, %v2756, %v2760
  %v2765 = vand.u32 2147483647, %v898
  %vm2766 = vcmp.eq.f32.partialorder %v2765, 8.507059e+37
  %v2767 = vand.u32 %v898, 2147483648
  %v2768 = vor.u32 1.1754944e-38, %v2767
  %v2769 = vsel %vm2766, %v2768, %v2764
  %v2770 = vmul.f32 1.0, %v2769
  %v2771 = vrcp.pop %v899
  %v2772 = vmul.f32 %v899, %v2771
  %v2773 = vsub.f32 1.0, %v2772
  %v2774 = vmul.f32 %v2771, %v2773
  %v2775 = vadd.f32 %v2771, %v2774
  %vm2776 = vweird.f32 %v899
  %vm2777 = vweird.f32 %v2771
  %vm2778 = vmor %vm2776, %vm2777
  %v2779 = vsel %vm2778, %v2771, %v2775
  %v2780 = vand.u32 2147483647, %v899
  %vm2781 = vcmp.eq.f32.partialorder %v2780, 8.507059e+37
  %v2782 = vand.u32 %v899, 2147483648
  %v2783 = vor.u32 1.1754944e-38, %v2782
  %v2784 = vsel %vm2781, %v2783, %v2779
  %v2785 = vmul.f32 1.0, %v2784
  %v2786 = vrcp.pop %v900
  %v2787 = vmul.f32 %v900, %v2786
  %v2788 = vsub.f32 1.0, %v2787
  %v2789 = vmul.f32 %v2786, %v2788
  %v2790 = vadd.f32 %v2786, %v2789
  %vm2791 = vweird.f32 %v900
  %vm2792 = vweird.f32 %v2786
  %vm2793 = vmor %vm2791, %vm2792
  %v2794 = vsel %vm2793, %v2786, %v2790
  %v2795 = vand.u32 2147483647, %v900
  %vm2796 = vcmp.eq.f32.partialorder %v2795, 8.507059e+37
  %v2797 = vand.u32 %v900, 2147483648
  %v2798 = vor.u32 1.1754944e-38, %v2797
  %v2799 = vsel %vm2796, %v2798, %v2794
  %v2800 = vmul.f32 1.0, %v2799
  %v2801 = vrcp.pop %v901
  %v2802 = vmul.f32 %v901, %v2801
  %v2803 = vsub.f32 1.0, %v2802
  %v2804 = vmul.f32 %v2801, %v2803
  %v2805 = vadd.f32 %v2801, %v2804
  %vm2806 = vweird.f32 %v901
  %vm2807 = vweird.f32 %v2801
  %vm2808 = vmor %vm2806, %vm2807
  %v2809 = vsel %vm2808, %v2801, %v2805
  %v2810 = vand.u32 2147483647, %v901
  %vm2811 = vcmp.eq.f32.partialorder %v2810, 8.507059e+37
  %v2812 = vand.u32 %v901, 2147483648
  %v2813 = vor.u32 1.1754944e-38, %v2812
  %v2814 = vsel %vm2811, %v2813, %v2809
  %v2815 = vmul.f32 1.0, %v2814
  %v2816 = vrcp.pop %v902
  %v2817 = vmul.f32 %v902, %v2816
  %v2818 = vsub.f32 1.0, %v2817
  %v2819 = vmul.f32 %v2816, %v2818
  %v2820 = vadd.f32 %v2816, %v2819
  %vm2821 = vweird.f32 %v902
  %vm2822 = vweird.f32 %v2816
  %vm2823 = vmor %vm2821, %vm2822
  %v2824 = vsel %vm2823, %v2816, %v2820
  %v2825 = vand.u32 2147483647, %v902
  %vm2826 = vcmp.eq.f32.partialorder %v2825, 8.507059e+37
  %v2827 = vand.u32 %v902, 2147483648
  %v2828 = vor.u32 1.1754944e-38, %v2827
  %v2829 = vsel %vm2826, %v2828, %v2824
  %v2830 = vmul.f32 1.0, %v2829
  %v2831 = vrcp.pop %v903
  %v2832 = vmul.f32 %v903, %v2831
  %v2833 = vsub.f32 1.0, %v2832
  %v2834 = vmul.f32 %v2831, %v2833
  %v2835 = vadd.f32 %v2831, %v2834
  %vm2836 = vweird.f32 %v903
  %vm2837 = vweird.f32 %v2831
  %vm2838 = vmor %vm2836, %vm2837
  %v2839 = vsel %vm2838, %v2831, %v2835
  %v2840 = vand.u32 2147483647, %v903
  %vm2841 = vcmp.eq.f32.partialorder %v2840, 8.507059e+37
  %v2842 = vand.u32 %v903, 2147483648
  %v2843 = vor.u32 1.1754944e-38, %v2842
  %v2844 = vsel %vm2841, %v2843, %v2839
  %v2845 = vmul.f32 1.0, %v2844
  %v2846 = vrcp.pop %v904
  %v2847 = vmul.f32 %v904, %v2846
  %v2848 = vsub.f32 1.0, %v2847
  %v2849 = vmul.f32 %v2846, %v2848
  %v2850 = vadd.f32 %v2846, %v2849
  %vm2851 = vweird.f32 %v904
  %vm2852 = vweird.f32 %v2846
  %vm2853 = vmor %vm2851, %vm2852
  %v2854 = vsel %vm2853, %v2846, %v2850
  %v2855 = vand.u32 2147483647, %v904
  %vm2856 = vcmp.eq.f32.partialorder %v2855, 8.507059e+37
  %v2857 = vand.u32 %v904, 2147483648
  %v2858 = vor.u32 1.1754944e-38, %v2857
  %v2859 = vsel %vm2856, %v2858, %v2854
  %v2860 = vmul.f32 1.0, %v2859
  %v2861 = vrcp.pop %v905
  %v2862 = vmul.f32 %v905, %v2861
  %v2863 = vsub.f32 1.0, %v2862
  %v2864 = vmul.f32 %v2861, %v2863
  %v2865 = vadd.f32 %v2861, %v2864
  %vm2866 = vweird.f32 %v905
  %vm2867 = vweird.f32 %v2861
  %vm2868 = vmor %vm2866, %vm2867
  %v2869 = vsel %vm2868, %v2861, %v2865
  %v2870 = vand.u32 2147483647, %v905
  %vm2871 = vcmp.eq.f32.partialorder %v2870, 8.507059e+37
  %v2872 = vand.u32 %v905, 2147483648
  %v2873 = vor.u32 1.1754944e-38, %v2872
  %v2874 = vsel %vm2871, %v2873, %v2869
  %v2875 = vmul.f32 1.0, %v2874
  %v2876 = vrcp.pop %v906
  %v2877 = vmul.f32 %v906, %v2876
  %v2878 = vsub.f32 1.0, %v2877
  %v2879 = vmul.f32 %v2876, %v2878
  %v2880 = vadd.f32 %v2876, %v2879
  %vm2881 = vweird.f32 %v906
  %vm2882 = vweird.f32 %v2876
  %vm2883 = vmor %vm2881, %vm2882
  %v2884 = vsel %vm2883, %v2876, %v2880
  %v2885 = vand.u32 2147483647, %v906
  %vm2886 = vcmp.eq.f32.partialorder %v2885, 8.507059e+37
  %v2887 = vand.u32 %v906, 2147483648
  %v2888 = vor.u32 1.1754944e-38, %v2887
  %v2889 = vsel %vm2886, %v2888, %v2884
  %v2890 = vmul.f32 1.0, %v2889
  %v2891 = vrcp.pop %v907
  %v2892 = vmul.f32 %v907, %v2891
  %v2893 = vsub.f32 1.0, %v2892
  %v2894 = vmul.f32 %v2891, %v2893
  %v2895 = vadd.f32 %v2891, %v2894
  %vm2896 = vweird.f32 %v907
  %vm2897 = vweird.f32 %v2891
  %vm2898 = vmor %vm2896, %vm2897
  %v2899 = vsel %vm2898, %v2891, %v2895
  %v2900 = vand.u32 2147483647, %v907
  %vm2901 = vcmp.eq.f32.partialorder %v2900, 8.507059e+37
  %v2902 = vand.u32 %v907, 2147483648
  %v2903 = vor.u32 1.1754944e-38, %v2902
  %v2904 = vsel %vm2901, %v2903, %v2899
  %v2905 = vmul.f32 1.0, %v2904
  %v2906 = vrcp.pop %v908
  %v2907 = vmul.f32 %v908, %v2906
  %v2908 = vsub.f32 1.0, %v2907
  %v2909 = vmul.f32 %v2906, %v2908
  %v2910 = vadd.f32 %v2906, %v2909
  %vm2911 = vweird.f32 %v908
  %vm2912 = vweird.f32 %v2906
  %vm2913 = vmor %vm2911, %vm2912
  %v2914 = vsel %vm2913, %v2906, %v2910
  %v2915 = vand.u32 2147483647, %v908
  %vm2916 = vcmp.eq.f32.partialorder %v2915, 8.507059e+37
  %v2917 = vand.u32 %v908, 2147483648
  %v2918 = vor.u32 1.1754944e-38, %v2917
  %v2919 = vsel %vm2916, %v2918, %v2914
  %v2920 = vmul.f32 1.0, %v2919
  %v2921 = vrcp.pop %v909
  %v2922 = vmul.f32 %v909, %v2921
  %v2923 = vsub.f32 1.0, %v2922
  %v2924 = vmul.f32 %v2921, %v2923
  %v2925 = vadd.f32 %v2921, %v2924
  %vm2926 = vweird.f32 %v909
  %vm2927 = vweird.f32 %v2921
  %vm2928 = vmor %vm2926, %vm2927
  %v2929 = vsel %vm2928, %v2921, %v2925
  %v2930 = vand.u32 2147483647, %v909
  %vm2931 = vcmp.eq.f32.partialorder %v2930, 8.507059e+37
  %v2932 = vand.u32 %v909, 2147483648
  %v2933 = vor.u32 1.1754944e-38, %v2932
  %v2934 = vsel %vm2931, %v2933, %v2929
  %v2935 = vmul.f32 1.0, %v2934
  %v2936 = vrcp.pop %v910
  %v2937 = vmul.f32 %v910, %v2936
  %v2938 = vsub.f32 1.0, %v2937
  %v2939 = vmul.f32 %v2936, %v2938
  %v2940 = vadd.f32 %v2936, %v2939
  %vm2941 = vweird.f32 %v910
  %vm2942 = vweird.f32 %v2936
  %vm2943 = vmor %vm2941, %vm2942
  %v2944 = vsel %vm2943, %v2936, %v2940
  %v2945 = vand.u32 2147483647, %v910
  %vm2946 = vcmp.eq.f32.partialorder %v2945, 8.507059e+37
  %v2947 = vand.u32 %v910, 2147483648
  %v2948 = vor.u32 1.1754944e-38, %v2947
  %v2949 = vsel %vm2946, %v2948, %v2944
  %v2950 = vmul.f32 1.0, %v2949
  %v2951 = vrcp.pop %v911
  %v2952 = vmul.f32 %v911, %v2951
  %v2953 = vsub.f32 1.0, %v2952
  %v2954 = vmul.f32 %v2951, %v2953
  %v2955 = vadd.f32 %v2951, %v2954
  %vm2956 = vweird.f32 %v911
  %vm2957 = vweird.f32 %v2951
  %vm2958 = vmor %vm2956, %vm2957
  %v2959 = vsel %vm2958, %v2951, %v2955
  %v2960 = vand.u32 2147483647, %v911
  %vm2961 = vcmp.eq.f32.partialorder %v2960, 8.507059e+37
  %v2962 = vand.u32 %v911, 2147483648
  %v2963 = vor.u32 1.1754944e-38, %v2962
  %v2964 = vsel %vm2961, %v2963, %v2959
  %v2965 = vmul.f32 1.0, %v2964
  %v2966 = vrcp.pop %v912
  %v2967 = vmul.f32 %v912, %v2966
  %v2968 = vsub.f32 1.0, %v2967
  %v2969 = vmul.f32 %v2966, %v2968
  %v2970 = vadd.f32 %v2966, %v2969
  %vm2971 = vweird.f32 %v912
  %vm2972 = vweird.f32 %v2966
  %vm2973 = vmor %vm2971, %vm2972
  %v2974 = vsel %vm2973, %v2966, %v2970
  %v2975 = vand.u32 2147483647, %v912
  %vm2976 = vcmp.eq.f32.partialorder %v2975, 8.507059e+37
  %v2977 = vand.u32 %v912, 2147483648
  %v2978 = vor.u32 1.1754944e-38, %v2977
  %v2979 = vsel %vm2976, %v2978, %v2974
  %v2980 = vmul.f32 1.0, %v2979
  %v2981 = vrcp.pop %v913
  %v2982 = vmul.f32 %v913, %v2981
  %v2983 = vsub.f32 1.0, %v2982
  %v2984 = vmul.f32 %v2981, %v2983
  %v2985 = vadd.f32 %v2981, %v2984
  %vm2986 = vweird.f32 %v913
  %vm2987 = vweird.f32 %v2981
  %vm2988 = vmor %vm2986, %vm2987
  %v2989 = vsel %vm2988, %v2981, %v2985
  %v2990 = vand.u32 2147483647, %v913
  %vm2991 = vcmp.eq.f32.partialorder %v2990, 8.507059e+37
  %v2992 = vand.u32 %v913, 2147483648
  %v2993 = vor.u32 1.1754944e-38, %v2992
  %v2994 = vsel %vm2991, %v2993, %v2989
  %v2995 = vmul.f32 1.0, %v2994
  %v2996 = vrcp.pop %v914
  %v2997 = vmul.f32 %v914, %v2996
  %v2998 = vsub.f32 1.0, %v2997
  %v2999 = vmul.f32 %v2996, %v2998
  %v3000 = vadd.f32 %v2996, %v2999
  %vm3001 = vweird.f32 %v914
  %vm3002 = vweird.f32 %v2996
  %vm3003 = vmor %vm3001, %vm3002
  %v3004 = vsel %vm3003, %v2996, %v3000
  %v3005 = vand.u32 2147483647, %v914
  %vm3006 = vcmp.eq.f32.partialorder %v3005, 8.507059e+37
  %v3007 = vand.u32 %v914, 2147483648
  %v3008 = vor.u32 1.1754944e-38, %v3007
  %v3009 = vsel %vm3006, %v3008, %v3004
  %v3010 = vmul.f32 1.0, %v3009
  %v3011 = vrcp.pop %v915
  %v3012 = vmul.f32 %v915, %v3011
  %v3013 = vsub.f32 1.0, %v3012
  %v3014 = vmul.f32 %v3011, %v3013
  %v3015 = vadd.f32 %v3011, %v3014
  %vm3016 = vweird.f32 %v915
  %vm3017 = vweird.f32 %v3011
  %vm3018 = vmor %vm3016, %vm3017
  %v3019 = vsel %vm3018, %v3011, %v3015
  %v3020 = vand.u32 2147483647, %v915
  %vm3021 = vcmp.eq.f32.partialorder %v3020, 8.507059e+37
  %v3022 = vand.u32 %v915, 2147483648
  %v3023 = vor.u32 1.1754944e-38, %v3022
  %v3024 = vsel %vm3021, %v3023, %v3019
  %v3025 = vmul.f32 1.0, %v3024
  %v3026 = vrcp.pop %v916
  %v3027 = vmul.f32 %v916, %v3026
  %v3028 = vsub.f32 1.0, %v3027
  %v3029 = vmul.f32 %v3026, %v3028
  %v3030 = vadd.f32 %v3026, %v3029
  %vm3031 = vweird.f32 %v916
  %vm3032 = vweird.f32 %v3026
  %vm3033 = vmor %vm3031, %vm3032
  %v3034 = vsel %vm3033, %v3026, %v3030
  %v3035 = vand.u32 2147483647, %v916
  %vm3036 = vcmp.eq.f32.partialorder %v3035, 8.507059e+37
  %v3037 = vand.u32 %v916, 2147483648
  %v3038 = vor.u32 1.1754944e-38, %v3037
  %v3039 = vsel %vm3036, %v3038, %v3034
  %v3040 = vmul.f32 1.0, %v3039
  %v3041 = vrcp.pop %v917
  %v3042 = vmul.f32 %v917, %v3041
  %v3043 = vsub.f32 1.0, %v3042
  %v3044 = vmul.f32 %v3041, %v3043
  %v3045 = vadd.f32 %v3041, %v3044
  %vm3046 = vweird.f32 %v917
  %vm3047 = vweird.f32 %v3041
  %vm3048 = vmor %vm3046, %vm3047
  %v3049 = vsel %vm3048, %v3041, %v3045
  %v3050 = vand.u32 2147483647, %v917
  %vm3051 = vcmp.eq.f32.partialorder %v3050, 8.507059e+37
  %v3052 = vand.u32 %v917, 2147483648
  %v3053 = vor.u32 1.1754944e-38, %v3052
  %v3054 = vsel %vm3051, %v3053, %v3049
  %v3055 = vmul.f32 1.0, %v3054
  %v3056 = vrcp.pop %v918
  %v3057 = vmul.f32 %v918, %v3056
  %v3058 = vsub.f32 1.0, %v3057
  %v3059 = vmul.f32 %v3056, %v3058
  %v3060 = vadd.f32 %v3056, %v3059
  %vm3061 = vweird.f32 %v918
  %vm3062 = vweird.f32 %v3056
  %vm3063 = vmor %vm3061, %vm3062
  %v3064 = vsel %vm3063, %v3056, %v3060
  %v3065 = vand.u32 2147483647, %v918
  %vm3066 = vcmp.eq.f32.partialorder %v3065, 8.507059e+37
  %v3067 = vand.u32 %v918, 2147483648
  %v3068 = vor.u32 1.1754944e-38, %v3067
  %v3069 = vsel %vm3066, %v3068, %v3064
  %v3070 = vmul.f32 1.0, %v3069
  %v3071 = vrcp.pop %v919
  %v3072 = vmul.f32 %v919, %v3071
  %v3073 = vsub.f32 1.0, %v3072
  %v3074 = vmul.f32 %v3071, %v3073
  %v3075 = vadd.f32 %v3071, %v3074
  %vm3076 = vweird.f32 %v919
  %vm3077 = vweird.f32 %v3071
  %vm3078 = vmor %vm3076, %vm3077
  %v3079 = vsel %vm3078, %v3071, %v3075
  %v3080 = vand.u32 2147483647, %v919
  %vm3081 = vcmp.eq.f32.partialorder %v3080, 8.507059e+37
  %v3082 = vand.u32 %v919, 2147483648
  %v3083 = vor.u32 1.1754944e-38, %v3082
  %v3084 = vsel %vm3081, %v3083, %v3079
  %v3085 = vmul.f32 1.0, %v3084
  %v3086 = vrcp.pop %v920
  %v3087 = vmul.f32 %v920, %v3086
  %v3088 = vsub.f32 1.0, %v3087
  %v3089 = vmul.f32 %v3086, %v3088
  %v3090 = vadd.f32 %v3086, %v3089
  %vm3091 = vweird.f32 %v920
  %vm3092 = vweird.f32 %v3086
  %vm3093 = vmor %vm3091, %vm3092
  %v3094 = vsel %vm3093, %v3086, %v3090
  %v3095 = vand.u32 2147483647, %v920
  %vm3096 = vcmp.eq.f32.partialorder %v3095, 8.507059e+37
  %v3097 = vand.u32 %v920, 2147483648
  %v3098 = vor.u32 1.1754944e-38, %v3097
  %v3099 = vsel %vm3096, %v3098, %v3094
  %v3100 = vmul.f32 1.0, %v3099
  %v3101 = vrcp.pop %v921
  %v3102 = vmul.f32 %v921, %v3101
  %v3103 = vsub.f32 1.0, %v3102
  %v3104 = vmul.f32 %v3101, %v3103
  %v3105 = vadd.f32 %v3101, %v3104
  %vm3106 = vweird.f32 %v921
  %vm3107 = vweird.f32 %v3101
  %vm3108 = vmor %vm3106, %vm3107
  %v3109 = vsel %vm3108, %v3101, %v3105
  %v3110 = vand.u32 2147483647, %v921
  %vm3111 = vcmp.eq.f32.partialorder %v3110, 8.507059e+37
  %v3112 = vand.u32 %v921, 2147483648
  %v3113 = vor.u32 1.1754944e-38, %v3112
  %v3114 = vsel %vm3111, %v3113, %v3109
  %v3115 = vmul.f32 1.0, %v3114
  %v3116 = vrcp.pop %v922
  %v3117 = vmul.f32 %v922, %v3116
  %v3118 = vsub.f32 1.0, %v3117
  %v3119 = vmul.f32 %v3116, %v3118
  %v3120 = vadd.f32 %v3116, %v3119
  %vm3121 = vweird.f32 %v922
  %vm3122 = vweird.f32 %v3116
  %vm3123 = vmor %vm3121, %vm3122
  %v3124 = vsel %vm3123, %v3116, %v3120
  %v3125 = vand.u32 2147483647, %v922
  %vm3126 = vcmp.eq.f32.partialorder %v3125, 8.507059e+37
  %v3127 = vand.u32 %v922, 2147483648
  %v3128 = vor.u32 1.1754944e-38, %v3127
  %v3129 = vsel %vm3126, %v3128, %v3124
  %v3130 = vmul.f32 1.0, %v3129
  %v3131 = vrcp.pop %v923
  %v3132 = vmul.f32 %v923, %v3131
  %v3133 = vsub.f32 1.0, %v3132
  %v3134 = vmul.f32 %v3131, %v3133
  %v3135 = vadd.f32 %v3131, %v3134
  %vm3136 = vweird.f32 %v923
  %vm3137 = vweird.f32 %v3131
  %vm3138 = vmor %vm3136, %vm3137
  %v3139 = vsel %vm3138, %v3131, %v3135
  %v3140 = vand.u32 2147483647, %v923
  %vm3141 = vcmp.eq.f32.partialorder %v3140, 8.507059e+37
  %v3142 = vand.u32 %v923, 2147483648
  %v3143 = vor.u32 1.1754944e-38, %v3142
  %v3144 = vsel %vm3141, %v3143, %v3139
  %v3145 = vmul.f32 1.0, %v3144
  %v3146 = vrcp.pop %v924
  %v3147 = vmul.f32 %v924, %v3146
  %v3148 = vsub.f32 1.0, %v3147
  %v3149 = vmul.f32 %v3146, %v3148
  %v3150 = vadd.f32 %v3146, %v3149
  %vm3151 = vweird.f32 %v924
  %vm3152 = vweird.f32 %v3146
  %vm3153 = vmor %vm3151, %vm3152
  %v3154 = vsel %vm3153, %v3146, %v3150
  %v3155 = vand.u32 2147483647, %v924
  %vm3156 = vcmp.eq.f32.partialorder %v3155, 8.507059e+37
  %v3157 = vand.u32 %v924, 2147483648
  %v3158 = vor.u32 1.1754944e-38, %v3157
  %v3159 = vsel %vm3156, %v3158, %v3154
  %v3160 = vmul.f32 1.0, %v3159
  %v3161 = vrcp.pop %v925
  %v3162 = vmul.f32 %v925, %v3161
  %v3163 = vsub.f32 1.0, %v3162
  %v3164 = vmul.f32 %v3161, %v3163
  %v3165 = vadd.f32 %v3161, %v3164
  %vm3166 = vweird.f32 %v925
  %vm3167 = vweird.f32 %v3161
  %vm3168 = vmor %vm3166, %vm3167
  %v3169 = vsel %vm3168, %v3161, %v3165
  %v3170 = vand.u32 2147483647, %v925
  %vm3171 = vcmp.eq.f32.partialorder %v3170, 8.507059e+37
  %v3172 = vand.u32 %v925, 2147483648
  %v3173 = vor.u32 1.1754944e-38, %v3172
  %v3174 = vsel %vm3171, %v3173, %v3169
  %v3175 = vmul.f32 1.0, %v3174
  %v3176 = vrcp.pop %v926
  %v3177 = vmul.f32 %v926, %v3176
  %v3178 = vsub.f32 1.0, %v3177
  %v3179 = vmul.f32 %v3176, %v3178
  %v3180 = vadd.f32 %v3176, %v3179
  %vm3181 = vweird.f32 %v926
  %vm3182 = vweird.f32 %v3176
  %vm3183 = vmor %vm3181, %vm3182
  %v3184 = vsel %vm3183, %v3176, %v3180
  %v3185 = vand.u32 2147483647, %v926
  %vm3186 = vcmp.eq.f32.partialorder %v3185, 8.507059e+37
  %v3187 = vand.u32 %v926, 2147483648
  %v3188 = vor.u32 1.1754944e-38, %v3187
  %v3189 = vsel %vm3186, %v3188, %v3184
  %v3190 = vmul.f32 1.0, %v3189
  %v3191 = vrcp.pop %v927
  %v3192 = vmul.f32 %v927, %v3191
  %v3193 = vsub.f32 1.0, %v3192
  %v3194 = vmul.f32 %v3191, %v3193
  %v3195 = vadd.f32 %v3191, %v3194
  %vm3196 = vweird.f32 %v927
  %vm3197 = vweird.f32 %v3191
  %vm3198 = vmor %vm3196, %vm3197
  %v3199 = vsel %vm3198, %v3191, %v3195
  %v3200 = vand.u32 2147483647, %v927
  %vm3201 = vcmp.eq.f32.partialorder %v3200, 8.507059e+37
  %v3202 = vand.u32 %v927, 2147483648
  %v3203 = vor.u32 1.1754944e-38, %v3202
  %v3204 = vsel %vm3201, %v3203, %v3199
  %v3205 = vmul.f32 1.0, %v3204
  %v3206 = vrcp.pop %v928
  %v3207 = vmul.f32 %v928, %v3206
  %v3208 = vsub.f32 1.0, %v3207
  %v3209 = vmul.f32 %v3206, %v3208
  %v3210 = vadd.f32 %v3206, %v3209
  %vm3211 = vweird.f32 %v928
  %vm3212 = vweird.f32 %v3206
  %vm3213 = vmor %vm3211, %vm3212
  %v3214 = vsel %vm3213, %v3206, %v3210
  %v3215 = vand.u32 2147483647, %v928
  %vm3216 = vcmp.eq.f32.partialorder %v3215, 8.507059e+37
  %v3217 = vand.u32 %v928, 2147483648
  %v3218 = vor.u32 1.1754944e-38, %v3217
  %v3219 = vsel %vm3216, %v3218, %v3214
  %v3220 = vmul.f32 1.0, %v3219
  %v3221 = vrcp.pop %v929
  %v3222 = vmul.f32 %v929, %v3221
  %v3223 = vsub.f32 1.0, %v3222
  %v3224 = vmul.f32 %v3221, %v3223
  %v3225 = vadd.f32 %v3221, %v3224
  %vm3226 = vweird.f32 %v929
  %vm3227 = vweird.f32 %v3221
  %vm3228 = vmor %vm3226, %vm3227
  %v3229 = vsel %vm3228, %v3221, %v3225
  %v3230 = vand.u32 2147483647, %v929
  %vm3231 = vcmp.eq.f32.partialorder %v3230, 8.507059e+37
  %v3232 = vand.u32 %v929, 2147483648
  %v3233 = vor.u32 1.1754944e-38, %v3232
  %v3234 = vsel %vm3231, %v3233, %v3229
  %v3235 = vmul.f32 1.0, %v3234
  %v3236 = vrcp.pop %v930
  %v3237 = vmul.f32 %v930, %v3236
  %v3238 = vsub.f32 1.0, %v3237
  %v3239 = vmul.f32 %v3236, %v3238
  %v3240 = vadd.f32 %v3236, %v3239
  %vm3241 = vweird.f32 %v930
  %vm3242 = vweird.f32 %v3236
  %vm3243 = vmor %vm3241, %vm3242
  %v3244 = vsel %vm3243, %v3236, %v3240
  %v3245 = vand.u32 2147483647, %v930
  %vm3246 = vcmp.eq.f32.partialorder %v3245, 8.507059e+37
  %v3247 = vand.u32 %v930, 2147483648
  %v3248 = vor.u32 1.1754944e-38, %v3247
  %v3249 = vsel %vm3246, %v3248, %v3244
  %v3250 = vmul.f32 1.0, %v3249
  %v3251 = vrcp.pop %v931
  %v3252 = vmul.f32 %v931, %v3251
  %v3253 = vsub.f32 1.0, %v3252
  %v3254 = vmul.f32 %v3251, %v3253
  %v3255 = vadd.f32 %v3251, %v3254
  %vm3256 = vweird.f32 %v931
  %vm3257 = vweird.f32 %v3251
  %vm3258 = vmor %vm3256, %vm3257
  %v3259 = vsel %vm3258, %v3251, %v3255
  %v3260 = vand.u32 2147483647, %v931
  %vm3261 = vcmp.eq.f32.partialorder %v3260, 8.507059e+37
  %v3262 = vand.u32 %v931, 2147483648
  %v3263 = vor.u32 1.1754944e-38, %v3262
  %v3264 = vsel %vm3261, %v3263, %v3259
  %v3265 = vmul.f32 1.0, %v3264
  %v3266 = vrcp.pop %v932
  %v3267 = vmul.f32 %v932, %v3266
  %v3268 = vsub.f32 1.0, %v3267
  %v3269 = vmul.f32 %v3266, %v3268
  %v3270 = vadd.f32 %v3266, %v3269
  %vm3271 = vweird.f32 %v932
  %vm3272 = vweird.f32 %v3266
  %vm3273 = vmor %vm3271, %vm3272
  %v3274 = vsel %vm3273, %v3266, %v3270
  %v3275 = vand.u32 2147483647, %v932
  %vm3276 = vcmp.eq.f32.partialorder %v3275, 8.507059e+37
  %v3277 = vand.u32 %v932, 2147483648
  %v3278 = vor.u32 1.1754944e-38, %v3277
  %v3279 = vsel %vm3276, %v3278, %v3274
  %v3280 = vmul.f32 1.0, %v3279
  %v3281 = vrcp.pop %v933
  %v3282 = vmul.f32 %v933, %v3281
  %v3283 = vsub.f32 1.0, %v3282
  %v3284 = vmul.f32 %v3281, %v3283
  %v3285 = vadd.f32 %v3281, %v3284
  %vm3286 = vweird.f32 %v933
  %vm3287 = vweird.f32 %v3281
  %vm3288 = vmor %vm3286, %vm3287
  %v3289 = vsel %vm3288, %v3281, %v3285
  %v3290 = vand.u32 2147483647, %v933
  %vm3291 = vcmp.eq.f32.partialorder %v3290, 8.507059e+37
  %v3292 = vand.u32 %v933, 2147483648
  %v3293 = vor.u32 1.1754944e-38, %v3292
  %v3294 = vsel %vm3291, %v3293, %v3289
  %v3295 = vmul.f32 1.0, %v3294
  %v3296 = vrcp.pop %v934
  %v3297 = vmul.f32 %v934, %v3296
  %v3298 = vsub.f32 1.0, %v3297
  %v3299 = vmul.f32 %v3296, %v3298
  %v3300 = vadd.f32 %v3296, %v3299
  %vm3301 = vweird.f32 %v934
  %vm3302 = vweird.f32 %v3296
  %vm3303 = vmor %vm3301, %vm3302
  %v3304 = vsel %vm3303, %v3296, %v3300
  %v3305 = vand.u32 2147483647, %v934
  %vm3306 = vcmp.eq.f32.partialorder %v3305, 8.507059e+37
  %v3307 = vand.u32 %v934, 2147483648
  %v3308 = vor.u32 1.1754944e-38, %v3307
  %v3309 = vsel %vm3306, %v3308, %v3304
  %v3310 = vmul.f32 1.0, %v3309
  %v3311 = vrcp.pop %v935
  %v3312 = vmul.f32 %v935, %v3311
  %v3313 = vsub.f32 1.0, %v3312
  %v3314 = vmul.f32 %v3311, %v3313
  %v3315 = vadd.f32 %v3311, %v3314
  %vm3316 = vweird.f32 %v935
  %vm3317 = vweird.f32 %v3311
  %vm3318 = vmor %vm3316, %vm3317
  %v3319 = vsel %vm3318, %v3311, %v3315
  %v3320 = vand.u32 2147483647, %v935
  %vm3321 = vcmp.eq.f32.partialorder %v3320, 8.507059e+37
  %v3322 = vand.u32 %v935, 2147483648
  %v3323 = vor.u32 1.1754944e-38, %v3322
  %v3324 = vsel %vm3321, %v3323, %v3319
  %v3325 = vmul.f32 1.0, %v3324
  %v3326 = vrcp.pop %v936
  %v3327 = vmul.f32 %v936, %v3326
  %v3328 = vsub.f32 1.0, %v3327
  %v3329 = vmul.f32 %v3326, %v3328
  %v3330 = vadd.f32 %v3326, %v3329
  %vm3331 = vweird.f32 %v936
  %vm3332 = vweird.f32 %v3326
  %vm3333 = vmor %vm3331, %vm3332
  %v3334 = vsel %vm3333, %v3326, %v3330
  %v3335 = vand.u32 2147483647, %v936
  %vm3336 = vcmp.eq.f32.partialorder %v3335, 8.507059e+37
  %v3337 = vand.u32 %v936, 2147483648
  %v3338 = vor.u32 1.1754944e-38, %v3337
  %v3339 = vsel %vm3336, %v3338, %v3334
  %v3340 = vmul.f32 1.0, %v3339
  %v3341 = vrcp.pop %v937
  %v3342 = vmul.f32 %v937, %v3341
  %v3343 = vsub.f32 1.0, %v3342
  %v3344 = vmul.f32 %v3341, %v3343
  %v3345 = vadd.f32 %v3341, %v3344
  %vm3346 = vweird.f32 %v937
  %vm3347 = vweird.f32 %v3341
  %vm3348 = vmor %vm3346, %vm3347
  %v3349 = vsel %vm3348, %v3341, %v3345
  %v3350 = vand.u32 2147483647, %v937
  %vm3351 = vcmp.eq.f32.partialorder %v3350, 8.507059e+37
  %v3352 = vand.u32 %v937, 2147483648
  %v3353 = vor.u32 1.1754944e-38, %v3352
  %v3354 = vsel %vm3351, %v3353, %v3349
  %v3355 = vmul.f32 1.0, %v3354
  %v3356 = vrcp.pop %v938
  %v3357 = vmul.f32 %v938, %v3356
  %v3358 = vsub.f32 1.0, %v3357
  %v3359 = vmul.f32 %v3356, %v3358
  %v3360 = vadd.f32 %v3356, %v3359
  %vm3361 = vweird.f32 %v938
  %vm3362 = vweird.f32 %v3356
  %vm3363 = vmor %vm3361, %vm3362
  %v3364 = vsel %vm3363, %v3356, %v3360
  %v3365 = vand.u32 2147483647, %v938
  %vm3366 = vcmp.eq.f32.partialorder %v3365, 8.507059e+37
  %v3367 = vand.u32 %v938, 2147483648
  %v3368 = vor.u32 1.1754944e-38, %v3367
  %v3369 = vsel %vm3366, %v3368, %v3364
  %v3370 = vmul.f32 1.0, %v3369
  %v3371 = vrcp.pop %v939
  %v3372 = vmul.f32 %v939, %v3371
  %v3373 = vsub.f32 1.0, %v3372
  %v3374 = vmul.f32 %v3371, %v3373
  %v3375 = vadd.f32 %v3371, %v3374
  %vm3376 = vweird.f32 %v939
  %vm3377 = vweird.f32 %v3371
  %vm3378 = vmor %vm3376, %vm3377
  %v3379 = vsel %vm3378, %v3371, %v3375
  %v3380 = vand.u32 2147483647, %v939
  %vm3381 = vcmp.eq.f32.partialorder %v3380, 8.507059e+37
  %v3382 = vand.u32 %v939, 2147483648
  %v3383 = vor.u32 1.1754944e-38, %v3382
  %v3384 = vsel %vm3381, %v3383, %v3379
  %v3385 = vmul.f32 1.0, %v3384
  %v3386 = vrcp.pop %v940
  %v3387 = vmul.f32 %v940, %v3386
  %v3388 = vsub.f32 1.0, %v3387
  %v3389 = vmul.f32 %v3386, %v3388
  %v3390 = vadd.f32 %v3386, %v3389
  %vm3391 = vweird.f32 %v940
  %vm3392 = vweird.f32 %v3386
  %vm3393 = vmor %vm3391, %vm3392
  %v3394 = vsel %vm3393, %v3386, %v3390
  %v3395 = vand.u32 2147483647, %v940
  %vm3396 = vcmp.eq.f32.partialorder %v3395, 8.507059e+37
  %v3397 = vand.u32 %v940, 2147483648
  %v3398 = vor.u32 1.1754944e-38, %v3397
  %v3399 = vsel %vm3396, %v3398, %v3394
  %v3400 = vmul.f32 1.0, %v3399
  %v3401 = vrcp.pop %v941
  %v3402 = vmul.f32 %v941, %v3401
  %v3403 = vsub.f32 1.0, %v3402
  %v3404 = vmul.f32 %v3401, %v3403
  %v3405 = vadd.f32 %v3401, %v3404
  %vm3406 = vweird.f32 %v941
  %vm3407 = vweird.f32 %v3401
  %vm3408 = vmor %vm3406, %vm3407
  %v3409 = vsel %vm3408, %v3401, %v3405
  %v3410 = vand.u32 2147483647, %v941
  %vm3411 = vcmp.eq.f32.partialorder %v3410, 8.507059e+37
  %v3412 = vand.u32 %v941, 2147483648
  %v3413 = vor.u32 1.1754944e-38, %v3412
  %v3414 = vsel %vm3411, %v3413, %v3409
  %v3415 = vmul.f32 1.0, %v3414
  %v3416 = vrcp.pop %v942
  %v3417 = vmul.f32 %v942, %v3416
  %v3418 = vsub.f32 1.0, %v3417
  %v3419 = vmul.f32 %v3416, %v3418
  %v3420 = vadd.f32 %v3416, %v3419
  %vm3421 = vweird.f32 %v942
  %vm3422 = vweird.f32 %v3416
  %vm3423 = vmor %vm3421, %vm3422
  %v3424 = vsel %vm3423, %v3416, %v3420
  %v3425 = vand.u32 2147483647, %v942
  %vm3426 = vcmp.eq.f32.partialorder %v3425, 8.507059e+37
  %v3427 = vand.u32 %v942, 2147483648
  %v3428 = vor.u32 1.1754944e-38, %v3427
  %v3429 = vsel %vm3426, %v3428, %v3424
  %v3430 = vmul.f32 1.0, %v3429
  %v3431 = vrcp.pop %v943
  %v3432 = vmul.f32 %v943, %v3431
  %v3433 = vsub.f32 1.0, %v3432
  %v3434 = vmul.f32 %v3431, %v3433
  %v3435 = vadd.f32 %v3431, %v3434
  %vm3436 = vweird.f32 %v943
  %vm3437 = vweird.f32 %v3431
  %vm3438 = vmor %vm3436, %vm3437
  %v3439 = vsel %vm3438, %v3431, %v3435
  %v3440 = vand.u32 2147483647, %v943
  %vm3441 = vcmp.eq.f32.partialorder %v3440, 8.507059e+37
  %v3442 = vand.u32 %v943, 2147483648
  %v3443 = vor.u32 1.1754944e-38, %v3442
  %v3444 = vsel %vm3441, %v3443, %v3439
  %v3445 = vmul.f32 1.0, %v3444
  %v3446 = vrcp.pop %v944
  %v3447 = vmul.f32 %v944, %v3446
  %v3448 = vsub.f32 1.0, %v3447
  %v3449 = vmul.f32 %v3446, %v3448
  %v3450 = vadd.f32 %v3446, %v3449
  %vm3451 = vweird.f32 %v944
  %vm3452 = vweird.f32 %v3446
  %vm3453 = vmor %vm3451, %vm3452
  %v3454 = vsel %vm3453, %v3446, %v3450
  %v3455 = vand.u32 2147483647, %v944
  %vm3456 = vcmp.eq.f32.partialorder %v3455, 8.507059e+37
  %v3457 = vand.u32 %v944, 2147483648
  %v3458 = vor.u32 1.1754944e-38, %v3457
  %v3459 = vsel %vm3456, %v3458, %v3454
  %v3460 = vmul.f32 1.0, %v3459
  %v3461 = vrcp.pop %v945
  %v3462 = vmul.f32 %v945, %v3461
  %v3463 = vsub.f32 1.0, %v3462
  %v3464 = vmul.f32 %v3461, %v3463
  %v3465 = vadd.f32 %v3461, %v3464
  %vm3466 = vweird.f32 %v945
  %vm3467 = vweird.f32 %v3461
  %vm3468 = vmor %vm3466, %vm3467
  %v3469 = vsel %vm3468, %v3461, %v3465
  %v3470 = vand.u32 2147483647, %v945
  %vm3471 = vcmp.eq.f32.partialorder %v3470, 8.507059e+37
  %v3472 = vand.u32 %v945, 2147483648
  %v3473 = vor.u32 1.1754944e-38, %v3472
  %v3474 = vsel %vm3471, %v3473, %v3469
  %v3475 = vmul.f32 1.0, %v3474
  %v3476 = vrcp.pop %v946
  %v3477 = vmul.f32 %v946, %v3476
  %v3478 = vsub.f32 1.0, %v3477
  %v3479 = vmul.f32 %v3476, %v3478
  %v3480 = vadd.f32 %v3476, %v3479
  %vm3481 = vweird.f32 %v946
  %vm3482 = vweird.f32 %v3476
  %vm3483 = vmor %vm3481, %vm3482
  %v3484 = vsel %vm3483, %v3476, %v3480
  %v3485 = vand.u32 2147483647, %v946
  %vm3486 = vcmp.eq.f32.partialorder %v3485, 8.507059e+37
  %v3487 = vand.u32 %v946, 2147483648
  %v3488 = vor.u32 1.1754944e-38, %v3487
  %v3489 = vsel %vm3486, %v3488, %v3484
  %v3490 = vmul.f32 1.0, %v3489
  %v3491 = vrcp.pop %v947
  %v3492 = vmul.f32 %v947, %v3491
  %v3493 = vsub.f32 1.0, %v3492
  %v3494 = vmul.f32 %v3491, %v3493
  %v3495 = vadd.f32 %v3491, %v3494
  %vm3496 = vweird.f32 %v947
  %vm3497 = vweird.f32 %v3491
  %vm3498 = vmor %vm3496, %vm3497
  %v3499 = vsel %vm3498, %v3491, %v3495
  %v3500 = vand.u32 2147483647, %v947
  %vm3501 = vcmp.eq.f32.partialorder %v3500, 8.507059e+37
  %v3502 = vand.u32 %v947, 2147483648
  %v3503 = vor.u32 1.1754944e-38, %v3502
  %v3504 = vsel %vm3501, %v3503, %v3499
  %v3505 = vmul.f32 1.0, %v3504
  %v3506 = vrcp.pop %v948
  %v3507 = vmul.f32 %v948, %v3506
  %v3508 = vsub.f32 1.0, %v3507
  %v3509 = vmul.f32 %v3506, %v3508
  %v3510 = vadd.f32 %v3506, %v3509
  %vm3511 = vweird.f32 %v948
  %vm3512 = vweird.f32 %v3506
  %vm3513 = vmor %vm3511, %vm3512
  %v3514 = vsel %vm3513, %v3506, %v3510
  %v3515 = vand.u32 2147483647, %v948
  %vm3516 = vcmp.eq.f32.partialorder %v3515, 8.507059e+37
  %v3517 = vand.u32 %v948, 2147483648
  %v3518 = vor.u32 1.1754944e-38, %v3517
  %v3519 = vsel %vm3516, %v3518, %v3514
  %v3520 = vmul.f32 1.0, %v3519
  %v3521 = vrcp.pop %v949
  %v3522 = vmul.f32 %v949, %v3521
  %v3523 = vsub.f32 1.0, %v3522
  %v3524 = vmul.f32 %v3521, %v3523
  %v3525 = vadd.f32 %v3521, %v3524
  %vm3526 = vweird.f32 %v949
  %vm3527 = vweird.f32 %v3521
  %vm3528 = vmor %vm3526, %vm3527
  %v3529 = vsel %vm3528, %v3521, %v3525
  %v3530 = vand.u32 2147483647, %v949
  %vm3531 = vcmp.eq.f32.partialorder %v3530, 8.507059e+37
  %v3532 = vand.u32 %v949, 2147483648
  %v3533 = vor.u32 1.1754944e-38, %v3532
  %v3534 = vsel %vm3531, %v3533, %v3529
  %v3535 = vmul.f32 1.0, %v3534
  %v3536 = vrcp.pop %v950
  %v3537 = vmul.f32 %v950, %v3536
  %v3538 = vsub.f32 1.0, %v3537
  %v3539 = vmul.f32 %v3536, %v3538
  %v3540 = vadd.f32 %v3536, %v3539
  %vm3541 = vweird.f32 %v950
  %vm3542 = vweird.f32 %v3536
  %vm3543 = vmor %vm3541, %vm3542
  %v3544 = vsel %vm3543, %v3536, %v3540
  %v3545 = vand.u32 2147483647, %v950
  %vm3546 = vcmp.eq.f32.partialorder %v3545, 8.507059e+37
  %v3547 = vand.u32 %v950, 2147483648
  %v3548 = vor.u32 1.1754944e-38, %v3547
  %v3549 = vsel %vm3546, %v3548, %v3544
  %v3550 = vmul.f32 1.0, %v3549
  %v3551 = vrcp.pop %v951
  %v3552 = vmul.f32 %v951, %v3551
  %v3553 = vsub.f32 1.0, %v3552
  %v3554 = vmul.f32 %v3551, %v3553
  %v3555 = vadd.f32 %v3551, %v3554
  %vm3556 = vweird.f32 %v951
  %vm3557 = vweird.f32 %v3551
  %vm3558 = vmor %vm3556, %vm3557
  %v3559 = vsel %vm3558, %v3551, %v3555
  %v3560 = vand.u32 2147483647, %v951
  %vm3561 = vcmp.eq.f32.partialorder %v3560, 8.507059e+37
  %v3562 = vand.u32 %v951, 2147483648
  %v3563 = vor.u32 1.1754944e-38, %v3562
  %v3564 = vsel %vm3561, %v3563, %v3559
  %v3565 = vmul.f32 1.0, %v3564
  %v3566 = vrcp.pop %v952
  %v3567 = vmul.f32 %v952, %v3566
  %v3568 = vsub.f32 1.0, %v3567
  %v3569 = vmul.f32 %v3566, %v3568
  %v3570 = vadd.f32 %v3566, %v3569
  %vm3571 = vweird.f32 %v952
  %vm3572 = vweird.f32 %v3566
  %vm3573 = vmor %vm3571, %vm3572
  %v3574 = vsel %vm3573, %v3566, %v3570
  %v3575 = vand.u32 2147483647, %v952
  %vm3576 = vcmp.eq.f32.partialorder %v3575, 8.507059e+37
  %v3577 = vand.u32 %v952, 2147483648
  %v3578 = vor.u32 1.1754944e-38, %v3577
  %v3579 = vsel %vm3576, %v3578, %v3574
  %v3580 = vmul.f32 1.0, %v3579
  %v3581 = vrcp.pop %v953
  %v3582 = vmul.f32 %v953, %v3581
  %v3583 = vsub.f32 1.0, %v3582
  %v3584 = vmul.f32 %v3581, %v3583
  %v3585 = vadd.f32 %v3581, %v3584
  %vm3586 = vweird.f32 %v953
  %vm3587 = vweird.f32 %v3581
  %vm3588 = vmor %vm3586, %vm3587
  %v3589 = vsel %vm3588, %v3581, %v3585
  %v3590 = vand.u32 2147483647, %v953
  %vm3591 = vcmp.eq.f32.partialorder %v3590, 8.507059e+37
  %v3592 = vand.u32 %v953, 2147483648
  %v3593 = vor.u32 1.1754944e-38, %v3592
  %v3594 = vsel %vm3591, %v3593, %v3589
  %v3595 = vmul.f32 1.0, %v3594
  %v3596 = vrcp.pop %v954
  %v3597 = vmul.f32 %v954, %v3596
  %v3598 = vsub.f32 1.0, %v3597
  %v3599 = vmul.f32 %v3596, %v3598
  %v3600 = vadd.f32 %v3596, %v3599
  %vm3601 = vweird.f32 %v954
  %vm3602 = vweird.f32 %v3596
  %vm3603 = vmor %vm3601, %vm3602
  %v3604 = vsel %vm3603, %v3596, %v3600
  %v3605 = vand.u32 2147483647, %v954
  %vm3606 = vcmp.eq.f32.partialorder %v3605, 8.507059e+37
  %v3607 = vand.u32 %v954, 2147483648
  %v3608 = vor.u32 1.1754944e-38, %v3607
  %v3609 = vsel %vm3606, %v3608, %v3604
  %v3610 = vmul.f32 1.0, %v3609
  %v3611 = vrcp.pop %v955
  %v3612 = vmul.f32 %v955, %v3611
  %v3613 = vsub.f32 1.0, %v3612
  %v3614 = vmul.f32 %v3611, %v3613
  %v3615 = vadd.f32 %v3611, %v3614
  %vm3616 = vweird.f32 %v955
  %vm3617 = vweird.f32 %v3611
  %vm3618 = vmor %vm3616, %vm3617
  %v3619 = vsel %vm3618, %v3611, %v3615
  %v3620 = vand.u32 2147483647, %v955
  %vm3621 = vcmp.eq.f32.partialorder %v3620, 8.507059e+37
  %v3622 = vand.u32 %v955, 2147483648
  %v3623 = vor.u32 1.1754944e-38, %v3622
  %v3624 = vsel %vm3621, %v3623, %v3619
  %v3625 = vmul.f32 1.0, %v3624
  %v3626 = vrcp.pop %v956
  %v3627 = vmul.f32 %v956, %v3626
  %v3628 = vsub.f32 1.0, %v3627
  %v3629 = vmul.f32 %v3626, %v3628
  %v3630 = vadd.f32 %v3626, %v3629
  %vm3631 = vweird.f32 %v956
  %vm3632 = vweird.f32 %v3626
  %vm3633 = vmor %vm3631, %vm3632
  %v3634 = vsel %vm3633, %v3626, %v3630
  %v3635 = vand.u32 2147483647, %v956
  %vm3636 = vcmp.eq.f32.partialorder %v3635, 8.507059e+37
  %v3637 = vand.u32 %v956, 2147483648
  %v3638 = vor.u32 1.1754944e-38, %v3637
  %v3639 = vsel %vm3636, %v3638, %v3634
  %v3640 = vmul.f32 1.0, %v3639
  %v3641 = vrcp.pop %v957
  %v3642 = vmul.f32 %v957, %v3641
  %v3643 = vsub.f32 1.0, %v3642
  %v3644 = vmul.f32 %v3641, %v3643
  %v3645 = vadd.f32 %v3641, %v3644
  %vm3646 = vweird.f32 %v957
  %vm3647 = vweird.f32 %v3641
  %vm3648 = vmor %vm3646, %vm3647
  %v3649 = vsel %vm3648, %v3641, %v3645
  %v3650 = vand.u32 2147483647, %v957
  %vm3651 = vcmp.eq.f32.partialorder %v3650, 8.507059e+37
  %v3652 = vand.u32 %v957, 2147483648
  %v3653 = vor.u32 1.1754944e-38, %v3652
  %v3654 = vsel %vm3651, %v3653, %v3649
  %v3655 = vmul.f32 1.0, %v3654
  %v3656 = vrcp.pop %v958
  %v3657 = vmul.f32 %v958, %v3656
  %v3658 = vsub.f32 1.0, %v3657
  %v3659 = vmul.f32 %v3656, %v3658
  %v3660 = vadd.f32 %v3656, %v3659
  %vm3661 = vweird.f32 %v958
  %vm3662 = vweird.f32 %v3656
  %vm3663 = vmor %vm3661, %vm3662
  %v3664 = vsel %vm3663, %v3656, %v3660
  %v3665 = vand.u32 2147483647, %v958
  %vm3666 = vcmp.eq.f32.partialorder %v3665, 8.507059e+37
  %v3667 = vand.u32 %v958, 2147483648
  %v3668 = vor.u32 1.1754944e-38, %v3667
  %v3669 = vsel %vm3666, %v3668, %v3664
  %v3670 = vmul.f32 1.0, %v3669
  %v3671 = vrcp.pop %v959
  %v3672 = vmul.f32 %v959, %v3671
  %v3673 = vsub.f32 1.0, %v3672
  %v3674 = vmul.f32 %v3671, %v3673
  %v3675 = vadd.f32 %v3671, %v3674
  %vm3676 = vweird.f32 %v959
  %vm3677 = vweird.f32 %v3671
  %vm3678 = vmor %vm3676, %vm3677
  %v3679 = vsel %vm3678, %v3671, %v3675
  %v3680 = vand.u32 2147483647, %v959
  %vm3681 = vcmp.eq.f32.partialorder %v3680, 8.507059e+37
  %v3682 = vand.u32 %v959, 2147483648
  %v3683 = vor.u32 1.1754944e-38, %v3682
  %v3684 = vsel %vm3681, %v3683, %v3679
  %v3685 = vmul.f32 1.0, %v3684
  %v3686 = vrcp.pop %v960
  %v3687 = vmul.f32 %v960, %v3686
  %v3688 = vsub.f32 1.0, %v3687
  %v3689 = vmul.f32 %v3686, %v3688
  %v3690 = vadd.f32 %v3686, %v3689
  %vm3691 = vweird.f32 %v960
  %vm3692 = vweird.f32 %v3686
  %vm3693 = vmor %vm3691, %vm3692
  %v3694 = vsel %vm3693, %v3686, %v3690
  %v3695 = vand.u32 2147483647, %v960
  %vm3696 = vcmp.eq.f32.partialorder %v3695, 8.507059e+37
  %v3697 = vand.u32 %v960, 2147483648
  %v3698 = vor.u32 1.1754944e-38, %v3697
  %v3699 = vsel %vm3696, %v3698, %v3694
  %v3700 = vmul.f32 1.0, %v3699
  %v3701 = vrcp.pop %v961
  %v3702 = vmul.f32 %v961, %v3701
  %v3703 = vsub.f32 1.0, %v3702
  %v3704 = vmul.f32 %v3701, %v3703
  %v3705 = vadd.f32 %v3701, %v3704
  %vm3706 = vweird.f32 %v961
  %vm3707 = vweird.f32 %v3701
  %vm3708 = vmor %vm3706, %vm3707
  %v3709 = vsel %vm3708, %v3701, %v3705
  %v3710 = vand.u32 2147483647, %v961
  %vm3711 = vcmp.eq.f32.partialorder %v3710, 8.507059e+37
  %v3712 = vand.u32 %v961, 2147483648
  %v3713 = vor.u32 1.1754944e-38, %v3712
  %v3714 = vsel %vm3711, %v3713, %v3709
  %v3715 = vmul.f32 1.0, %v3714
  %v3716 = vrcp.pop %v962
  %v3717 = vmul.f32 %v962, %v3716
  %v3718 = vsub.f32 1.0, %v3717
  %v3719 = vmul.f32 %v3716, %v3718
  %v3720 = vadd.f32 %v3716, %v3719
  %vm3721 = vweird.f32 %v962
  %vm3722 = vweird.f32 %v3716
  %vm3723 = vmor %vm3721, %vm3722
  %v3724 = vsel %vm3723, %v3716, %v3720
  %v3725 = vand.u32 2147483647, %v962
  %vm3726 = vcmp.eq.f32.partialorder %v3725, 8.507059e+37
  %v3727 = vand.u32 %v962, 2147483648
  %v3728 = vor.u32 1.1754944e-38, %v3727
  %v3729 = vsel %vm3726, %v3728, %v3724
  %v3730 = vmul.f32 1.0, %v3729
  %v3731 = vrcp.pop %v963
  %v3732 = vmul.f32 %v963, %v3731
  %v3733 = vsub.f32 1.0, %v3732
  %v3734 = vmul.f32 %v3731, %v3733
  %v3735 = vadd.f32 %v3731, %v3734
  %vm3736 = vweird.f32 %v963
  %vm3737 = vweird.f32 %v3731
  %vm3738 = vmor %vm3736, %vm3737
  %v3739 = vsel %vm3738, %v3731, %v3735
  %v3740 = vand.u32 2147483647, %v963
  %vm3741 = vcmp.eq.f32.partialorder %v3740, 8.507059e+37
  %v3742 = vand.u32 %v963, 2147483648
  %v3743 = vor.u32 1.1754944e-38, %v3742
  %v3744 = vsel %vm3741, %v3743, %v3739
  %v3745 = vmul.f32 1.0, %v3744
  %v3746 = vrcp.pop %v964
  %v3747 = vmul.f32 %v964, %v3746
  %v3748 = vsub.f32 1.0, %v3747
  %v3749 = vmul.f32 %v3746, %v3748
  %v3750 = vadd.f32 %v3746, %v3749
  %vm3751 = vweird.f32 %v964
  %vm3752 = vweird.f32 %v3746
  %vm3753 = vmor %vm3751, %vm3752
  %v3754 = vsel %vm3753, %v3746, %v3750
  %v3755 = vand.u32 2147483647, %v964
  %vm3756 = vcmp.eq.f32.partialorder %v3755, 8.507059e+37
  %v3757 = vand.u32 %v964, 2147483648
  %v3758 = vor.u32 1.1754944e-38, %v3757
  %v3759 = vsel %vm3756, %v3758, %v3754
  %v3760 = vmul.f32 1.0, %v3759
  %v3761 = vrcp.pop %v965
  %v3762 = vmul.f32 %v965, %v3761
  %v3763 = vsub.f32 1.0, %v3762
  %v3764 = vmul.f32 %v3761, %v3763
  %v3765 = vadd.f32 %v3761, %v3764
  %vm3766 = vweird.f32 %v965
  %vm3767 = vweird.f32 %v3761
  %vm3768 = vmor %vm3766, %vm3767
  %v3769 = vsel %vm3768, %v3761, %v3765
  %v3770 = vand.u32 2147483647, %v965
  %vm3771 = vcmp.eq.f32.partialorder %v3770, 8.507059e+37
  %v3772 = vand.u32 %v965, 2147483648
  %v3773 = vor.u32 1.1754944e-38, %v3772
  %v3774 = vsel %vm3771, %v3773, %v3769
  %v3775 = vmul.f32 1.0, %v3774
  %v3776 = vrcp.pop %v966
  %v3777 = vmul.f32 %v966, %v3776
  %v3778 = vsub.f32 1.0, %v3777
  %v3779 = vmul.f32 %v3776, %v3778
  %v3780 = vadd.f32 %v3776, %v3779
  %vm3781 = vweird.f32 %v966
  %vm3782 = vweird.f32 %v3776
  %vm3783 = vmor %vm3781, %vm3782
  %v3784 = vsel %vm3783, %v3776, %v3780
  %v3785 = vand.u32 2147483647, %v966
  %vm3786 = vcmp.eq.f32.partialorder %v3785, 8.507059e+37
  %v3787 = vand.u32 %v966, 2147483648
  %v3788 = vor.u32 1.1754944e-38, %v3787
  %v3789 = vsel %vm3786, %v3788, %v3784
  %v3790 = vmul.f32 1.0, %v3789
  %v3791 = vrcp.pop %v967
  %v3792 = vmul.f32 %v967, %v3791
  %v3793 = vsub.f32 1.0, %v3792
  %v3794 = vmul.f32 %v3791, %v3793
  %v3795 = vadd.f32 %v3791, %v3794
  %vm3796 = vweird.f32 %v967
  %vm3797 = vweird.f32 %v3791
  %vm3798 = vmor %vm3796, %vm3797
  %v3799 = vsel %vm3798, %v3791, %v3795
  %v3800 = vand.u32 2147483647, %v967
  %vm3801 = vcmp.eq.f32.partialorder %v3800, 8.507059e+37
  %v3802 = vand.u32 %v967, 2147483648
  %v3803 = vor.u32 1.1754944e-38, %v3802
  %v3804 = vsel %vm3801, %v3803, %v3799
  %v3805 = vmul.f32 1.0, %v3804
  %v3806 = vrcp.pop %v968
  %v3807 = vmul.f32 %v968, %v3806
  %v3808 = vsub.f32 1.0, %v3807
  %v3809 = vmul.f32 %v3806, %v3808
  %v3810 = vadd.f32 %v3806, %v3809
  %vm3811 = vweird.f32 %v968
  %vm3812 = vweird.f32 %v3806
  %vm3813 = vmor %vm3811, %vm3812
  %v3814 = vsel %vm3813, %v3806, %v3810
  %v3815 = vand.u32 2147483647, %v968
  %vm3816 = vcmp.eq.f32.partialorder %v3815, 8.507059e+37
  %v3817 = vand.u32 %v968, 2147483648
  %v3818 = vor.u32 1.1754944e-38, %v3817
  %v3819 = vsel %vm3816, %v3818, %v3814
  %v3820 = vmul.f32 1.0, %v3819
  %v3821 = vrcp.pop %v969
  %v3822 = vmul.f32 %v969, %v3821
  %v3823 = vsub.f32 1.0, %v3822
  %v3824 = vmul.f32 %v3821, %v3823
  %v3825 = vadd.f32 %v3821, %v3824
  %vm3826 = vweird.f32 %v969
  %vm3827 = vweird.f32 %v3821
  %vm3828 = vmor %vm3826, %vm3827
  %v3829 = vsel %vm3828, %v3821, %v3825
  %v3830 = vand.u32 2147483647, %v969
  %vm3831 = vcmp.eq.f32.partialorder %v3830, 8.507059e+37
  %v3832 = vand.u32 %v969, 2147483648
  %v3833 = vor.u32 1.1754944e-38, %v3832
  %v3834 = vsel %vm3831, %v3833, %v3829
  %v3835 = vmul.f32 1.0, %v3834
  %v3836 = vrcp.pop %v970
  %v3837 = vmul.f32 %v970, %v3836
  %v3838 = vsub.f32 1.0, %v3837
  %v3839 = vmul.f32 %v3836, %v3838
  %v3840 = vadd.f32 %v3836, %v3839
  %vm3841 = vweird.f32 %v970
  %vm3842 = vweird.f32 %v3836
  %vm3843 = vmor %vm3841, %vm3842
  %v3844 = vsel %vm3843, %v3836, %v3840
  %v3845 = vand.u32 2147483647, %v970
  %vm3846 = vcmp.eq.f32.partialorder %v3845, 8.507059e+37
  %v3847 = vand.u32 %v970, 2147483648
  %v3848 = vor.u32 1.1754944e-38, %v3847
  %v3849 = vsel %vm3846, %v3848, %v3844
  %v3850 = vmul.f32 1.0, %v3849
  %v3851 = vld [vmem:[%s1] sm:$0xff]
  %v3852 = vld [vmem:[%s1 + $0x8] sm:$0xff]
  %v3853 = vld [vmem:[%s1 + $0x10] sm:$0xff]
  %v3854 = vld [vmem:[%s1 + $0x18] sm:$0xff]
  %v3855 = vld [vmem:[%s1 + $0x20] sm:$0xff]
  %v3856 = vld [vmem:[%s1 + $0x28] sm:$0xff]
  %v3857 = vld [vmem:[%s1 + $0x30] sm:$0xff]
  %v3858 = vld [vmem:[%s1 + $0x38] sm:$0xff]
  %v3859 = vld [vmem:[%s1 + $0x40] sm:$0xff]
  %v3860 = vld [vmem:[%s1 + $0x48] sm:$0xff]
  %v3861 = vld [vmem:[%s1 + $0x50] sm:$0xff]
  %v3862 = vld [vmem:[%s1 + $0x58] sm:$0xff]
  %v3863 = vld [vmem:[%s1 + $0x60] sm:$0xff]
  %v3864 = vld [vmem:[%s1 + $0x68] sm:$0xff]
  %v3865 = vld [vmem:[%s1 + $0x70] sm:$0xff]
  %v3866 = vld [vmem:[%s1 + $0x78] sm:$0xff]
  %v3867 = vld [vmem:[%s1 + $0x80] sm:$0xff]
  %v3868 = vld [vmem:[%s1 + $0x88] sm:$0xff]
  %v3869 = vld [vmem:[%s1 + $0x90] sm:$0xff]
  %v3870 = vld [vmem:[%s1 + $0x98] sm:$0xff]
  %v3871 = vld [vmem:[%s1 + $0xa0] sm:$0xff]
  %v3872 = vld [vmem:[%s1 + $0xa8] sm:$0xff]
  %v3873 = vld [vmem:[%s1 + $0xb0] sm:$0xff]
  %v3874 = vld [vmem:[%s1 + $0xb8] sm:$0xff]
  %v3875 = vld [vmem:[%s1 + $0xc0] sm:$0xff]
  %v3876 = vld [vmem:[%s1 + $0xc8] sm:$0xff]
  %v3877 = vld [vmem:[%s1 + $0xd0] sm:$0xff]
  %v3878 = vld [vmem:[%s1 + $0xd8] sm:$0xff]
  %v3879 = vld [vmem:[%s1 + $0xe0] sm:$0xff]
  %v3880 = vld [vmem:[%s1 + $0xe8] sm:$0xff]
  %v3881 = vld [vmem:[%s1 + $0xf0] sm:$0xff]
  %v3882 = vld [vmem:[%s1 + $0xf8] sm:$0xff]
  %v3883 = vld [vmem:[%s1 + $0x100] sm:$0xff]
  %v3884 = vld [vmem:[%s1 + $0x108] sm:$0xff]
  %v3885 = vld [vmem:[%s1 + $0x110] sm:$0xff]
  %v3886 = vld [vmem:[%s1 + $0x118] sm:$0xff]
  %v3887 = vld [vmem:[%s1 + $0x120] sm:$0xff]
  %v3888 = vld [vmem:[%s1 + $0x128] sm:$0xff]
  %v3889 = vld [vmem:[%s1 + $0x130] sm:$0xff]
  %v3890 = vld [vmem:[%s1 + $0x138] sm:$0xff]
  %v3891 = vld [vmem:[%s1 + $0x140] sm:$0xff]
  %v3892 = vld [vmem:[%s1 + $0x148] sm:$0xff]
  %v3893 = vld [vmem:[%s1 + $0x150] sm:$0xff]
  %v3894 = vld [vmem:[%s1 + $0x158] sm:$0xff]
  %v3895 = vld [vmem:[%s1 + $0x160] sm:$0xff]
  %v3896 = vld [vmem:[%s1 + $0x168] sm:$0xff]
  %v3897 = vld [vmem:[%s1 + $0x170] sm:$0xff]
  %v3898 = vld [vmem:[%s1 + $0x178] sm:$0xff]
  %v3899 = vld [vmem:[%s1 + $0x180] sm:$0xff]
  %v3900 = vld [vmem:[%s1 + $0x188] sm:$0xff]
  %v3901 = vld [vmem:[%s1 + $0x190] sm:$0xff]
  %v3902 = vld [vmem:[%s1 + $0x198] sm:$0xff]
  %v3903 = vld [vmem:[%s1 + $0x1a0] sm:$0xff]
  %v3904 = vld [vmem:[%s1 + $0x1a8] sm:$0xff]
  %v3905 = vld [vmem:[%s1 + $0x1b0] sm:$0xff]
  %v3906 = vld [vmem:[%s1 + $0x1b8] sm:$0xff]
  %v3907 = vld [vmem:[%s1 + $0x1c0] sm:$0xff]
  %v3908 = vld [vmem:[%s1 + $0x1c8] sm:$0xff]
  %v3909 = vld [vmem:[%s1 + $0x1d0] sm:$0xff]
  %v3910 = vld [vmem:[%s1 + $0x1d8] sm:$0xff]
  %v3911 = vld [vmem:[%s1 + $0x1e0] sm:$0xff]
  %v3912 = vld [vmem:[%s1 + $0x1e8] sm:$0xff]
  %v3913 = vld [vmem:[%s1 + $0x1f0] sm:$0xff]
  %v3914 = vld [vmem:[%s1 + $0x1f8] sm:$0xff]
  %v3915 = vld [vmem:[%s1 + $0x200] sm:$0xff]
  %v3916 = vld [vmem:[%s1 + $0x208] sm:$0xff]
  %v3917 = vld [vmem:[%s1 + $0x210] sm:$0xff]
  %v3918 = vld [vmem:[%s1 + $0x218] sm:$0xff]
  %v3919 = vld [vmem:[%s1 + $0x220] sm:$0xff]
  %v3920 = vld [vmem:[%s1 + $0x228] sm:$0xff]
  %v3921 = vld [vmem:[%s1 + $0x230] sm:$0xff]
  %v3922 = vld [vmem:[%s1 + $0x238] sm:$0xff]
  %v3923 = vld [vmem:[%s1 + $0x240] sm:$0xff]
  %v3924 = vld [vmem:[%s1 + $0x248] sm:$0xff]
  %v3925 = vld [vmem:[%s1 + $0x250] sm:$0xff]
  %v3926 = vld [vmem:[%s1 + $0x258] sm:$0xff]
  %v3927 = vld [vmem:[%s1 + $0x260] sm:$0xff]
  %v3928 = vld [vmem:[%s1 + $0x268] sm:$0xff]
  %v3929 = vld [vmem:[%s1 + $0x270] sm:$0xff]
  %v3930 = vld [vmem:[%s1 + $0x278] sm:$0xff]
  %v3931 = vld [vmem:[%s1 + $0x280] sm:$0xff]
  %v3932 = vld [vmem:[%s1 + $0x288] sm:$0xff]
  %v3933 = vld [vmem:[%s1 + $0x290] sm:$0xff]
  %v3934 = vld [vmem:[%s1 + $0x298] sm:$0xff]
  %v3935 = vld [vmem:[%s1 + $0x2a0] sm:$0xff]
  %v3936 = vld [vmem:[%s1 + $0x2a8] sm:$0xff]
  %v3937 = vld [vmem:[%s1 + $0x2b0] sm:$0xff]
  %v3938 = vld [vmem:[%s1 + $0x2b8] sm:$0xff]
  %v3939 = vld [vmem:[%s1 + $0x2c0] sm:$0xff]
  %v3940 = vld [vmem:[%s1 + $0x2c8] sm:$0xff]
  %v3941 = vld [vmem:[%s1 + $0x2d0] sm:$0xff]
  %v3942 = vld [vmem:[%s1 + $0x2d8] sm:$0xff]
  %v3943 = vld [vmem:[%s1 + $0x2e0] sm:$0xff]
  %v3944 = vld [vmem:[%s1 + $0x2e8] sm:$0xff]
  %v3945 = vld [vmem:[%s1 + $0x2f0] sm:$0xff]
  %v3946 = vld [vmem:[%s1 + $0x2f8] sm:$0xff]
  %v3947 = vld [vmem:[%s1 + $0x300] sm:$0xff]
  %v3948 = vld [vmem:[%s1 + $0x308] sm:$0xff]
  %v3949 = vld [vmem:[%s1 + $0x310] sm:$0xff]
  %v3950 = vld [vmem:[%s1 + $0x318] sm:$0xff]
  %v3951 = vld [vmem:[%s1 + $0x320] sm:$0xff]
  %v3952 = vld [vmem:[%s1 + $0x328] sm:$0xff]
  %v3953 = vld [vmem:[%s1 + $0x330] sm:$0xff]
  %v3954 = vld [vmem:[%s1 + $0x338] sm:$0xff]
  %v3955 = vld [vmem:[%s1 + $0x340] sm:$0xff]
  %v3956 = vld [vmem:[%s1 + $0x348] sm:$0xff]
  %v3957 = vld [vmem:[%s1 + $0x350] sm:$0xff]
  %v3958 = vld [vmem:[%s1 + $0x358] sm:$0xff]
  %v3959 = vld [vmem:[%s1 + $0x360] sm:$0xff]
  %v3960 = vld [vmem:[%s1 + $0x368] sm:$0xff]
  %v3961 = vld [vmem:[%s1 + $0x370] sm:$0xff]
  %v3962 = vld [vmem:[%s1 + $0x378] sm:$0xff]
  %v3963 = vld [vmem:[%s1 + $0x380] sm:$0xff]
  %v3964 = vld [vmem:[%s1 + $0x388] sm:$0xff]
  %v3965 = vld [vmem:[%s1 + $0x390] sm:$0xff]
  %v3966 = vld [vmem:[%s1 + $0x398] sm:$0xff]
  %v3967 = vld [vmem:[%s1 + $0x3a0] sm:$0xff]
  %v3968 = vld [vmem:[%s1 + $0x3a8] sm:$0xff]
  %v3969 = vld [vmem:[%s1 + $0x3b0] sm:$0xff]
  %v3970 = vld [vmem:[%s1 + $0x3b8] sm:$0xff]
  %v3971 = vld [vmem:[%s1 + $0x3c0] sm:$0xff]
  %v3972 = vld [vmem:[%s1 + $0x3c8] sm:$0xff]
  %v3973 = vld [vmem:[%s1 + $0x3d0] sm:$0xff]
  %v3974 = vld [vmem:[%s1 + $0x3d8] sm:$0xff]
  %v3975 = vld [vmem:[%s1 + $0x3e0] sm:$0xff]
  %v3976 = vld [vmem:[%s1 + $0x3e8] sm:$0xff]
  %v3977 = vld [vmem:[%s1 + $0x3f0] sm:$0xff]
  %v3978 = vld [vmem:[%s1 + $0x3f8] sm:$0xff]
  %v3979 = vld [vmem:[%s1 + $0x400] sm:$0xff]
  %v3980 = vld [vmem:[%s1 + $0x408] sm:$0xff]
  %v3981 = vld [vmem:[%s1 + $0x410] sm:$0xff]
  %v3982 = vld [vmem:[%s1 + $0x418] sm:$0xff]
  %v3983 = vld [vmem:[%s1 + $0x420] sm:$0xff]
  %v3984 = vld [vmem:[%s1 + $0x428] sm:$0xff]
  %v3985 = vld [vmem:[%s1 + $0x430] sm:$0xff]
  %v3986 = vld [vmem:[%s1 + $0x438] sm:$0xff]
  %v3987 = vld [vmem:[%s1 + $0x440] sm:$0xff]
  %v3988 = vld [vmem:[%s1 + $0x448] sm:$0xff]
  %v3989 = vld [vmem:[%s1 + $0x450] sm:$0xff]
  %v3990 = vld [vmem:[%s1 + $0x458] sm:$0xff]
  %v3991 = vld [vmem:[%s1 + $0x460] sm:$0xff]
  %v3992 = vld [vmem:[%s1 + $0x468] sm:$0xff]
  %v3993 = vld [vmem:[%s1 + $0x470] sm:$0xff]
  %v3994 = vld [vmem:[%s1 + $0x478] sm:$0xff]
  %v3995 = vld [vmem:[%s1 + $0x480] sm:$0xff]
  %v3996 = vld [vmem:[%s1 + $0x488] sm:$0xff]
  %v3997 = vld [vmem:[%s1 + $0x490] sm:$0xff]
  %v3998 = vld [vmem:[%s1 + $0x498] sm:$0xff]
  %v3999 = vld [vmem:[%s1 + $0x4a0] sm:$0xff]
  %v4000 = vld [vmem:[%s1 + $0x4a8] sm:$0xff]
  %v4001 = vld [vmem:[%s1 + $0x4b0] sm:$0xff]
  %v4002 = vld [vmem:[%s1 + $0x4b8] sm:$0xff]
  %v4003 = vld [vmem:[%s1 + $0x4c0] sm:$0xff]
  %v4004 = vld [vmem:[%s1 + $0x4c8] sm:$0xff]
  %v4005 = vld [vmem:[%s1 + $0x4d0] sm:$0xff]
  %v4006 = vld [vmem:[%s1 + $0x4d8] sm:$0xff]
  %v4007 = vld [vmem:[%s1 + $0x4e0] sm:$0xff]
  %v4008 = vld [vmem:[%s1 + $0x4e8] sm:$0xff]
  %v4009 = vld [vmem:[%s1 + $0x4f0] sm:$0xff]
  %v4010 = vld [vmem:[%s1 + $0x4f8] sm:$0xff]
  %v4011 = vld [vmem:[%s1 + $0x500] sm:$0xff]
  %v4012 = vld [vmem:[%s1 + $0x508] sm:$0xff]
  %v4013 = vld [vmem:[%s1 + $0x510] sm:$0xff]
  %v4014 = vld [vmem:[%s1 + $0x518] sm:$0xff]
  %v4015 = vld [vmem:[%s1 + $0x520] sm:$0xff]
  %v4016 = vld [vmem:[%s1 + $0x528] sm:$0xff]
  %v4017 = vld [vmem:[%s1 + $0x530] sm:$0xff]
  %v4018 = vld [vmem:[%s1 + $0x538] sm:$0xff]
  %v4019 = vld [vmem:[%s1 + $0x540] sm:$0xff]
  %v4020 = vld [vmem:[%s1 + $0x548] sm:$0xff]
  %v4021 = vld [vmem:[%s1 + $0x550] sm:$0xff]
  %v4022 = vld [vmem:[%s1 + $0x558] sm:$0xff]
  %v4023 = vld [vmem:[%s1 + $0x560] sm:$0xff]
  %v4024 = vld [vmem:[%s1 + $0x568] sm:$0xff]
  %v4025 = vld [vmem:[%s1 + $0x570] sm:$0xff]
  %v4026 = vld [vmem:[%s1 + $0x578] sm:$0xff]
  %v4027 = vld [vmem:[%s1 + $0x580] sm:$0xff]
  %v4028 = vld [vmem:[%s1 + $0x588] sm:$0xff]
  %v4029 = vld [vmem:[%s1 + $0x590] sm:$0xff]
  %v4030 = vld [vmem:[%s1 + $0x598] sm:$0xff]
  %v4031 = vld [vmem:[%s1 + $0x5a0] sm:$0xff]
  %v4032 = vld [vmem:[%s1 + $0x5a8] sm:$0xff]
  %v4033 = vld [vmem:[%s1 + $0x5b0] sm:$0xff]
  %v4034 = vld [vmem:[%s1 + $0x5b8] sm:$0xff]
  %v4035 = vld [vmem:[%s1 + $0x5c0] sm:$0xff]
  %v4036 = vld [vmem:[%s1 + $0x5c8] sm:$0xff]
  %v4037 = vld [vmem:[%s1 + $0x5d0] sm:$0xff]
  %v4038 = vld [vmem:[%s1 + $0x5d8] sm:$0xff]
  %v4039 = vld [vmem:[%s1 + $0x5e0] sm:$0xff]
  %v4040 = vld [vmem:[%s1 + $0x5e8] sm:$0xff]
  %v4041 = vld [vmem:[%s1 + $0x5f0] sm:$0xff]
  %v4042 = vld [vmem:[%s1 + $0x5f8] sm:$0xff]
  %4044 = vset.pattern.permute.xlu0 0
  %4045 = vperm.xlu0 %4044, %v985
  %v4046 = vpop.permute.xlu0 %4045
  %4049 = vset.pattern.permute.xlu0 0
  %4050 = vperm.xlu0 %4049, %v1000
  %v4051 = vpop.permute.xlu0 %4050
  %4054 = vset.pattern.permute.xlu0 0
  %4055 = vperm.xlu0 %4054, %v1015
  %v4056 = vpop.permute.xlu0 %4055
  %4059 = vset.pattern.permute.xlu0 0
  %4060 = vperm.xlu0 %4059, %v1030
  %v4061 = vpop.permute.xlu0 %4060
  %4064 = vset.pattern.permute.xlu0 0
  %4065 = vperm.xlu0 %4064, %v1045
  %v4066 = vpop.permute.xlu0 %4065
  %4069 = vset.pattern.permute.xlu0 0
  %4070 = vperm.xlu0 %4069, %v1060
  %v4071 = vpop.permute.xlu0 %4070
  %4074 = vset.pattern.permute.xlu0 0
  %4075 = vperm.xlu0 %4074, %v1075
  %v4076 = vpop.permute.xlu0 %4075
  %4079 = vset.pattern.permute.xlu0 0
  %4080 = vperm.xlu0 %4079, %v1090
  %v4081 = vpop.permute.xlu0 %4080
  %4084 = vset.pattern.permute.xlu0 0
  %4085 = vperm.xlu0 %4084, %v1105
  %v4086 = vpop.permute.xlu0 %4085
  %4089 = vset.pattern.permute.xlu0 0
  %4090 = vperm.xlu0 %4089, %v1120
  %v4091 = vpop.permute.xlu0 %4090
  %4094 = vset.pattern.permute.xlu0 0
  %4095 = vperm.xlu0 %4094, %v1135
  %v4096 = vpop.permute.xlu0 %4095
  %4099 = vset.pattern.permute.xlu0 0
  %4100 = vperm.xlu0 %4099, %v1150
  %v4101 = vpop.permute.xlu0 %4100
  %4104 = vset.pattern.permute.xlu0 0
  %4105 = vperm.xlu0 %4104, %v1165
  %v4106 = vpop.permute.xlu0 %4105
  %4109 = vset.pattern.permute.xlu0 0
  %4110 = vperm.xlu0 %4109, %v1180
  %v4111 = vpop.permute.xlu0 %4110
  %4114 = vset.pattern.permute.xlu0 0
  %4115 = vperm.xlu0 %4114, %v1195
  %v4116 = vpop.permute.xlu0 %4115
  %4119 = vset.pattern.permute.xlu0 0
  %4120 = vperm.xlu0 %4119, %v1210
  %v4121 = vpop.permute.xlu0 %4120
  %4124 = vset.pattern.permute.xlu0 0
  %4125 = vperm.xlu0 %4124, %v1225
  %v4126 = vpop.permute.xlu0 %4125
  %4129 = vset.pattern.permute.xlu0 0
  %4130 = vperm.xlu0 %4129, %v1240
  %v4131 = vpop.permute.xlu0 %4130
  %4134 = vset.pattern.permute.xlu0 0
  %4135 = vperm.xlu0 %4134, %v1255
  %v4136 = vpop.permute.xlu0 %4135
  %4139 = vset.pattern.permute.xlu0 0
  %4140 = vperm.xlu0 %4139, %v1270
  %v4141 = vpop.permute.xlu0 %4140
  %4144 = vset.pattern.permute.xlu0 0
  %4145 = vperm.xlu0 %4144, %v1285
  %v4146 = vpop.permute.xlu0 %4145
  %4149 = vset.pattern.permute.xlu0 0
  %4150 = vperm.xlu0 %4149, %v1300
  %v4151 = vpop.permute.xlu0 %4150
  %4154 = vset.pattern.permute.xlu0 0
  %4155 = vperm.xlu0 %4154, %v1315
  %v4156 = vpop.permute.xlu0 %4155
  %4159 = vset.pattern.permute.xlu0 0
  %4160 = vperm.xlu0 %4159, %v1330
  %v4161 = vpop.permute.xlu0 %4160
  %4164 = vset.pattern.permute.xlu0 0
  %4165 = vperm.xlu0 %4164, %v1345
  %v4166 = vpop.permute.xlu0 %4165
  %4169 = vset.pattern.permute.xlu0 0
  %4170 = vperm.xlu0 %4169, %v1360
  %v4171 = vpop.permute.xlu0 %4170
  %4174 = vset.pattern.permute.xlu0 0
  %4175 = vperm.xlu0 %4174, %v1375
  %v4176 = vpop.permute.xlu0 %4175
  %4179 = vset.pattern.permute.xlu0 0
  %4180 = vperm.xlu0 %4179, %v1390
  %v4181 = vpop.permute.xlu0 %4180
  %4184 = vset.pattern.permute.xlu0 0
  %4185 = vperm.xlu0 %4184, %v1405
  %v4186 = vpop.permute.xlu0 %4185
  %4189 = vset.pattern.permute.xlu0 0
  %4190 = vperm.xlu0 %4189, %v1420
  %v4191 = vpop.permute.xlu0 %4190
  %4194 = vset.pattern.permute.xlu0 0
  %4195 = vperm.xlu0 %4194, %v1435
  %v4196 = vpop.permute.xlu0 %4195
  %4199 = vset.pattern.permute.xlu0 0
  %4200 = vperm.xlu0 %4199, %v1450
  %v4201 = vpop.permute.xlu0 %4200
  %4204 = vset.pattern.permute.xlu0 0
  %4205 = vperm.xlu0 %4204, %v1465
  %v4206 = vpop.permute.xlu0 %4205
  %4209 = vset.pattern.permute.xlu0 0
  %4210 = vperm.xlu0 %4209, %v1480
  %v4211 = vpop.permute.xlu0 %4210
  %4214 = vset.pattern.permute.xlu0 0
  %4215 = vperm.xlu0 %4214, %v1495
  %v4216 = vpop.permute.xlu0 %4215
  %4219 = vset.pattern.permute.xlu0 0
  %4220 = vperm.xlu0 %4219, %v1510
  %v4221 = vpop.permute.xlu0 %4220
  %4224 = vset.pattern.permute.xlu0 0
  %4225 = vperm.xlu0 %4224, %v1525
  %v4226 = vpop.permute.xlu0 %4225
  %4229 = vset.pattern.permute.xlu0 0
  %4230 = vperm.xlu0 %4229, %v1540
  %v4231 = vpop.permute.xlu0 %4230
  %4234 = vset.pattern.permute.xlu0 0
  %4235 = vperm.xlu0 %4234, %v1555
  %v4236 = vpop.permute.xlu0 %4235
  %4239 = vset.pattern.permute.xlu0 0
  %4240 = vperm.xlu0 %4239, %v1570
  %v4241 = vpop.permute.xlu0 %4240
  %4244 = vset.pattern.permute.xlu0 0
  %4245 = vperm.xlu0 %4244, %v1585
  %v4246 = vpop.permute.xlu0 %4245
  %4249 = vset.pattern.permute.xlu0 0
  %4250 = vperm.xlu0 %4249, %v1600
  %v4251 = vpop.permute.xlu0 %4250
  %4254 = vset.pattern.permute.xlu0 0
  %4255 = vperm.xlu0 %4254, %v1615
  %v4256 = vpop.permute.xlu0 %4255
  %4259 = vset.pattern.permute.xlu0 0
  %4260 = vperm.xlu0 %4259, %v1630
  %v4261 = vpop.permute.xlu0 %4260
  %4264 = vset.pattern.permute.xlu0 0
  %4265 = vperm.xlu0 %4264, %v1645
  %v4266 = vpop.permute.xlu0 %4265
  %4269 = vset.pattern.permute.xlu0 0
  %4270 = vperm.xlu0 %4269, %v1660
  %v4271 = vpop.permute.xlu0 %4270
  %4274 = vset.pattern.permute.xlu0 0
  %4275 = vperm.xlu0 %4274, %v1675
  %v4276 = vpop.permute.xlu0 %4275
  %4279 = vset.pattern.permute.xlu0 0
  %4280 = vperm.xlu0 %4279, %v1690
  %v4281 = vpop.permute.xlu0 %4280
  %4284 = vset.pattern.permute.xlu0 0
  %4285 = vperm.xlu0 %4284, %v1705
  %v4286 = vpop.permute.xlu0 %4285
  %4289 = vset.pattern.permute.xlu0 0
  %4290 = vperm.xlu0 %4289, %v1720
  %v4291 = vpop.permute.xlu0 %4290
  %4294 = vset.pattern.permute.xlu0 0
  %4295 = vperm.xlu0 %4294, %v1735
  %v4296 = vpop.permute.xlu0 %4295
  %4299 = vset.pattern.permute.xlu0 0
  %4300 = vperm.xlu0 %4299, %v1750
  %v4301 = vpop.permute.xlu0 %4300
  %4304 = vset.pattern.permute.xlu0 0
  %4305 = vperm.xlu0 %4304, %v1765
  %v4306 = vpop.permute.xlu0 %4305
  %4309 = vset.pattern.permute.xlu0 0
  %4310 = vperm.xlu0 %4309, %v1780
  %v4311 = vpop.permute.xlu0 %4310
  %4314 = vset.pattern.permute.xlu0 0
  %4315 = vperm.xlu0 %4314, %v1795
  %v4316 = vpop.permute.xlu0 %4315
  %4319 = vset.pattern.permute.xlu0 0
  %4320 = vperm.xlu0 %4319, %v1810
  %v4321 = vpop.permute.xlu0 %4320
  %4324 = vset.pattern.permute.xlu0 0
  %4325 = vperm.xlu0 %4324, %v1825
  %v4326 = vpop.permute.xlu0 %4325
  %4329 = vset.pattern.permute.xlu0 0
  %4330 = vperm.xlu0 %4329, %v1840
  %v4331 = vpop.permute.xlu0 %4330
  %4334 = vset.pattern.permute.xlu0 0
  %4335 = vperm.xlu0 %4334, %v1855
  %v4336 = vpop.permute.xlu0 %4335
  %4339 = vset.pattern.permute.xlu0 0
  %4340 = vperm.xlu0 %4339, %v1870
  %v4341 = vpop.permute.xlu0 %4340
  %4344 = vset.pattern.permute.xlu0 0
  %4345 = vperm.xlu0 %4344, %v1885
  %v4346 = vpop.permute.xlu0 %4345
  %4349 = vset.pattern.permute.xlu0 0
  %4350 = vperm.xlu0 %4349, %v1900
  %v4351 = vpop.permute.xlu0 %4350
  %4354 = vset.pattern.permute.xlu0 0
  %4355 = vperm.xlu0 %4354, %v1915
  %v4356 = vpop.permute.xlu0 %4355
  %4359 = vset.pattern.permute.xlu0 0
  %4360 = vperm.xlu0 %4359, %v1930
  %v4361 = vpop.permute.xlu0 %4360
  %4364 = vset.pattern.permute.xlu0 0
  %4365 = vperm.xlu0 %4364, %v1945
  %v4366 = vpop.permute.xlu0 %4365
  %4369 = vset.pattern.permute.xlu0 0
  %4370 = vperm.xlu0 %4369, %v1960
  %v4371 = vpop.permute.xlu0 %4370
  %4374 = vset.pattern.permute.xlu0 0
  %4375 = vperm.xlu0 %4374, %v1975
  %v4376 = vpop.permute.xlu0 %4375
  %4379 = vset.pattern.permute.xlu0 0
  %4380 = vperm.xlu0 %4379, %v1990
  %v4381 = vpop.permute.xlu0 %4380
  %4384 = vset.pattern.permute.xlu0 0
  %4385 = vperm.xlu0 %4384, %v2005
  %v4386 = vpop.permute.xlu0 %4385
  %4389 = vset.pattern.permute.xlu0 0
  %4390 = vperm.xlu0 %4389, %v2020
  %v4391 = vpop.permute.xlu0 %4390
  %4394 = vset.pattern.permute.xlu0 0
  %4395 = vperm.xlu0 %4394, %v2035
  %v4396 = vpop.permute.xlu0 %4395
  %4399 = vset.pattern.permute.xlu0 0
  %4400 = vperm.xlu0 %4399, %v2050
  %v4401 = vpop.permute.xlu0 %4400
  %4404 = vset.pattern.permute.xlu0 0
  %4405 = vperm.xlu0 %4404, %v2065
  %v4406 = vpop.permute.xlu0 %4405
  %4409 = vset.pattern.permute.xlu0 0
  %4410 = vperm.xlu0 %4409, %v2080
  %v4411 = vpop.permute.xlu0 %4410
  %4414 = vset.pattern.permute.xlu0 0
  %4415 = vperm.xlu0 %4414, %v2095
  %v4416 = vpop.permute.xlu0 %4415
  %4419 = vset.pattern.permute.xlu0 0
  %4420 = vperm.xlu0 %4419, %v2110
  %v4421 = vpop.permute.xlu0 %4420
  %4424 = vset.pattern.permute.xlu0 0
  %4425 = vperm.xlu0 %4424, %v2125
  %v4426 = vpop.permute.xlu0 %4425
  %4429 = vset.pattern.permute.xlu0 0
  %4430 = vperm.xlu0 %4429, %v2140
  %v4431 = vpop.permute.xlu0 %4430
  %4434 = vset.pattern.permute.xlu0 0
  %4435 = vperm.xlu0 %4434, %v2155
  %v4436 = vpop.permute.xlu0 %4435
  %4439 = vset.pattern.permute.xlu0 0
  %4440 = vperm.xlu0 %4439, %v2170
  %v4441 = vpop.permute.xlu0 %4440
  %4444 = vset.pattern.permute.xlu0 0
  %4445 = vperm.xlu0 %4444, %v2185
  %v4446 = vpop.permute.xlu0 %4445
  %4449 = vset.pattern.permute.xlu0 0
  %4450 = vperm.xlu0 %4449, %v2200
  %v4451 = vpop.permute.xlu0 %4450
  %4454 = vset.pattern.permute.xlu0 0
  %4455 = vperm.xlu0 %4454, %v2215
  %v4456 = vpop.permute.xlu0 %4455
  %4459 = vset.pattern.permute.xlu0 0
  %4460 = vperm.xlu0 %4459, %v2230
  %v4461 = vpop.permute.xlu0 %4460
  %4464 = vset.pattern.permute.xlu0 0
  %4465 = vperm.xlu0 %4464, %v2245
  %v4466 = vpop.permute.xlu0 %4465
  %4469 = vset.pattern.permute.xlu0 0
  %4470 = vperm.xlu0 %4469, %v2260
  %v4471 = vpop.permute.xlu0 %4470
  %4474 = vset.pattern.permute.xlu0 0
  %4475 = vperm.xlu0 %4474, %v2275
  %v4476 = vpop.permute.xlu0 %4475
  %4479 = vset.pattern.permute.xlu0 0
  %4480 = vperm.xlu0 %4479, %v2290
  %v4481 = vpop.permute.xlu0 %4480
  %4484 = vset.pattern.permute.xlu0 0
  %4485 = vperm.xlu0 %4484, %v2305
  %v4486 = vpop.permute.xlu0 %4485
  %4489 = vset.pattern.permute.xlu0 0
  %4490 = vperm.xlu0 %4489, %v2320
  %v4491 = vpop.permute.xlu0 %4490
  %4494 = vset.pattern.permute.xlu0 0
  %4495 = vperm.xlu0 %4494, %v2335
  %v4496 = vpop.permute.xlu0 %4495
  %4499 = vset.pattern.permute.xlu0 0
  %4500 = vperm.xlu0 %4499, %v2350
  %v4501 = vpop.permute.xlu0 %4500
  %4504 = vset.pattern.permute.xlu0 0
  %4505 = vperm.xlu0 %4504, %v2365
  %v4506 = vpop.permute.xlu0 %4505
  %4509 = vset.pattern.permute.xlu0 0
  %4510 = vperm.xlu0 %4509, %v2380
  %v4511 = vpop.permute.xlu0 %4510
  %4514 = vset.pattern.permute.xlu0 0
  %4515 = vperm.xlu0 %4514, %v2395
  %v4516 = vpop.permute.xlu0 %4515
  %4519 = vset.pattern.permute.xlu0 0
  %4520 = vperm.xlu0 %4519, %v2410
  %v4521 = vpop.permute.xlu0 %4520
  %4524 = vset.pattern.permute.xlu0 0
  %4525 = vperm.xlu0 %4524, %v2425
  %v4526 = vpop.permute.xlu0 %4525
  %4529 = vset.pattern.permute.xlu0 0
  %4530 = vperm.xlu0 %4529, %v2440
  %v4531 = vpop.permute.xlu0 %4530
  %4534 = vset.pattern.permute.xlu0 0
  %4535 = vperm.xlu0 %4534, %v2455
  %v4536 = vpop.permute.xlu0 %4535
  %4539 = vset.pattern.permute.xlu0 0
  %4540 = vperm.xlu0 %4539, %v2470
  %v4541 = vpop.permute.xlu0 %4540
  %4544 = vset.pattern.permute.xlu0 0
  %4545 = vperm.xlu0 %4544, %v2485
  %v4546 = vpop.permute.xlu0 %4545
  %4549 = vset.pattern.permute.xlu0 0
  %4550 = vperm.xlu0 %4549, %v2500
  %v4551 = vpop.permute.xlu0 %4550
  %4554 = vset.pattern.permute.xlu0 0
  %4555 = vperm.xlu0 %4554, %v2515
  %v4556 = vpop.permute.xlu0 %4555
  %4559 = vset.pattern.permute.xlu0 0
  %4560 = vperm.xlu0 %4559, %v2530
  %v4561 = vpop.permute.xlu0 %4560
  %4564 = vset.pattern.permute.xlu0 0
  %4565 = vperm.xlu0 %4564, %v2545
  %v4566 = vpop.permute.xlu0 %4565
  %4569 = vset.pattern.permute.xlu0 0
  %4570 = vperm.xlu0 %4569, %v2560
  %v4571 = vpop.permute.xlu0 %4570
  %4574 = vset.pattern.permute.xlu0 0
  %4575 = vperm.xlu0 %4574, %v2575
  %v4576 = vpop.permute.xlu0 %4575
  %4579 = vset.pattern.permute.xlu0 0
  %4580 = vperm.xlu0 %4579, %v2590
  %v4581 = vpop.permute.xlu0 %4580
  %4584 = vset.pattern.permute.xlu0 0
  %4585 = vperm.xlu0 %4584, %v2605
  %v4586 = vpop.permute.xlu0 %4585
  %4589 = vset.pattern.permute.xlu0 0
  %4590 = vperm.xlu0 %4589, %v2620
  %v4591 = vpop.permute.xlu0 %4590
  %4594 = vset.pattern.permute.xlu0 0
  %4595 = vperm.xlu0 %4594, %v2635
  %v4596 = vpop.permute.xlu0 %4595
  %4599 = vset.pattern.permute.xlu0 0
  %4600 = vperm.xlu0 %4599, %v2650
  %v4601 = vpop.permute.xlu0 %4600
  %4604 = vset.pattern.permute.xlu0 0
  %4605 = vperm.xlu0 %4604, %v2665
  %v4606 = vpop.permute.xlu0 %4605
  %4609 = vset.pattern.permute.xlu0 0
  %4610 = vperm.xlu0 %4609, %v2680
  %v4611 = vpop.permute.xlu0 %4610
  %4614 = vset.pattern.permute.xlu0 0
  %4615 = vperm.xlu0 %4614, %v2695
  %v4616 = vpop.permute.xlu0 %4615
  %4619 = vset.pattern.permute.xlu0 0
  %4620 = vperm.xlu0 %4619, %v2710
  %v4621 = vpop.permute.xlu0 %4620
  %4624 = vset.pattern.permute.xlu0 0
  %4625 = vperm.xlu0 %4624, %v2725
  %v4626 = vpop.permute.xlu0 %4625
  %4629 = vset.pattern.permute.xlu0 0
  %4630 = vperm.xlu0 %4629, %v2740
  %v4631 = vpop.permute.xlu0 %4630
  %4634 = vset.pattern.permute.xlu0 0
  %4635 = vperm.xlu0 %4634, %v2755
  %v4636 = vpop.permute.xlu0 %4635
  %4639 = vset.pattern.permute.xlu0 0
  %4640 = vperm.xlu0 %4639, %v2770
  %v4641 = vpop.permute.xlu0 %4640
  %4644 = vset.pattern.permute.xlu0 0
  %4645 = vperm.xlu0 %4644, %v2785
  %v4646 = vpop.permute.xlu0 %4645
  %4649 = vset.pattern.permute.xlu0 0
  %4650 = vperm.xlu0 %4649, %v2800
  %v4651 = vpop.permute.xlu0 %4650
  %4654 = vset.pattern.permute.xlu0 0
  %4655 = vperm.xlu0 %4654, %v2815
  %v4656 = vpop.permute.xlu0 %4655
  %4659 = vset.pattern.permute.xlu0 0
  %4660 = vperm.xlu0 %4659, %v2830
  %v4661 = vpop.permute.xlu0 %4660
  %4664 = vset.pattern.permute.xlu0 0
  %4665 = vperm.xlu0 %4664, %v2845
  %v4666 = vpop.permute.xlu0 %4665
  %4669 = vset.pattern.permute.xlu0 0
  %4670 = vperm.xlu0 %4669, %v2860
  %v4671 = vpop.permute.xlu0 %4670
  %4674 = vset.pattern.permute.xlu0 0
  %4675 = vperm.xlu0 %4674, %v2875
  %v4676 = vpop.permute.xlu0 %4675
  %4679 = vset.pattern.permute.xlu0 0
  %4680 = vperm.xlu0 %4679, %v2890
  %v4681 = vpop.permute.xlu0 %4680
  %4684 = vset.pattern.permute.xlu0 0
  %4685 = vperm.xlu0 %4684, %v2905
  %v4686 = vpop.permute.xlu0 %4685
  %4689 = vset.pattern.permute.xlu0 0
  %4690 = vperm.xlu0 %4689, %v2920
  %v4691 = vpop.permute.xlu0 %4690
  %4694 = vset.pattern.permute.xlu0 0
  %4695 = vperm.xlu0 %4694, %v2935
  %v4696 = vpop.permute.xlu0 %4695
  %4699 = vset.pattern.permute.xlu0 0
  %4700 = vperm.xlu0 %4699, %v2950
  %v4701 = vpop.permute.xlu0 %4700
  %4704 = vset.pattern.permute.xlu0 0
  %4705 = vperm.xlu0 %4704, %v2965
  %v4706 = vpop.permute.xlu0 %4705
  %4709 = vset.pattern.permute.xlu0 0
  %4710 = vperm.xlu0 %4709, %v2980
  %v4711 = vpop.permute.xlu0 %4710
  %4714 = vset.pattern.permute.xlu0 0
  %4715 = vperm.xlu0 %4714, %v2995
  %v4716 = vpop.permute.xlu0 %4715
  %4719 = vset.pattern.permute.xlu0 0
  %4720 = vperm.xlu0 %4719, %v3010
  %v4721 = vpop.permute.xlu0 %4720
  %4724 = vset.pattern.permute.xlu0 0
  %4725 = vperm.xlu0 %4724, %v3025
  %v4726 = vpop.permute.xlu0 %4725
  %4729 = vset.pattern.permute.xlu0 0
  %4730 = vperm.xlu0 %4729, %v3040
  %v4731 = vpop.permute.xlu0 %4730
  %4734 = vset.pattern.permute.xlu0 0
  %4735 = vperm.xlu0 %4734, %v3055
  %v4736 = vpop.permute.xlu0 %4735
  %4739 = vset.pattern.permute.xlu0 0
  %4740 = vperm.xlu0 %4739, %v3070
  %v4741 = vpop.permute.xlu0 %4740
  %4744 = vset.pattern.permute.xlu0 0
  %4745 = vperm.xlu0 %4744, %v3085
  %v4746 = vpop.permute.xlu0 %4745
  %4749 = vset.pattern.permute.xlu0 0
  %4750 = vperm.xlu0 %4749, %v3100
  %v4751 = vpop.permute.xlu0 %4750
  %4754 = vset.pattern.permute.xlu0 0
  %4755 = vperm.xlu0 %4754, %v3115
  %v4756 = vpop.permute.xlu0 %4755
  %4759 = vset.pattern.permute.xlu0 0
  %4760 = vperm.xlu0 %4759, %v3130
  %v4761 = vpop.permute.xlu0 %4760
  %4764 = vset.pattern.permute.xlu0 0
  %4765 = vperm.xlu0 %4764, %v3145
  %v4766 = vpop.permute.xlu0 %4765
  %4769 = vset.pattern.permute.xlu0 0
  %4770 = vperm.xlu0 %4769, %v3160
  %v4771 = vpop.permute.xlu0 %4770
  %4774 = vset.pattern.permute.xlu0 0
  %4775 = vperm.xlu0 %4774, %v3175
  %v4776 = vpop.permute.xlu0 %4775
  %4779 = vset.pattern.permute.xlu0 0
  %4780 = vperm.xlu0 %4779, %v3190
  %v4781 = vpop.permute.xlu0 %4780
  %4784 = vset.pattern.permute.xlu0 0
  %4785 = vperm.xlu0 %4784, %v3205
  %v4786 = vpop.permute.xlu0 %4785
  %4789 = vset.pattern.permute.xlu0 0
  %4790 = vperm.xlu0 %4789, %v3220
  %v4791 = vpop.permute.xlu0 %4790
  %4794 = vset.pattern.permute.xlu0 0
  %4795 = vperm.xlu0 %4794, %v3235
  %v4796 = vpop.permute.xlu0 %4795
  %4799 = vset.pattern.permute.xlu0 0
  %4800 = vperm.xlu0 %4799, %v3250
  %v4801 = vpop.permute.xlu0 %4800
  %4804 = vset.pattern.permute.xlu0 0
  %4805 = vperm.xlu0 %4804, %v3265
  %v4806 = vpop.permute.xlu0 %4805
  %4809 = vset.pattern.permute.xlu0 0
  %4810 = vperm.xlu0 %4809, %v3280
  %v4811 = vpop.permute.xlu0 %4810
  %4814 = vset.pattern.permute.xlu0 0
  %4815 = vperm.xlu0 %4814, %v3295
  %v4816 = vpop.permute.xlu0 %4815
  %4819 = vset.pattern.permute.xlu0 0
  %4820 = vperm.xlu0 %4819, %v3310
  %v4821 = vpop.permute.xlu0 %4820
  %4824 = vset.pattern.permute.xlu0 0
  %4825 = vperm.xlu0 %4824, %v3325
  %v4826 = vpop.permute.xlu0 %4825
  %4829 = vset.pattern.permute.xlu0 0
  %4830 = vperm.xlu0 %4829, %v3340
  %v4831 = vpop.permute.xlu0 %4830
  %4834 = vset.pattern.permute.xlu0 0
  %4835 = vperm.xlu0 %4834, %v3355
  %v4836 = vpop.permute.xlu0 %4835
  %4839 = vset.pattern.permute.xlu0 0
  %4840 = vperm.xlu0 %4839, %v3370
  %v4841 = vpop.permute.xlu0 %4840
  %4844 = vset.pattern.permute.xlu0 0
  %4845 = vperm.xlu0 %4844, %v3385
  %v4846 = vpop.permute.xlu0 %4845
  %4849 = vset.pattern.permute.xlu0 0
  %4850 = vperm.xlu0 %4849, %v3400
  %v4851 = vpop.permute.xlu0 %4850
  %4854 = vset.pattern.permute.xlu0 0
  %4855 = vperm.xlu0 %4854, %v3415
  %v4856 = vpop.permute.xlu0 %4855
  %4859 = vset.pattern.permute.xlu0 0
  %4860 = vperm.xlu0 %4859, %v3430
  %v4861 = vpop.permute.xlu0 %4860
  %4864 = vset.pattern.permute.xlu0 0
  %4865 = vperm.xlu0 %4864, %v3445
  %v4866 = vpop.permute.xlu0 %4865
  %4869 = vset.pattern.permute.xlu0 0
  %4870 = vperm.xlu0 %4869, %v3460
  %v4871 = vpop.permute.xlu0 %4870
  %4874 = vset.pattern.permute.xlu0 0
  %4875 = vperm.xlu0 %4874, %v3475
  %v4876 = vpop.permute.xlu0 %4875
  %4879 = vset.pattern.permute.xlu0 0
  %4880 = vperm.xlu0 %4879, %v3490
  %v4881 = vpop.permute.xlu0 %4880
  %4884 = vset.pattern.permute.xlu0 0
  %4885 = vperm.xlu0 %4884, %v3505
  %v4886 = vpop.permute.xlu0 %4885
  %4889 = vset.pattern.permute.xlu0 0
  %4890 = vperm.xlu0 %4889, %v3520
  %v4891 = vpop.permute.xlu0 %4890
  %4894 = vset.pattern.permute.xlu0 0
  %4895 = vperm.xlu0 %4894, %v3535
  %v4896 = vpop.permute.xlu0 %4895
  %4899 = vset.pattern.permute.xlu0 0
  %4900 = vperm.xlu0 %4899, %v3550
  %v4901 = vpop.permute.xlu0 %4900
  %4904 = vset.pattern.permute.xlu0 0
  %4905 = vperm.xlu0 %4904, %v3565
  %v4906 = vpop.permute.xlu0 %4905
  %4909 = vset.pattern.permute.xlu0 0
  %4910 = vperm.xlu0 %4909, %v3580
  %v4911 = vpop.permute.xlu0 %4910
  %4914 = vset.pattern.permute.xlu0 0
  %4915 = vperm.xlu0 %4914, %v3595
  %v4916 = vpop.permute.xlu0 %4915
  %4919 = vset.pattern.permute.xlu0 0
  %4920 = vperm.xlu0 %4919, %v3610
  %v4921 = vpop.permute.xlu0 %4920
  %4924 = vset.pattern.permute.xlu0 0
  %4925 = vperm.xlu0 %4924, %v3625
  %v4926 = vpop.permute.xlu0 %4925
  %4929 = vset.pattern.permute.xlu0 0
  %4930 = vperm.xlu0 %4929, %v3640
  %v4931 = vpop.permute.xlu0 %4930
  %4934 = vset.pattern.permute.xlu0 0
  %4935 = vperm.xlu0 %4934, %v3655
  %v4936 = vpop.permute.xlu0 %4935
  %4939 = vset.pattern.permute.xlu0 0
  %4940 = vperm.xlu0 %4939, %v3670
  %v4941 = vpop.permute.xlu0 %4940
  %4944 = vset.pattern.permute.xlu0 0
  %4945 = vperm.xlu0 %4944, %v3685
  %v4946 = vpop.permute.xlu0 %4945
  %4949 = vset.pattern.permute.xlu0 0
  %4950 = vperm.xlu0 %4949, %v3700
  %v4951 = vpop.permute.xlu0 %4950
  %4954 = vset.pattern.permute.xlu0 0
  %4955 = vperm.xlu0 %4954, %v3715
  %v4956 = vpop.permute.xlu0 %4955
  %4959 = vset.pattern.permute.xlu0 0
  %4960 = vperm.xlu0 %4959, %v3730
  %v4961 = vpop.permute.xlu0 %4960
  %4964 = vset.pattern.permute.xlu0 0
  %4965 = vperm.xlu0 %4964, %v3745
  %v4966 = vpop.permute.xlu0 %4965
  %4969 = vset.pattern.permute.xlu0 0
  %4970 = vperm.xlu0 %4969, %v3760
  %v4971 = vpop.permute.xlu0 %4970
  %4974 = vset.pattern.permute.xlu0 0
  %4975 = vperm.xlu0 %4974, %v3775
  %v4976 = vpop.permute.xlu0 %4975
  %4979 = vset.pattern.permute.xlu0 0
  %4980 = vperm.xlu0 %4979, %v3790
  %v4981 = vpop.permute.xlu0 %4980
  %4984 = vset.pattern.permute.xlu0 0
  %4985 = vperm.xlu0 %4984, %v3805
  %v4986 = vpop.permute.xlu0 %4985
  %4989 = vset.pattern.permute.xlu0 0
  %4990 = vperm.xlu0 %4989, %v3820
  %v4991 = vpop.permute.xlu0 %4990
  %4994 = vset.pattern.permute.xlu0 0
  %4995 = vperm.xlu0 %4994, %v3835
  %v4996 = vpop.permute.xlu0 %4995
  %4999 = vset.pattern.permute.xlu0 0
  %5000 = vperm.xlu0 %4999, %v3850
  %v5001 = vpop.permute.xlu0 %5000
  %v5003 = vmul.f32 %v4046, %v3851
  %v5004 = vmul.f32 %v4051, %v3852
  %v5005 = vmul.f32 %v4056, %v3853
  %v5006 = vmul.f32 %v4061, %v3854
  %v5007 = vmul.f32 %v4066, %v3855
  %v5008 = vmul.f32 %v4071, %v3856
  %v5009 = vmul.f32 %v4076, %v3857
  %v5010 = vmul.f32 %v4081, %v3858
  %v5011 = vmul.f32 %v4086, %v3859
  %v5012 = vmul.f32 %v4091, %v3860
  %v5013 = vmul.f32 %v4096, %v3861
  %v5014 = vmul.f32 %v4101, %v3862
  %v5015 = vmul.f32 %v4106, %v3863
  %v5016 = vmul.f32 %v4111, %v3864
  %v5017 = vmul.f32 %v4116, %v3865
  %v5018 = vmul.f32 %v4121, %v3866
  %v5019 = vmul.f32 %v4126, %v3867
  %v5020 = vmul.f32 %v4131, %v3868
  %v5021 = vmul.f32 %v4136, %v3869
  %v5022 = vmul.f32 %v4141, %v3870
  %v5023 = vmul.f32 %v4146, %v3871
  %v5024 = vmul.f32 %v4151, %v3872
  %v5025 = vmul.f32 %v4156, %v3873
  %v5026 = vmul.f32 %v4161, %v3874
  %v5027 = vmul.f32 %v4166, %v3875
  %v5028 = vmul.f32 %v4171, %v3876
  %v5029 = vmul.f32 %v4176, %v3877
  %v5030 = vmul.f32 %v4181, %v3878
  %v5031 = vmul.f32 %v4186, %v3879
  %v5032 = vmul.f32 %v4191, %v3880
  %v5033 = vmul.f32 %v4196, %v3881
  %v5034 = vmul.f32 %v4201, %v3882
  %v5035 = vmul.f32 %v4206, %v3883
  %v5036 = vmul.f32 %v4211, %v3884
  %v5037 = vmul.f32 %v4216, %v3885
  %v5038 = vmul.f32 %v4221, %v3886
  %v5039 = vmul.f32 %v4226, %v3887
  %v5040 = vmul.f32 %v4231, %v3888
  %v5041 = vmul.f32 %v4236, %v3889
  %v5042 = vmul.f32 %v4241, %v3890
  %v5043 = vmul.f32 %v4246, %v3891
  %v5044 = vmul.f32 %v4251, %v3892
  %v5045 = vmul.f32 %v4256, %v3893
  %v5046 = vmul.f32 %v4261, %v3894
  %v5047 = vmul.f32 %v4266, %v3895
  %v5048 = vmul.f32 %v4271, %v3896
  %v5049 = vmul.f32 %v4276, %v3897
  %v5050 = vmul.f32 %v4281, %v3898
  %v5051 = vmul.f32 %v4286, %v3899
  %v5052 = vmul.f32 %v4291, %v3900
  %v5053 = vmul.f32 %v4296, %v3901
  %v5054 = vmul.f32 %v4301, %v3902
  %v5055 = vmul.f32 %v4306, %v3903
  %v5056 = vmul.f32 %v4311, %v3904
  %v5057 = vmul.f32 %v4316, %v3905
  %v5058 = vmul.f32 %v4321, %v3906
  %v5059 = vmul.f32 %v4326, %v3907
  %v5060 = vmul.f32 %v4331, %v3908
  %v5061 = vmul.f32 %v4336, %v3909
  %v5062 = vmul.f32 %v4341, %v3910
  %v5063 = vmul.f32 %v4346, %v3911
  %v5064 = vmul.f32 %v4351, %v3912
  %v5065 = vmul.f32 %v4356, %v3913
  %v5066 = vmul.f32 %v4361, %v3914
  %v5067 = vmul.f32 %v4366, %v3915
  %v5068 = vmul.f32 %v4371, %v3916
  %v5069 = vmul.f32 %v4376, %v3917
  %v5070 = vmul.f32 %v4381, %v3918
  %v5071 = vmul.f32 %v4386, %v3919
  %v5072 = vmul.f32 %v4391, %v3920
  %v5073 = vmul.f32 %v4396, %v3921
  %v5074 = vmul.f32 %v4401, %v3922
  %v5075 = vmul.f32 %v4406, %v3923
  %v5076 = vmul.f32 %v4411, %v3924
  %v5077 = vmul.f32 %v4416, %v3925
  %v5078 = vmul.f32 %v4421, %v3926
  %v5079 = vmul.f32 %v4426, %v3927
  %v5080 = vmul.f32 %v4431, %v3928
  %v5081 = vmul.f32 %v4436, %v3929
  %v5082 = vmul.f32 %v4441, %v3930
  %v5083 = vmul.f32 %v4446, %v3931
  %v5084 = vmul.f32 %v4451, %v3932
  %v5085 = vmul.f32 %v4456, %v3933
  %v5086 = vmul.f32 %v4461, %v3934
  %v5087 = vmul.f32 %v4466, %v3935
  %v5088 = vmul.f32 %v4471, %v3936
  %v5089 = vmul.f32 %v4476, %v3937
  %v5090 = vmul.f32 %v4481, %v3938
  %v5091 = vmul.f32 %v4486, %v3939
  %v5092 = vmul.f32 %v4491, %v3940
  %v5093 = vmul.f32 %v4496, %v3941
  %v5094 = vmul.f32 %v4501, %v3942
  %v5095 = vmul.f32 %v4506, %v3943
  %v5096 = vmul.f32 %v4511, %v3944
  %v5097 = vmul.f32 %v4516, %v3945
  %v5098 = vmul.f32 %v4521, %v3946
  %v5099 = vmul.f32 %v4526, %v3947
  %v5100 = vmul.f32 %v4531, %v3948
  %v5101 = vmul.f32 %v4536, %v3949
  %v5102 = vmul.f32 %v4541, %v3950
  %v5103 = vmul.f32 %v4546, %v3951
  %v5104 = vmul.f32 %v4551, %v3952
  %v5105 = vmul.f32 %v4556, %v3953
  %v5106 = vmul.f32 %v4561, %v3954
  %v5107 = vmul.f32 %v4566, %v3955
  %v5108 = vmul.f32 %v4571, %v3956
  %v5109 = vmul.f32 %v4576, %v3957
  %v5110 = vmul.f32 %v4581, %v3958
  %v5111 = vmul.f32 %v4586, %v3959
  %v5112 = vmul.f32 %v4591, %v3960
  %v5113 = vmul.f32 %v4596, %v3961
  %v5114 = vmul.f32 %v4601, %v3962
  %v5115 = vmul.f32 %v4606, %v3963
  %v5116 = vmul.f32 %v4611, %v3964
  %v5117 = vmul.f32 %v4616, %v3965
  %v5118 = vmul.f32 %v4621, %v3966
  %v5119 = vmul.f32 %v4626, %v3967
  %v5120 = vmul.f32 %v4631, %v3968
  %v5121 = vmul.f32 %v4636, %v3969
  %v5122 = vmul.f32 %v4641, %v3970
  %v5123 = vmul.f32 %v4646, %v3971
  %v5124 = vmul.f32 %v4651, %v3972
  %v5125 = vmul.f32 %v4656, %v3973
  %v5126 = vmul.f32 %v4661, %v3974
  %v5127 = vmul.f32 %v4666, %v3975
  %v5128 = vmul.f32 %v4671, %v3976
  %v5129 = vmul.f32 %v4676, %v3977
  %v5130 = vmul.f32 %v4681, %v3978
  %v5131 = vmul.f32 %v4686, %v3979
  %v5132 = vmul.f32 %v4691, %v3980
  %v5133 = vmul.f32 %v4696, %v3981
  %v5134 = vmul.f32 %v4701, %v3982
  %v5135 = vmul.f32 %v4706, %v3983
  %v5136 = vmul.f32 %v4711, %v3984
  %v5137 = vmul.f32 %v4716, %v3985
  %v5138 = vmul.f32 %v4721, %v3986
  %v5139 = vmul.f32 %v4726, %v3987
  %v5140 = vmul.f32 %v4731, %v3988
  %v5141 = vmul.f32 %v4736, %v3989
  %v5142 = vmul.f32 %v4741, %v3990
  %v5143 = vmul.f32 %v4746, %v3991
  %v5144 = vmul.f32 %v4751, %v3992
  %v5145 = vmul.f32 %v4756, %v3993
  %v5146 = vmul.f32 %v4761, %v3994
  %v5147 = vmul.f32 %v4766, %v3995
  %v5148 = vmul.f32 %v4771, %v3996
  %v5149 = vmul.f32 %v4776, %v3997
  %v5150 = vmul.f32 %v4781, %v3998
  %v5151 = vmul.f32 %v4786, %v3999
  %v5152 = vmul.f32 %v4791, %v4000
  %v5153 = vmul.f32 %v4796, %v4001
  %v5154 = vmul.f32 %v4801, %v4002
  %v5155 = vmul.f32 %v4806, %v4003
  %v5156 = vmul.f32 %v4811, %v4004
  %v5157 = vmul.f32 %v4816, %v4005
  %v5158 = vmul.f32 %v4821, %v4006
  %v5159 = vmul.f32 %v4826, %v4007
  %v5160 = vmul.f32 %v4831, %v4008
  %v5161 = vmul.f32 %v4836, %v4009
  %v5162 = vmul.f32 %v4841, %v4010
  %v5163 = vmul.f32 %v4846, %v4011
  %v5164 = vmul.f32 %v4851, %v4012
  %v5165 = vmul.f32 %v4856, %v4013
  %v5166 = vmul.f32 %v4861, %v4014
  %v5167 = vmul.f32 %v4866, %v4015
  %v5168 = vmul.f32 %v4871, %v4016
  %v5169 = vmul.f32 %v4876, %v4017
  %v5170 = vmul.f32 %v4881, %v4018
  %v5171 = vmul.f32 %v4886, %v4019
  %v5172 = vmul.f32 %v4891, %v4020
  %v5173 = vmul.f32 %v4896, %v4021
  %v5174 = vmul.f32 %v4901, %v4022
  %v5175 = vmul.f32 %v4906, %v4023
  %v5176 = vmul.f32 %v4911, %v4024
  %v5177 = vmul.f32 %v4916, %v4025
  %v5178 = vmul.f32 %v4921, %v4026
  %v5179 = vmul.f32 %v4926, %v4027
  %v5180 = vmul.f32 %v4931, %v4028
  %v5181 = vmul.f32 %v4936, %v4029
  %v5182 = vmul.f32 %v4941, %v4030
  %v5183 = vmul.f32 %v4946, %v4031
  %v5184 = vmul.f32 %v4951, %v4032
  %v5185 = vmul.f32 %v4956, %v4033
  %v5186 = vmul.f32 %v4961, %v4034
  %v5187 = vmul.f32 %v4966, %v4035
  %v5188 = vmul.f32 %v4971, %v4036
  %v5189 = vmul.f32 %v4976, %v4037
  %v5190 = vmul.f32 %v4981, %v4038
  %v5191 = vmul.f32 %v4986, %v4039
  %v5192 = vmul.f32 %v4991, %v4040
  %v5193 = vmul.f32 %v4996, %v4041
  %v5194 = vmul.f32 %v5001, %v4042
  %vm5195 = vcmask 400384
  %5196 = vst.msk [vmem:[%s2] sm:$0xff] %vm5195, %v5003
  %5197 = vst.msk [vmem:[%s2 + $0x8] sm:$0xff] %vm5195, %v5004
  %5198 = vst.msk [vmem:[%s2 + $0x10] sm:$0xff] %vm5195, %v5005
  %5199 = vst.msk [vmem:[%s2 + $0x18] sm:$0xff] %vm5195, %v5006
  %5200 = vst.msk [vmem:[%s2 + $0x20] sm:$0xff] %vm5195, %v5007
  %5201 = vst.msk [vmem:[%s2 + $0x28] sm:$0xff] %vm5195, %v5008
  %5202 = vst.msk [vmem:[%s2 + $0x30] sm:$0xff] %vm5195, %v5009
  %5203 = vst.msk [vmem:[%s2 + $0x38] sm:$0xff] %vm5195, %v5010
  %5204 = vst.msk [vmem:[%s2 + $0x40] sm:$0xff] %vm5195, %v5011
  %5205 = vst.msk [vmem:[%s2 + $0x48] sm:$0xff] %vm5195, %v5012
  %5206 = vst.msk [vmem:[%s2 + $0x50] sm:$0xff] %vm5195, %v5013
  %5207 = vst.msk [vmem:[%s2 + $0x58] sm:$0xff] %vm5195, %v5014
  %5208 = vst.msk [vmem:[%s2 + $0x60] sm:$0xff] %vm5195, %v5015
  %5209 = vst.msk [vmem:[%s2 + $0x68] sm:$0xff] %vm5195, %v5016
  %5210 = vst.msk [vmem:[%s2 + $0x70] sm:$0xff] %vm5195, %v5017
  %5211 = vst.msk [vmem:[%s2 + $0x78] sm:$0xff] %vm5195, %v5018
  %5212 = vst.msk [vmem:[%s2 + $0x80] sm:$0xff] %vm5195, %v5019
  %5213 = vst.msk [vmem:[%s2 + $0x88] sm:$0xff] %vm5195, %v5020
  %5214 = vst.msk [vmem:[%s2 + $0x90] sm:$0xff] %vm5195, %v5021
  %5215 = vst.msk [vmem:[%s2 + $0x98] sm:$0xff] %vm5195, %v5022
  %5216 = vst.msk [vmem:[%s2 + $0xa0] sm:$0xff] %vm5195, %v5023
  %5217 = vst.msk [vmem:[%s2 + $0xa8] sm:$0xff] %vm5195, %v5024
  %5218 = vst.msk [vmem:[%s2 + $0xb0] sm:$0xff] %vm5195, %v5025
  %5219 = vst.msk [vmem:[%s2 + $0xb8] sm:$0xff] %vm5195, %v5026
  %5220 = vst.msk [vmem:[%s2 + $0xc0] sm:$0xff] %vm5195, %v5027
  %5221 = vst.msk [vmem:[%s2 + $0xc8] sm:$0xff] %vm5195, %v5028
  %5222 = vst.msk [vmem:[%s2 + $0xd0] sm:$0xff] %vm5195, %v5029
  %5223 = vst.msk [vmem:[%s2 + $0xd8] sm:$0xff] %vm5195, %v5030
  %5224 = vst.msk [vmem:[%s2 + $0xe0] sm:$0xff] %vm5195, %v5031
  %5225 = vst.msk [vmem:[%s2 + $0xe8] sm:$0xff] %vm5195, %v5032
  %5226 = vst.msk [vmem:[%s2 + $0xf0] sm:$0xff] %vm5195, %v5033
  %5227 = vst.msk [vmem:[%s2 + $0xf8] sm:$0xff] %vm5195, %v5034
  %5228 = vst.msk [vmem:[%s2 + $0x100] sm:$0xff] %vm5195, %v5035
  %5229 = vst.msk [vmem:[%s2 + $0x108] sm:$0xff] %vm5195, %v5036
  %5230 = vst.msk [vmem:[%s2 + $0x110] sm:$0xff] %vm5195, %v5037
  %5231 = vst.msk [vmem:[%s2 + $0x118] sm:$0xff] %vm5195, %v5038
  %5232 = vst.msk [vmem:[%s2 + $0x120] sm:$0xff] %vm5195, %v5039
  %5233 = vst.msk [vmem:[%s2 + $0x128] sm:$0xff] %vm5195, %v5040
  %5234 = vst.msk [vmem:[%s2 + $0x130] sm:$0xff] %vm5195, %v5041
  %5235 = vst.msk [vmem:[%s2 + $0x138] sm:$0xff] %vm5195, %v5042
  %5236 = vst.msk [vmem:[%s2 + $0x140] sm:$0xff] %vm5195, %v5043
  %5237 = vst.msk [vmem:[%s2 + $0x148] sm:$0xff] %vm5195, %v5044
  %5238 = vst.msk [vmem:[%s2 + $0x150] sm:$0xff] %vm5195, %v5045
  %5239 = vst.msk [vmem:[%s2 + $0x158] sm:$0xff] %vm5195, %v5046
  %5240 = vst.msk [vmem:[%s2 + $0x160] sm:$0xff] %vm5195, %v5047
  %5241 = vst.msk [vmem:[%s2 + $0x168] sm:$0xff] %vm5195, %v5048
  %5242 = vst.msk [vmem:[%s2 + $0x170] sm:$0xff] %vm5195, %v5049
  %5243 = vst.msk [vmem:[%s2 + $0x178] sm:$0xff] %vm5195, %v5050
  %5244 = vst.msk [vmem:[%s2 + $0x180] sm:$0xff] %vm5195, %v5051
  %5245 = vst.msk [vmem:[%s2 + $0x188] sm:$0xff] %vm5195, %v5052
  %5246 = vst.msk [vmem:[%s2 + $0x190] sm:$0xff] %vm5195, %v5053
  %5247 = vst.msk [vmem:[%s2 + $0x198] sm:$0xff] %vm5195, %v5054
  %5248 = vst.msk [vmem:[%s2 + $0x1a0] sm:$0xff] %vm5195, %v5055
  %5249 = vst.msk [vmem:[%s2 + $0x1a8] sm:$0xff] %vm5195, %v5056
  %5250 = vst.msk [vmem:[%s2 + $0x1b0] sm:$0xff] %vm5195, %v5057
  %5251 = vst.msk [vmem:[%s2 + $0x1b8] sm:$0xff] %vm5195, %v5058
  %5252 = vst.msk [vmem:[%s2 + $0x1c0] sm:$0xff] %vm5195, %v5059
  %5253 = vst.msk [vmem:[%s2 + $0x1c8] sm:$0xff] %vm5195, %v5060
  %5254 = vst.msk [vmem:[%s2 + $0x1d0] sm:$0xff] %vm5195, %v5061
  %5255 = vst.msk [vmem:[%s2 + $0x1d8] sm:$0xff] %vm5195, %v5062
  %5256 = vst.msk [vmem:[%s2 + $0x1e0] sm:$0xff] %vm5195, %v5063
  %5257 = vst.msk [vmem:[%s2 + $0x1e8] sm:$0xff] %vm5195, %v5064
  %5258 = vst.msk [vmem:[%s2 + $0x1f0] sm:$0xff] %vm5195, %v5065
  %5259 = vst.msk [vmem:[%s2 + $0x1f8] sm:$0xff] %vm5195, %v5066
  %5260 = vst.msk [vmem:[%s2 + $0x200] sm:$0xff] %vm5195, %v5067
  %5261 = vst.msk [vmem:[%s2 + $0x208] sm:$0xff] %vm5195, %v5068
  %5262 = vst.msk [vmem:[%s2 + $0x210] sm:$0xff] %vm5195, %v5069
  %5263 = vst.msk [vmem:[%s2 + $0x218] sm:$0xff] %vm5195, %v5070
  %5264 = vst.msk [vmem:[%s2 + $0x220] sm:$0xff] %vm5195, %v5071
  %5265 = vst.msk [vmem:[%s2 + $0x228] sm:$0xff] %vm5195, %v5072
  %5266 = vst.msk [vmem:[%s2 + $0x230] sm:$0xff] %vm5195, %v5073
  %5267 = vst.msk [vmem:[%s2 + $0x238] sm:$0xff] %vm5195, %v5074
  %5268 = vst.msk [vmem:[%s2 + $0x240] sm:$0xff] %vm5195, %v5075
  %5269 = vst.msk [vmem:[%s2 + $0x248] sm:$0xff] %vm5195, %v5076
  %5270 = vst.msk [vmem:[%s2 + $0x250] sm:$0xff] %vm5195, %v5077
  %5271 = vst.msk [vmem:[%s2 + $0x258] sm:$0xff] %vm5195, %v5078
  %5272 = vst.msk [vmem:[%s2 + $0x260] sm:$0xff] %vm5195, %v5079
  %5273 = vst.msk [vmem:[%s2 + $0x268] sm:$0xff] %vm5195, %v5080
  %5274 = vst.msk [vmem:[%s2 + $0x270] sm:$0xff] %vm5195, %v5081
  %5275 = vst.msk [vmem:[%s2 + $0x278] sm:$0xff] %vm5195, %v5082
  %5276 = vst.msk [vmem:[%s2 + $0x280] sm:$0xff] %vm5195, %v5083
  %5277 = vst.msk [vmem:[%s2 + $0x288] sm:$0xff] %vm5195, %v5084
  %5278 = vst.msk [vmem:[%s2 + $0x290] sm:$0xff] %vm5195, %v5085
  %5279 = vst.msk [vmem:[%s2 + $0x298] sm:$0xff] %vm5195, %v5086
  %5280 = vst.msk [vmem:[%s2 + $0x2a0] sm:$0xff] %vm5195, %v5087
  %5281 = vst.msk [vmem:[%s2 + $0x2a8] sm:$0xff] %vm5195, %v5088
  %5282 = vst.msk [vmem:[%s2 + $0x2b0] sm:$0xff] %vm5195, %v5089
  %5283 = vst.msk [vmem:[%s2 + $0x2b8] sm:$0xff] %vm5195, %v5090
  %5284 = vst.msk [vmem:[%s2 + $0x2c0] sm:$0xff] %vm5195, %v5091
  %5285 = vst.msk [vmem:[%s2 + $0x2c8] sm:$0xff] %vm5195, %v5092
  %5286 = vst.msk [vmem:[%s2 + $0x2d0] sm:$0xff] %vm5195, %v5093
  %5287 = vst.msk [vmem:[%s2 + $0x2d8] sm:$0xff] %vm5195, %v5094
  %5288 = vst.msk [vmem:[%s2 + $0x2e0] sm:$0xff] %vm5195, %v5095
  %5289 = vst.msk [vmem:[%s2 + $0x2e8] sm:$0xff] %vm5195, %v5096
  %5290 = vst.msk [vmem:[%s2 + $0x2f0] sm:$0xff] %vm5195, %v5097
  %5291 = vst.msk [vmem:[%s2 + $0x2f8] sm:$0xff] %vm5195, %v5098
  %5292 = vst.msk [vmem:[%s2 + $0x300] sm:$0xff] %vm5195, %v5099
  %5293 = vst.msk [vmem:[%s2 + $0x308] sm:$0xff] %vm5195, %v5100
  %5294 = vst.msk [vmem:[%s2 + $0x310] sm:$0xff] %vm5195, %v5101
  %5295 = vst.msk [vmem:[%s2 + $0x318] sm:$0xff] %vm5195, %v5102
  %5296 = vst.msk [vmem:[%s2 + $0x320] sm:$0xff] %vm5195, %v5103
  %5297 = vst.msk [vmem:[%s2 + $0x328] sm:$0xff] %vm5195, %v5104
  %5298 = vst.msk [vmem:[%s2 + $0x330] sm:$0xff] %vm5195, %v5105
  %5299 = vst.msk [vmem:[%s2 + $0x338] sm:$0xff] %vm5195, %v5106
  %5300 = vst.msk [vmem:[%s2 + $0x340] sm:$0xff] %vm5195, %v5107
  %5301 = vst.msk [vmem:[%s2 + $0x348] sm:$0xff] %vm5195, %v5108
  %5302 = vst.msk [vmem:[%s2 + $0x350] sm:$0xff] %vm5195, %v5109
  %5303 = vst.msk [vmem:[%s2 + $0x358] sm:$0xff] %vm5195, %v5110
  %5304 = vst.msk [vmem:[%s2 + $0x360] sm:$0xff] %vm5195, %v5111
  %5305 = vst.msk [vmem:[%s2 + $0x368] sm:$0xff] %vm5195, %v5112
  %5306 = vst.msk [vmem:[%s2 + $0x370] sm:$0xff] %vm5195, %v5113
  %5307 = vst.msk [vmem:[%s2 + $0x378] sm:$0xff] %vm5195, %v5114
  %5308 = vst.msk [vmem:[%s2 + $0x380] sm:$0xff] %vm5195, %v5115
  %5309 = vst.msk [vmem:[%s2 + $0x388] sm:$0xff] %vm5195, %v5116
  %5310 = vst.msk [vmem:[%s2 + $0x390] sm:$0xff] %vm5195, %v5117
  %5311 = vst.msk [vmem:[%s2 + $0x398] sm:$0xff] %vm5195, %v5118
  %5312 = vst.msk [vmem:[%s2 + $0x3a0] sm:$0xff] %vm5195, %v5119
  %5313 = vst.msk [vmem:[%s2 + $0x3a8] sm:$0xff] %vm5195, %v5120
  %5314 = vst.msk [vmem:[%s2 + $0x3b0] sm:$0xff] %vm5195, %v5121
  %5315 = vst.msk [vmem:[%s2 + $0x3b8] sm:$0xff] %vm5195, %v5122
  %5316 = vst.msk [vmem:[%s2 + $0x3c0] sm:$0xff] %vm5195, %v5123
  %5317 = vst.msk [vmem:[%s2 + $0x3c8] sm:$0xff] %vm5195, %v5124
  %5318 = vst.msk [vmem:[%s2 + $0x3d0] sm:$0xff] %vm5195, %v5125
  %5319 = vst.msk [vmem:[%s2 + $0x3d8] sm:$0xff] %vm5195, %v5126
  %5320 = vst.msk [vmem:[%s2 + $0x3e0] sm:$0xff] %vm5195, %v5127
  %5321 = vst.msk [vmem:[%s2 + $0x3e8] sm:$0xff] %vm5195, %v5128
  %5322 = vst.msk [vmem:[%s2 + $0x3f0] sm:$0xff] %vm5195, %v5129
  %5323 = vst.msk [vmem:[%s2 + $0x3f8] sm:$0xff] %vm5195, %v5130
  %5324 = vst.msk [vmem:[%s2 + $0x400] sm:$0xff] %vm5195, %v5131
  %5325 = vst.msk [vmem:[%s2 + $0x408] sm:$0xff] %vm5195, %v5132
  %5326 = vst.msk [vmem:[%s2 + $0x410] sm:$0xff] %vm5195, %v5133
  %5327 = vst.msk [vmem:[%s2 + $0x418] sm:$0xff] %vm5195, %v5134
  %5328 = vst.msk [vmem:[%s2 + $0x420] sm:$0xff] %vm5195, %v5135
  %5329 = vst.msk [vmem:[%s2 + $0x428] sm:$0xff] %vm5195, %v5136
  %5330 = vst.msk [vmem:[%s2 + $0x430] sm:$0xff] %vm5195, %v5137
  %5331 = vst.msk [vmem:[%s2 + $0x438] sm:$0xff] %vm5195, %v5138
  %5332 = vst.msk [vmem:[%s2 + $0x440] sm:$0xff] %vm5195, %v5139
  %5333 = vst.msk [vmem:[%s2 + $0x448] sm:$0xff] %vm5195, %v5140
  %5334 = vst.msk [vmem:[%s2 + $0x450] sm:$0xff] %vm5195, %v5141
  %5335 = vst.msk [vmem:[%s2 + $0x458] sm:$0xff] %vm5195, %v5142
  %5336 = vst.msk [vmem:[%s2 + $0x460] sm:$0xff] %vm5195, %v5143
  %5337 = vst.msk [vmem:[%s2 + $0x468] sm:$0xff] %vm5195, %v5144
  %5338 = vst.msk [vmem:[%s2 + $0x470] sm:$0xff] %vm5195, %v5145
  %5339 = vst.msk [vmem:[%s2 + $0x478] sm:$0xff] %vm5195, %v5146
  %5340 = vst.msk [vmem:[%s2 + $0x480] sm:$0xff] %vm5195, %v5147
  %5341 = vst.msk [vmem:[%s2 + $0x488] sm:$0xff] %vm5195, %v5148
  %5342 = vst.msk [vmem:[%s2 + $0x490] sm:$0xff] %vm5195, %v5149
  %5343 = vst.msk [vmem:[%s2 + $0x498] sm:$0xff] %vm5195, %v5150
  %5344 = vst.msk [vmem:[%s2 + $0x4a0] sm:$0xff] %vm5195, %v5151
  %5345 = vst.msk [vmem:[%s2 + $0x4a8] sm:$0xff] %vm5195, %v5152
  %5346 = vst.msk [vmem:[%s2 + $0x4b0] sm:$0xff] %vm5195, %v5153
  %5347 = vst.msk [vmem:[%s2 + $0x4b8] sm:$0xff] %vm5195, %v5154
  %5348 = vst.msk [vmem:[%s2 + $0x4c0] sm:$0xff] %vm5195, %v5155
  %5349 = vst.msk [vmem:[%s2 + $0x4c8] sm:$0xff] %vm5195, %v5156
  %5350 = vst.msk [vmem:[%s2 + $0x4d0] sm:$0xff] %vm5195, %v5157
  %5351 = vst.msk [vmem:[%s2 + $0x4d8] sm:$0xff] %vm5195, %v5158
  %5352 = vst.msk [vmem:[%s2 + $0x4e0] sm:$0xff] %vm5195, %v5159
  %5353 = vst.msk [vmem:[%s2 + $0x4e8] sm:$0xff] %vm5195, %v5160
  %5354 = vst.msk [vmem:[%s2 + $0x4f0] sm:$0xff] %vm5195, %v5161
  %5355 = vst.msk [vmem:[%s2 + $0x4f8] sm:$0xff] %vm5195, %v5162
  %5356 = vst.msk [vmem:[%s2 + $0x500] sm:$0xff] %vm5195, %v5163
  %5357 = vst.msk [vmem:[%s2 + $0x508] sm:$0xff] %vm5195, %v5164
  %5358 = vst.msk [vmem:[%s2 + $0x510] sm:$0xff] %vm5195, %v5165
  %5359 = vst.msk [vmem:[%s2 + $0x518] sm:$0xff] %vm5195, %v5166
  %5360 = vst.msk [vmem:[%s2 + $0x520] sm:$0xff] %vm5195, %v5167
  %5361 = vst.msk [vmem:[%s2 + $0x528] sm:$0xff] %vm5195, %v5168
  %5362 = vst.msk [vmem:[%s2 + $0x530] sm:$0xff] %vm5195, %v5169
  %5363 = vst.msk [vmem:[%s2 + $0x538] sm:$0xff] %vm5195, %v5170
  %5364 = vst.msk [vmem:[%s2 + $0x540] sm:$0xff] %vm5195, %v5171
  %5365 = vst.msk [vmem:[%s2 + $0x548] sm:$0xff] %vm5195, %v5172
  %5366 = vst.msk [vmem:[%s2 + $0x550] sm:$0xff] %vm5195, %v5173
  %5367 = vst.msk [vmem:[%s2 + $0x558] sm:$0xff] %vm5195, %v5174
  %5368 = vst.msk [vmem:[%s2 + $0x560] sm:$0xff] %vm5195, %v5175
  %5369 = vst.msk [vmem:[%s2 + $0x568] sm:$0xff] %vm5195, %v5176
  %5370 = vst.msk [vmem:[%s2 + $0x570] sm:$0xff] %vm5195, %v5177
  %5371 = vst.msk [vmem:[%s2 + $0x578] sm:$0xff] %vm5195, %v5178
  %5372 = vst.msk [vmem:[%s2 + $0x580] sm:$0xff] %vm5195, %v5179
  %5373 = vst.msk [vmem:[%s2 + $0x588] sm:$0xff] %vm5195, %v5180
  %5374 = vst.msk [vmem:[%s2 + $0x590] sm:$0xff] %vm5195, %v5181
  %5375 = vst.msk [vmem:[%s2 + $0x598] sm:$0xff] %vm5195, %v5182
  %5376 = vst.msk [vmem:[%s2 + $0x5a0] sm:$0xff] %vm5195, %v5183
  %5377 = vst.msk [vmem:[%s2 + $0x5a8] sm:$0xff] %vm5195, %v5184
  %5378 = vst.msk [vmem:[%s2 + $0x5b0] sm:$0xff] %vm5195, %v5185
  %5379 = vst.msk [vmem:[%s2 + $0x5b8] sm:$0xff] %vm5195, %v5186
  %5380 = vst.msk [vmem:[%s2 + $0x5c0] sm:$0xff] %vm5195, %v5187
  %5381 = vst.msk [vmem:[%s2 + $0x5c8] sm:$0xff] %vm5195, %v5188
  %5382 = vst.msk [vmem:[%s2 + $0x5d0] sm:$0xff] %vm5195, %v5189
  %5383 = vst.msk [vmem:[%s2 + $0x5d8] sm:$0xff] %vm5195, %v5190
  %5384 = vst.msk [vmem:[%s2 + $0x5e0] sm:$0xff] %vm5195, %v5191
  %5385 = vst.msk [vmem:[%s2 + $0x5e8] sm:$0xff] %vm5195, %v5192
  %5386 = vst.msk [vmem:[%s2 + $0x5f0] sm:$0xff] %vm5195, %v5193
  %5387 = vst.msk [vmem:[%s2 + $0x5f8] sm:$0xff] %vm5195, %v5194
  // Predicated region
  $region10: #{tpu_custom_call.1} parent=0 // pred_check
    _
  $region11: #{tpu_custom_call.1} parent=0 // pred_check_branch
    %5389 = sbr.rel (0) target = $region13
  $region12: #{tpu_custom_call.1} parent=0 // pred_region
    _
  $region13: #{tpu_custom_call.1} parent=0 // pred_fallthru
    _
  // Predicated region
  $region14: #{tpu_custom_call.1} parent=0 // pred_check
    _
  $region15: #{tpu_custom_call.1} parent=0 // pred_check_branch
    %5391 = sbr.rel (0) target = $region17
  $region16: #{tpu_custom_call.1} parent=0 // pred_region
    _
  $region17: #{tpu_custom_call.1} parent=0 // pred_fallthru
    _

</llo_original>
